<compile_context>
chip_gen: v5e
topology: v5e:2x2
jax: 0.10.0
libtpu: 0.0.40
codegen_flags: <defaults>
</compile_context>

<pallas_src>
import functools

import jax
import jax.numpy as jnp
from jax import lax
from jax.experimental import pallas as pl
from jax.experimental.pallas import tpu as pltpu


def _decoder_kernel(lens_ref,                     # (Bb, 1)   int32 valid lengths
                    x_ref,                        # (Bb, S, F)
                    w_in_ref, b_in_ref,
                    wih0_ref, whh0_ref, bih0_ref, bhh0_ref,
                    wih1_ref, whh1_ref, bih1_ref, bhh1_ref,
                    wqkv_ref, bqkv_ref, wo_ref, bo_ref,
                    wh1_ref, bh1_ref, w2_ref, b2_ref,
                    out_ref,                      # (Bb, S, P) lane-dense slab
                    *, adj_size, coord_size):
    Bb, S, F = x_ref.shape
    d = w_in_ref.shape[1]
    P = out_ref.shape[-1]

    # ---- hoisted input-side projections: two MXU-friendly (Bb*S, ·) GEMMs ----
    x2 = x_ref[...].reshape(Bb * S, F)
    xp = jnp.dot(x2, w_in_ref[...], preferred_element_type=jnp.float32) + b_in_ref[...]
    gi0_all = (jnp.dot(xp, wih0_ref[...], preferred_element_type=jnp.float32)
               + bih0_ref[...]).reshape(Bb, S, 3 * d)

    whh0 = whh0_ref[...]; bhh0 = bhh0_ref[...]
    wih1 = wih1_ref[...]; bih1 = bih1_ref[...]
    whh1 = whh1_ref[...]; bhh1 = bhh1_ref[...]

    def gru_gates(gi, gh, h):
        r = jax.nn.sigmoid(gi[:, 0:d] + gh[:, 0:d])
        z = jax.nn.sigmoid(gi[:, d:2 * d] + gh[:, d:2 * d])
        n = jnp.tanh(gi[:, 2 * d:3 * d] + r * gh[:, 2 * d:3 * d])
        return (1.0 - z) * n + z * h

    # ---- recurrence: fully unrolled, only h-dependent GEMMs per timestep ----
    h0 = jnp.zeros((Bb, d), jnp.float32)
    h1 = jnp.zeros((Bb, d), jnp.float32)
    g = jnp.zeros((Bb, S, d), jnp.float32)
    t_sel = lax.broadcasted_iota(jnp.int32, (Bb, S, 1), 1)
    for t in range(S):                          # S static -> full unroll
        gi0 = gi0_all[:, t, :]                  # hoisted input projection
        gh0 = jnp.dot(h0, whh0, preferred_element_type=jnp.float32) + bhh0
        h0 = gru_gates(gi0, gh0, h0)
        gi1 = jnp.dot(h0, wih1, preferred_element_type=jnp.float32) + bih1
        gh1 = jnp.dot(h1, whh1, preferred_element_type=jnp.float32) + bhh1
        h1 = gru_gates(gi1, gh1, h1)
        # keep hidden states in vregs; select-merge instead of masked row stores
        g = jnp.where(t_sel == t, h1[:, None, :], g)

    # pad_packed_sequence semantics: zero GRU outputs at t >= input_len[b]
    L = lens_ref[...]                                      # (Bb, 1) int32
    g = jnp.where(t_sel < L[:, :, None], g, 0.0)

    # ---- single-head self-attention (fused q/k/v GEMM) ----
    g2 = g.reshape(Bb * S, d)
    qkv = jnp.dot(g2, wqkv_ref[...], preferred_element_type=jnp.float32) + bqkv_ref[...]
    q = qkv[:, 0:d].reshape(Bb, S, d)
    k = qkv[:, d:2 * d].reshape(Bb, S, d)
    v = qkv[:, 2 * d:3 * d].reshape(Bb, S, d)
    scores = jnp.einsum('bqd,bkd->bqk', q, k,
                        preferred_element_type=jnp.float32) * (1.0 / float(d) ** 0.5)
    qi = lax.broadcasted_iota(jnp.int32, (Bb, S, S), 1)
    ki = lax.broadcasted_iota(jnp.int32, (Bb, S, S), 2)
    mask = jnp.logical_and(ki <= qi, ki < L[:, :, None])   # causal & key padding
    scores = jnp.where(mask, scores, -1e9)
    scores = scores - jnp.max(scores, axis=-1, keepdims=True)
    p = jnp.exp(scores)
    attn = p * pl.reciprocal(jnp.sum(p, axis=-1, keepdims=True), approx=True)
    att = jnp.einsum('bqk,bkd->bqd', attn, v, preferred_element_type=jnp.float32)
    att2 = jnp.dot(att.reshape(Bb * S, d), wo_ref[...],
                   preferred_element_type=jnp.float32) + bo_ref[...]

    out2 = g2 + att2                            # concat=False -> residual add

    # ---- MLP heads: fused hidden GEMM + block-diagonal lane-dense output GEMM ----
    hmid = jnp.maximum(jnp.dot(out2, wh1_ref[...],
                               preferred_element_type=jnp.float32) + bh1_ref[...], 0.0)
    logits = jnp.dot(hmid, w2_ref[...], preferred_element_type=jnp.float32) + b2_ref[...]
    col = lax.broadcasted_iota(jnp.int32, logits.shape, 1)
    slab = jnp.where(col < adj_size, jax.nn.sigmoid(logits),
                     jnp.where(col < adj_size + coord_size, jnp.tanh(logits), 0.0))
    out_ref[...] = slab.reshape(Bb, S, P).astype(out_ref.dtype)


_BLOCK_B = 8   # f32 sublane tile: >=8 sequences per grid step fills the sublanes


def decoder_gru_att(x, input_len, params, block_b=_BLOCK_B):
    """x: (B,S,F) f32, input_len: (B,) int (as pack_padded_sequence expects)."""
    B, S, F = x.shape
    d = params['w_in'].shape[1]
    dh = d // 2
    adj_size = params['wa2'].shape[1]
    coord_size = params['wc2'].shape[1]
    n_out = adj_size + coord_size
    P = ((n_out + 127) // 128) * 128            # lane-dense output slab width

    # ---- wrapper-side weight packing (fused GEMMs, lane-dense head output) ----
    wqkv = jnp.concatenate([params['wq'], params['wk'], params['wv']], axis=1)
    bqkv = jnp.concatenate([params['bq'], params['bk'], params['bv']], axis=1)
    wh1 = jnp.concatenate([params['wa1'], params['wc1']], axis=1)
    bh1 = jnp.concatenate([params['ba1'], params['bc1']], axis=1)
    w2 = jnp.zeros((2 * dh, P), jnp.float32)
    w2 = w2.at[:dh, :adj_size].set(params['wa2'])
    w2 = w2.at[dh:, adj_size:n_out].set(params['wc2'])
    b2 = jnp.zeros((1, P), jnp.float32)
    b2 = b2.at[:, :adj_size].set(params['ba2'])
    b2 = b2.at[:, adj_size:n_out].set(params['bc2'])

    weights = [params['w_in'], params['b_in'],
               params['wih0'], params['whh0'], params['bih0'], params['bhh0'],
               params['wih1'], params['whh1'], params['bih1'], params['bhh1'],
               wqkv, bqkv, params['wo'], params['bo'],
               wh1, bh1, w2, b2]

    # pad the batch so every grid step carries block_b sequences
    Bb = block_b
    B_pad = ((B + Bb - 1) // Bb) * Bb
    lens = input_len.astype(jnp.int32)
    if B_pad != B:
        x = jnp.concatenate([x, jnp.zeros((B_pad - B, S, F), x.dtype)], axis=0)
        lens = jnp.concatenate([lens, jnp.ones((B_pad - B,), jnp.int32)], axis=0)
    lens2d = lens.reshape(B_pad, 1)

    def full_spec(w):
        return pl.BlockSpec(w.shape, lambda i, n=w.ndim: (0,) * n)

    # NOTE: constant index_maps mean weights are not re-DMA'd per grid step; at
    # large d_model single-buffer them (pl.Buffered(1)) or keep them in HBM
    # (memory_space=pl.ANY) so double-buffered weight VMEM fits v7x's 64 MiB.
    in_specs = ([pl.BlockSpec((Bb, 1), lambda i: (i, 0)),
                 pl.BlockSpec((Bb, S, F), lambda i: (i, 0, 0))]
                + [full_spec(w) for w in weights])
    out_specs = pl.BlockSpec((Bb, S, P), lambda i: (i, 0, 0))

    kernel = functools.partial(_decoder_kernel,
                               adj_size=adj_size, coord_size=coord_size)

    fn = pl.pallas_call(
        kernel,
        grid_spec=pltpu.PrefetchScalarGridSpec(
            num_scalar_prefetch=0,
            grid=(B_pad // Bb,),
            in_specs=in_specs,
            out_specs=out_specs,
        ),
        out_shape=jax.ShapeDtypeStruct((B_pad, S, P), jnp.float32),
        compiler_params=pltpu.CompilerParams(
            dimension_semantics=("parallel",),          # batch blocks independent
            vmem_limit_bytes=32 * 1024 * 1024),
    )
    slab = fn(lens2d, x.astype(jnp.float32), *weights)
    adj = slab[:B, :, :adj_size]
    coord = slab[:B, :, adj_size:n_out]
    return adj, coord


# TODO(synk): persistent hidden state self.h across forward() calls is not
# carried (kernel always starts from h=None zeros); d_model is not padded to a
# 128-lane multiple since that would change the module's parameter shapes.


def init_decoder_params(key, d_model, adj_size, coord_size, visual_size):
    F = coord_size + adj_size + visual_size
    dh = d_model // 2
    ks = iter(jax.random.split(key, 32))

    def xavier(k, shape):
        lim = (6.0 / (shape[0] + shape[1])) ** 0.5
        return jax.random.uniform(k, shape, jnp.float32, -lim, lim)

    def unif(k, shape, s):
        return jax.random.uniform(k, shape, jnp.float32, -s, s)

    gs = 1.0 / (d_model ** 0.5)
    p = {}
    p['w_in'] = xavier(next(ks), (F, d_model)); p['b_in'] = jnp.full((1, d_model), 0.01, jnp.float32)
    for l in (0, 1):                                    # n_hidden = 2 GRU layers
        p[f'wih{l}'] = unif(next(ks), (d_model, 3 * d_model), gs)
        p[f'whh{l}'] = unif(next(ks), (d_model, 3 * d_model), gs)
        p[f'bih{l}'] = unif(next(ks), (1, 3 * d_model), gs)
        p[f'bhh{l}'] = unif(next(ks), (1, 3 * d_model), gs)
    for nm in ('q', 'k', 'v', 'o'):                     # attention linears
        p[f'w{nm}'] = xavier(next(ks), (d_model, d_model))
        p[f'b{nm}'] = jnp.full((1, d_model), 0.01, jnp.float32)
    p['wa1'] = xavier(next(ks), (d_model, dh)); p['ba1'] = jnp.full((1, dh), 0.01, jnp.float32)
    p['wa2'] = xavier(next(ks), (dh, adj_size)); p['ba2'] = jnp.full((1, adj_size), 0.01, jnp.float32)
    p['wc1'] = xavier(next(ks), (d_model, dh)); p['bc1'] = jnp.full((1, dh), 0.01, jnp.float32)
    p['wc2'] = xavier(next(ks), (dh, coord_size)); p['bc2'] = jnp.full((1, coord_size), 0.01, jnp.float32)
    return p


def decoder_ref(x, input_len, p):
    """Pure-JAX reference (mirrors the PyTorch forward with h=None, concat=False)."""
    B, S, _ = x.shape
    d = p['w_in'].shape[1]
    xp = x @ p['w_in'] + p['b_in']

    def cell(xt, h, wih, whh, bih, bhh):
        gi = xt @ wih + bih
        gh = h @ whh + bhh
        r = jax.nn.sigmoid(gi[..., :d] + gh[..., :d])
        z = jax.nn.sigmoid(gi[..., d:2 * d] + gh[..., d:2 * d])
        n = jnp.tanh(gi[..., 2 * d:] + r * gh[..., 2 * d:])
        return (1 - z) * n + z * h

    h0 = jnp.zeros((B, d)); h1 = jnp.zeros((B, d))
    outs = []
    for t in range(S):
        h0 = cell(xp[:, t], h0, p['wih0'], p['whh0'], p['bih0'], p['bhh0'])
        h1 = cell(h0, h1, p['wih1'], p['whh1'], p['bih1'], p['bhh1'])
        outs.append(h1)
    g = jnp.stack(outs, axis=1)
    valid = jnp.arange(S)[None, :] < input_len[:, None]
    g = jnp.where(valid[:, :, None], g, 0.0)
    q = g @ p['wq'] + p['bq']; k = g @ p['wk'] + p['bk']; v = g @ p['wv'] + p['bv']
    scores = jnp.einsum('bqd,bkd->bqk', q, k) / (d ** 0.5)
    mask = jnp.tril(jnp.ones((S, S), bool))[None] & valid[:, None, :]
    scores = jnp.where(mask, scores, -1e9)
    attn = jax.nn.softmax(scores, axis=-1)
    att = jnp.einsum('bqk,bkd->bqd', attn, v) @ p['wo'] + p['bo']
    out = g + att
    adj = jax.nn.sigmoid(jax.nn.relu(out @ p['wa1'] + p['ba1']) @ p['wa2'] + p['ba2'])
    coord = jnp.tanh(jax.nn.relu(out @ p['wc1'] + p['bc1']) @ p['wc2'] + p['bc2'])
    return adj, coord


if __name__ == "__main__":
    key = jax.random.PRNGKey(0)
    B, S = 2, 8
    d_model, adj_size, coord_size, visual_size = 32, 8, 2, 22   # F = 32
    kx, kp = jax.random.split(key)
    x = jax.random.normal(kx, (B, S, coord_size + adj_size + visual_size), jnp.float32)
    input_len = jnp.array([8, 6], jnp.int32)   # descending (pack_padded_sequence enforce_sorted)
    params = init_decoder_params(kp, d_model, adj_size, coord_size, visual_size)

    adj, coord = decoder_gru_att(x, input_len, params)
    jax.block_until_ready((adj, coord))

    with jax.default_matmul_precision("highest"):
        adj_r, coord_r = decoder_ref(x, input_len, params)

    assert adj.shape == (B, S, adj_size) and coord.shape == (B, S, coord_size)
    assert bool(jnp.all(jnp.isfinite(adj))) and bool(jnp.all(jnp.isfinite(coord)))
    assert jnp.allclose(adj, adj_r, atol=3e-2, rtol=3e-2)
    assert jnp.allclose(coord, coord_r, atol=3e-2, rtol=3e-2)
    print("KERNEL_OK")
</pallas_src>

<mosaic_0001>
module attributes {stable_mosaic.version = 11 : i64} {
  func.func @_decoder_kernel(%arg0: i32, %arg1: memref<8x1xi32, #tpu.memory_space<vmem>>, %arg2: memref<8x8x32xf32, #tpu.memory_space<vmem>>, %arg3: memref<32x32xf32, #tpu.memory_space<vmem>>, %arg4: memref<1x32xf32, #tpu.memory_space<vmem>>, %arg5: memref<32x96xf32, #tpu.memory_space<vmem>>, %arg6: memref<32x96xf32, #tpu.memory_space<vmem>>, %arg7: memref<1x96xf32, #tpu.memory_space<vmem>>, %arg8: memref<1x96xf32, #tpu.memory_space<vmem>>, %arg9: memref<32x96xf32, #tpu.memory_space<vmem>>, %arg10: memref<32x96xf32, #tpu.memory_space<vmem>>, %arg11: memref<1x96xf32, #tpu.memory_space<vmem>>, %arg12: memref<1x96xf32, #tpu.memory_space<vmem>>, %arg13: memref<32x96xf32, #tpu.memory_space<vmem>>, %arg14: memref<1x96xf32, #tpu.memory_space<vmem>>, %arg15: memref<32x32xf32, #tpu.memory_space<vmem>>, %arg16: memref<1x32xf32, #tpu.memory_space<vmem>>, %arg17: memref<32x32xf32, #tpu.memory_space<vmem>>, %arg18: memref<1x32xf32, #tpu.memory_space<vmem>>, %arg19: memref<32x128xf32, #tpu.memory_space<vmem>>, %arg20: memref<1x128xf32, #tpu.memory_space<vmem>>, %arg21: memref<8x8x128xf32, #tpu.memory_space<vmem>>) attributes {dimension_semantics = [#tpu.dimension_semantics<parallel>], iteration_bounds = array<i64: 1>, scalar_prefetch = 0 : i64, scratch_operands = 0 : i64, tpu.core_type = #tpu.core_type<tc>, window_params = [{transform_indices = @transform_0, window_bounds = array<i64: 8, 1>}, {transform_indices = @transform_1, window_bounds = array<i64: 8, 8, 32>}, {pipeline_mode = #tpu.pipeline_mode<synchronous>, transform_indices = @transform_2, window_bounds = array<i64: 32, 32>}, {pipeline_mode = #tpu.pipeline_mode<synchronous>, transform_indices = @transform_3, window_bounds = array<i64: 1, 32>}, {pipeline_mode = #tpu.pipeline_mode<synchronous>, transform_indices = @transform_4, window_bounds = array<i64: 32, 96>}, {pipeline_mode = #tpu.pipeline_mode<synchronous>, transform_indices = @transform_5, window_bounds = array<i64: 32, 96>}, {pipeline_mode = #tpu.pipeline_mode<synchronous>, transform_indices = @transform_6, window_bounds = array<i64: 1, 96>}, {pipeline_mode = #tpu.pipeline_mode<synchronous>, transform_indices = @transform_7, window_bounds = array<i64: 1, 96>}, {pipeline_mode = #tpu.pipeline_mode<synchronous>, transform_indices = @transform_8, window_bounds = array<i64: 32, 96>}, {pipeline_mode = #tpu.pipeline_mode<synchronous>, transform_indices = @transform_9, window_bounds = array<i64: 32, 96>}, {pipeline_mode = #tpu.pipeline_mode<synchronous>, transform_indices = @transform_10, window_bounds = array<i64: 1, 96>}, {pipeline_mode = #tpu.pipeline_mode<synchronous>, transform_indices = @transform_11, window_bounds = array<i64: 1, 96>}, {pipeline_mode = #tpu.pipeline_mode<synchronous>, transform_indices = @transform_12, window_bounds = array<i64: 32, 96>}, {pipeline_mode = #tpu.pipeline_mode<synchronous>, transform_indices = @transform_13, window_bounds = array<i64: 1, 96>}, {pipeline_mode = #tpu.pipeline_mode<synchronous>, transform_indices = @transform_14, window_bounds = array<i64: 32, 32>}, {pipeline_mode = #tpu.pipeline_mode<synchronous>, transform_indices = @transform_15, window_bounds = array<i64: 1, 32>}, {pipeline_mode = #tpu.pipeline_mode<synchronous>, transform_indices = @transform_16, window_bounds = array<i64: 32, 32>}, {pipeline_mode = #tpu.pipeline_mode<synchronous>, transform_indices = @transform_17, window_bounds = array<i64: 1, 32>}, {pipeline_mode = #tpu.pipeline_mode<synchronous>, transform_indices = @transform_18, window_bounds = array<i64: 32, 128>}, {pipeline_mode = #tpu.pipeline_mode<synchronous>, transform_indices = @transform_19, window_bounds = array<i64: 1, 128>}, {transform_indices = @transform_20, window_bounds = array<i64: 8, 8, 128>}]} {
    %c0 = arith.constant 0 : index
    %c0_0 = arith.constant 0 : index
    %c0_1 = arith.constant 0 : index
    %0 = vector.load %arg2[%c0, %c0_0, %c0_1] : memref<8x8x32xf32, #tpu.memory_space<vmem>>, vector<8x8x32xf32>
    %1 = vector.shape_cast %0 : vector<8x8x32xf32> to vector<64x32xf32>
    %c0_2 = arith.constant 0 : index
    %c0_3 = arith.constant 0 : index
    %2 = vector.load %arg3[%c0_2, %c0_3] : memref<32x32xf32, #tpu.memory_space<vmem>>, vector<32x32xf32>
    %cst = arith.constant dense<0.000000e+00> : vector<64x32xf32>
    %3 = tpu.matmul %1, %2, %cst {dimension_numbers = #tpu.dot_dimension_numbers<[1], [0], [0], [1], [0, 0, 1, 1], [], []>} : vector<64x32xf32>, vector<32x32xf32>, vector<64x32xf32> -> vector<64x32xf32>
    %c0_4 = arith.constant 0 : index
    %c0_5 = arith.constant 0 : index
    %4 = vector.load %arg4[%c0_4, %c0_5] : memref<1x32xf32, #tpu.memory_space<vmem>>, vector<1x32xf32>
    %5 = vector.broadcast %4 : vector<1x32xf32> to vector<64x32xf32>
    %6 = arith.addf %3, %5 : vector<64x32xf32>
    %c0_6 = arith.constant 0 : index
    %c0_7 = arith.constant 0 : index
    %7 = vector.load %arg5[%c0_6, %c0_7] : memref<32x96xf32, #tpu.memory_space<vmem>>, vector<32x96xf32>
    %cst_8 = arith.constant dense<0.000000e+00> : vector<64x96xf32>
    %8 = tpu.matmul %6, %7, %cst_8 {dimension_numbers = #tpu.dot_dimension_numbers<[1], [0], [0], [1], [0, 0, 1, 1], [], []>} : vector<64x32xf32>, vector<32x96xf32>, vector<64x96xf32> -> vector<64x96xf32>
    %c0_9 = arith.constant 0 : index
    %c0_10 = arith.constant 0 : index
    %9 = vector.load %arg7[%c0_9, %c0_10] : memref<1x96xf32, #tpu.memory_space<vmem>>, vector<1x96xf32>
    %10 = vector.broadcast %9 : vector<1x96xf32> to vector<64x96xf32>
    %11 = arith.addf %8, %10 : vector<64x96xf32>
    %12 = vector.shape_cast %11 : vector<64x96xf32> to vector<8x8x96xf32>
    %c0_11 = arith.constant 0 : index
    %c0_12 = arith.constant 0 : index
    %13 = vector.load %arg6[%c0_11, %c0_12] : memref<32x96xf32, #tpu.memory_space<vmem>>, vector<32x96xf32>
    %c0_13 = arith.constant 0 : index
    %c0_14 = arith.constant 0 : index
    %14 = vector.load %arg8[%c0_13, %c0_14] : memref<1x96xf32, #tpu.memory_space<vmem>>, vector<1x96xf32>
    %c0_15 = arith.constant 0 : index
    %c0_16 = arith.constant 0 : index
    %15 = vector.load %arg9[%c0_15, %c0_16] : memref<32x96xf32, #tpu.memory_space<vmem>>, vector<32x96xf32>
    %c0_17 = arith.constant 0 : index
    %c0_18 = arith.constant 0 : index
    %16 = vector.load %arg11[%c0_17, %c0_18] : memref<1x96xf32, #tpu.memory_space<vmem>>, vector<1x96xf32>
    %c0_19 = arith.constant 0 : index
    %c0_20 = arith.constant 0 : index
    %17 = vector.load %arg10[%c0_19, %c0_20] : memref<32x96xf32, #tpu.memory_space<vmem>>, vector<32x96xf32>
    %c0_21 = arith.constant 0 : index
    %c0_22 = arith.constant 0 : index
    %18 = vector.load %arg12[%c0_21, %c0_22] : memref<1x96xf32, #tpu.memory_space<vmem>>, vector<1x96xf32>
    %cst_23 = arith.constant 0.000000e+00 : f32
    %19 = vector.broadcast %cst_23 : f32 to vector<8x32xf32>
    %cst_24 = arith.constant 0.000000e+00 : f32
    %20 = vector.broadcast %cst_24 : f32 to vector<8x32xf32>
    %cst_25 = arith.constant 0.000000e+00 : f32
    %21 = vector.broadcast %cst_25 : f32 to vector<8x8x32xf32>
    %22 = tpu.iota {dimensions = array<i32: 1>} : vector<8x8x1xi32>
    %23 = vector.extract_strided_slice %12 {offsets = [0, 0, 0], sizes = [8, 1, 96], strides = [1, 1, 1]} : vector<8x8x96xf32> to vector<8x1x96xf32>
    %24 = vector.shape_cast %23 : vector<8x1x96xf32> to vector<8x96xf32>
    %cst_26 = arith.constant dense<0.000000e+00> : vector<8x96xf32>
    %25 = tpu.matmul %19, %13, %cst_26 {dimension_numbers = #tpu.dot_dimension_numbers<[1], [0], [0], [1], [0, 0, 1, 1], [], []>} : vector<8x32xf32>, vector<32x96xf32>, vector<8x96xf32> -> vector<8x96xf32>
    %26 = vector.broadcast %14 : vector<1x96xf32> to vector<8x96xf32>
    %27 = arith.addf %25, %26 : vector<8x96xf32>
    %28 = vector.extract_strided_slice %24 {offsets = [0, 0], sizes = [8, 32], strides = [1, 1]} : vector<8x96xf32> to vector<8x32xf32>
    %29 = vector.extract_strided_slice %27 {offsets = [0, 0], sizes = [8, 32], strides = [1, 1]} : vector<8x96xf32> to vector<8x32xf32>
    %30 = arith.addf %28, %29 : vector<8x32xf32>
    %31 = arith.negf %30 : vector<8x32xf32>
    %32 = math.exp %31 : vector<8x32xf32>
    %cst_27 = arith.constant 1.000000e+00 : f32
    %33 = vector.broadcast %cst_27 : f32 to vector<8x32xf32>
    %34 = arith.addf %33, %32 : vector<8x32xf32>
    %35 = arith.divf %33, %34 : vector<8x32xf32>
    %36 = vector.extract_strided_slice %24 {offsets = [0, 32], sizes = [8, 32], strides = [1, 1]} : vector<8x96xf32> to vector<8x32xf32>
    %37 = vector.extract_strided_slice %27 {offsets = [0, 32], sizes = [8, 32], strides = [1, 1]} : vector<8x96xf32> to vector<8x32xf32>
    %38 = arith.addf %36, %37 : vector<8x32xf32>
    %39 = arith.negf %38 : vector<8x32xf32>
    %40 = math.exp %39 : vector<8x32xf32>
    %cst_28 = arith.constant 1.000000e+00 : f32
    %41 = vector.broadcast %cst_28 : f32 to vector<8x32xf32>
    %42 = arith.addf %41, %40 : vector<8x32xf32>
    %43 = arith.divf %41, %42 : vector<8x32xf32>
    %44 = vector.extract_strided_slice %24 {offsets = [0, 64], sizes = [8, 32], strides = [1, 1]} : vector<8x96xf32> to vector<8x32xf32>
    %45 = vector.extract_strided_slice %27 {offsets = [0, 64], sizes = [8, 32], strides = [1, 1]} : vector<8x96xf32> to vector<8x32xf32>
    %46 = arith.mulf %35, %45 : vector<8x32xf32>
    %47 = arith.addf %44, %46 : vector<8x32xf32>
    %48 = math.tanh %47 : vector<8x32xf32>
    %cst_29 = arith.constant 1.000000e+00 : f32
    %49 = vector.broadcast %cst_29 : f32 to vector<8x32xf32>
    %50 = arith.subf %49, %43 : vector<8x32xf32>
    %51 = arith.mulf %50, %48 : vector<8x32xf32>
    %52 = arith.mulf %43, %19 : vector<8x32xf32>
    %53 = arith.addf %51, %52 : vector<8x32xf32>
    %cst_30 = arith.constant dense<0.000000e+00> : vector<8x96xf32>
    %54 = tpu.matmul %53, %15, %cst_30 {dimension_numbers = #tpu.dot_dimension_numbers<[1], [0], [0], [1], [0, 0, 1, 1], [], []>} : vector<8x32xf32>, vector<32x96xf32>, vector<8x96xf32> -> vector<8x96xf32>
    %55 = vector.broadcast %16 : vector<1x96xf32> to vector<8x96xf32>
    %56 = arith.addf %54, %55 : vector<8x96xf32>
    %cst_31 = arith.constant dense<0.000000e+00> : vector<8x96xf32>
    %57 = tpu.matmul %20, %17, %cst_31 {dimension_numbers = #tpu.dot_dimension_numbers<[1], [0], [0], [1], [0, 0, 1, 1], [], []>} : vector<8x32xf32>, vector<32x96xf32>, vector<8x96xf32> -> vector<8x96xf32>
    %58 = vector.broadcast %18 : vector<1x96xf32> to vector<8x96xf32>
    %59 = arith.addf %57, %58 : vector<8x96xf32>
    %60 = vector.extract_strided_slice %56 {offsets = [0, 0], sizes = [8, 32], strides = [1, 1]} : vector<8x96xf32> to vector<8x32xf32>
    %61 = vector.extract_strided_slice %59 {offsets = [0, 0], sizes = [8, 32], strides = [1, 1]} : vector<8x96xf32> to vector<8x32xf32>
    %62 = arith.addf %60, %61 : vector<8x32xf32>
    %63 = arith.negf %62 : vector<8x32xf32>
    %64 = math.exp %63 : vector<8x32xf32>
    %cst_32 = arith.constant 1.000000e+00 : f32
    %65 = vector.broadcast %cst_32 : f32 to vector<8x32xf32>
    %66 = arith.addf %65, %64 : vector<8x32xf32>
    %67 = arith.divf %65, %66 : vector<8x32xf32>
    %68 = vector.extract_strided_slice %56 {offsets = [0, 32], sizes = [8, 32], strides = [1, 1]} : vector<8x96xf32> to vector<8x32xf32>
    %69 = vector.extract_strided_slice %59 {offsets = [0, 32], sizes = [8, 32], strides = [1, 1]} : vector<8x96xf32> to vector<8x32xf32>
    %70 = arith.addf %68, %69 : vector<8x32xf32>
    %71 = arith.negf %70 : vector<8x32xf32>
    %72 = math.exp %71 : vector<8x32xf32>
    %cst_33 = arith.constant 1.000000e+00 : f32
    %73 = vector.broadcast %cst_33 : f32 to vector<8x32xf32>
    %74 = arith.addf %73, %72 : vector<8x32xf32>
    %75 = arith.divf %73, %74 : vector<8x32xf32>
    %76 = vector.extract_strided_slice %56 {offsets = [0, 64], sizes = [8, 32], strides = [1, 1]} : vector<8x96xf32> to vector<8x32xf32>
    %77 = vector.extract_strided_slice %59 {offsets = [0, 64], sizes = [8, 32], strides = [1, 1]} : vector<8x96xf32> to vector<8x32xf32>
    %78 = arith.mulf %67, %77 : vector<8x32xf32>
    %79 = arith.addf %76, %78 : vector<8x32xf32>
    %80 = math.tanh %79 : vector<8x32xf32>
    %cst_34 = arith.constant 1.000000e+00 : f32
    %81 = vector.broadcast %cst_34 : f32 to vector<8x32xf32>
    %82 = arith.subf %81, %75 : vector<8x32xf32>
    %83 = arith.mulf %82, %80 : vector<8x32xf32>
    %84 = arith.mulf %75, %20 : vector<8x32xf32>
    %85 = arith.addf %83, %84 : vector<8x32xf32>
    %c0_i32 = arith.constant 0 : i32
    %86 = vector.broadcast %c0_i32 : i32 to vector<8x8x1xi32>
    %87 = arith.cmpi eq, %22, %86 : vector<8x8x1xi32>
    %88 = vector.shape_cast %85 : vector<8x32xf32> to vector<8x1x32xf32>
    %89 = vector.shape_cast %87 : vector<8x8x1xi1> to vector<8x8x1xi1>
    %90 = vector.broadcast %89 : vector<8x8x1xi1> to vector<8x8x32xi1>
    %91 = vector.shape_cast %88 : vector<8x1x32xf32> to vector<8x1x32xf32>
    %92 = vector.broadcast %91 : vector<8x1x32xf32> to vector<8x8x32xf32>
    %93 = arith.select %90, %92, %21 : vector<8x8x32xi1>, vector<8x8x32xf32>
    %94 = vector.extract_strided_slice %12 {offsets = [0, 1, 0], sizes = [8, 1, 96], strides = [1, 1, 1]} : vector<8x8x96xf32> to vector<8x1x96xf32>
    %95 = vector.shape_cast %94 : vector<8x1x96xf32> to vector<8x96xf32>
    %cst_35 = arith.constant dense<0.000000e+00> : vector<8x96xf32>
    %96 = tpu.matmul %53, %13, %cst_35 {dimension_numbers = #tpu.dot_dimension_numbers<[1], [0], [0], [1], [0, 0, 1, 1], [], []>} : vector<8x32xf32>, vector<32x96xf32>, vector<8x96xf32> -> vector<8x96xf32>
    %97 = vector.broadcast %14 : vector<1x96xf32> to vector<8x96xf32>
    %98 = arith.addf %96, %97 : vector<8x96xf32>
    %99 = vector.extract_strided_slice %95 {offsets = [0, 0], sizes = [8, 32], strides = [1, 1]} : vector<8x96xf32> to vector<8x32xf32>
    %100 = vector.extract_strided_slice %98 {offsets = [0, 0], sizes = [8, 32], strides = [1, 1]} : vector<8x96xf32> to vector<8x32xf32>
    %101 = arith.addf %99, %100 : vector<8x32xf32>
    %102 = arith.negf %101 : vector<8x32xf32>
    %103 = math.exp %102 : vector<8x32xf32>
    %cst_36 = arith.constant 1.000000e+00 : f32
    %104 = vector.broadcast %cst_36 : f32 to vector<8x32xf32>
    %105 = arith.addf %104, %103 : vector<8x32xf32>
    %106 = arith.divf %104, %105 : vector<8x32xf32>
    %107 = vector.extract_strided_slice %95 {offsets = [0, 32], sizes = [8, 32], strides = [1, 1]} : vector<8x96xf32> to vector<8x32xf32>
    %108 = vector.extract_strided_slice %98 {offsets = [0, 32], sizes = [8, 32], strides = [1, 1]} : vector<8x96xf32> to vector<8x32xf32>
    %109 = arith.addf %107, %108 : vector<8x32xf32>
    %110 = arith.negf %109 : vector<8x32xf32>
    %111 = math.exp %110 : vector<8x32xf32>
    %cst_37 = arith.constant 1.000000e+00 : f32
    %112 = vector.broadcast %cst_37 : f32 to vector<8x32xf32>
    %113 = arith.addf %112, %111 : vector<8x32xf32>
    %114 = arith.divf %112, %113 : vector<8x32xf32>
    %115 = vector.extract_strided_slice %95 {offsets = [0, 64], sizes = [8, 32], strides = [1, 1]} : vector<8x96xf32> to vector<8x32xf32>
    %116 = vector.extract_strided_slice %98 {offsets = [0, 64], sizes = [8, 32], strides = [1, 1]} : vector<8x96xf32> to vector<8x32xf32>
    %117 = arith.mulf %106, %116 : vector<8x32xf32>
    %118 = arith.addf %115, %117 : vector<8x32xf32>
    %119 = math.tanh %118 : vector<8x32xf32>
    %cst_38 = arith.constant 1.000000e+00 : f32
    %120 = vector.broadcast %cst_38 : f32 to vector<8x32xf32>
    %121 = arith.subf %120, %114 : vector<8x32xf32>
    %122 = arith.mulf %121, %119 : vector<8x32xf32>
    %123 = arith.mulf %114, %53 : vector<8x32xf32>
    %124 = arith.addf %122, %123 : vector<8x32xf32>
    %cst_39 = arith.constant dense<0.000000e+00> : vector<8x96xf32>
    %125 = tpu.matmul %124, %15, %cst_39 {dimension_numbers = #tpu.dot_dimension_numbers<[1], [0], [0], [1], [0, 0, 1, 1], [], []>} : vector<8x32xf32>, vector<32x96xf32>, vector<8x96xf32> -> vector<8x96xf32>
    %126 = vector.broadcast %16 : vector<1x96xf32> to vector<8x96xf32>
    %127 = arith.addf %125, %126 : vector<8x96xf32>
    %cst_40 = arith.constant dense<0.000000e+00> : vector<8x96xf32>
    %128 = tpu.matmul %85, %17, %cst_40 {dimension_numbers = #tpu.dot_dimension_numbers<[1], [0], [0], [1], [0, 0, 1, 1], [], []>} : vector<8x32xf32>, vector<32x96xf32>, vector<8x96xf32> -> vector<8x96xf32>
    %129 = vector.broadcast %18 : vector<1x96xf32> to vector<8x96xf32>
    %130 = arith.addf %128, %129 : vector<8x96xf32>
    %131 = vector.extract_strided_slice %127 {offsets = [0, 0], sizes = [8, 32], strides = [1, 1]} : vector<8x96xf32> to vector<8x32xf32>
    %132 = vector.extract_strided_slice %130 {offsets = [0, 0], sizes = [8, 32], strides = [1, 1]} : vector<8x96xf32> to vector<8x32xf32>
    %133 = arith.addf %131, %132 : vector<8x32xf32>
    %134 = arith.negf %133 : vector<8x32xf32>
    %135 = math.exp %134 : vector<8x32xf32>
    %cst_41 = arith.constant 1.000000e+00 : f32
    %136 = vector.broadcast %cst_41 : f32 to vector<8x32xf32>
    %137 = arith.addf %136, %135 : vector<8x32xf32>
    %138 = arith.divf %136, %137 : vector<8x32xf32>
    %139 = vector.extract_strided_slice %127 {offsets = [0, 32], sizes = [8, 32], strides = [1, 1]} : vector<8x96xf32> to vector<8x32xf32>
    %140 = vector.extract_strided_slice %130 {offsets = [0, 32], sizes = [8, 32], strides = [1, 1]} : vector<8x96xf32> to vector<8x32xf32>
    %141 = arith.addf %139, %140 : vector<8x32xf32>
    %142 = arith.negf %141 : vector<8x32xf32>
    %143 = math.exp %142 : vector<8x32xf32>
    %cst_42 = arith.constant 1.000000e+00 : f32
    %144 = vector.broadcast %cst_42 : f32 to vector<8x32xf32>
    %145 = arith.addf %144, %143 : vector<8x32xf32>
    %146 = arith.divf %144, %145 : vector<8x32xf32>
    %147 = vector.extract_strided_slice %127 {offsets = [0, 64], sizes = [8, 32], strides = [1, 1]} : vector<8x96xf32> to vector<8x32xf32>
    %148 = vector.extract_strided_slice %130 {offsets = [0, 64], sizes = [8, 32], strides = [1, 1]} : vector<8x96xf32> to vector<8x32xf32>
    %149 = arith.mulf %138, %148 : vector<8x32xf32>
    %150 = arith.addf %147, %149 : vector<8x32xf32>
    %151 = math.tanh %150 : vector<8x32xf32>
    %cst_43 = arith.constant 1.000000e+00 : f32
    %152 = vector.broadcast %cst_43 : f32 to vector<8x32xf32>
    %153 = arith.subf %152, %146 : vector<8x32xf32>
    %154 = arith.mulf %153, %151 : vector<8x32xf32>
    %155 = arith.mulf %146, %85 : vector<8x32xf32>
    %156 = arith.addf %154, %155 : vector<8x32xf32>
    %c1_i32 = arith.constant 1 : i32
    %157 = vector.broadcast %c1_i32 : i32 to vector<8x8x1xi32>
    %158 = arith.cmpi eq, %22, %157 : vector<8x8x1xi32>
    %159 = vector.shape_cast %156 : vector<8x32xf32> to vector<8x1x32xf32>
    %160 = vector.shape_cast %158 : vector<8x8x1xi1> to vector<8x8x1xi1>
    %161 = vector.broadcast %160 : vector<8x8x1xi1> to vector<8x8x32xi1>
    %162 = vector.shape_cast %159 : vector<8x1x32xf32> to vector<8x1x32xf32>
    %163 = vector.broadcast %162 : vector<8x1x32xf32> to vector<8x8x32xf32>
    %164 = arith.select %161, %163, %93 : vector<8x8x32xi1>, vector<8x8x32xf32>
    %165 = vector.extract_strided_slice %12 {offsets = [0, 2, 0], sizes = [8, 1, 96], strides = [1, 1, 1]} : vector<8x8x96xf32> to vector<8x1x96xf32>
    %166 = vector.shape_cast %165 : vector<8x1x96xf32> to vector<8x96xf32>
    %cst_44 = arith.constant dense<0.000000e+00> : vector<8x96xf32>
    %167 = tpu.matmul %124, %13, %cst_44 {dimension_numbers = #tpu.dot_dimension_numbers<[1], [0], [0], [1], [0, 0, 1, 1], [], []>} : vector<8x32xf32>, vector<32x96xf32>, vector<8x96xf32> -> vector<8x96xf32>
    %168 = vector.broadcast %14 : vector<1x96xf32> to vector<8x96xf32>
    %169 = arith.addf %167, %168 : vector<8x96xf32>
    %170 = vector.extract_strided_slice %166 {offsets = [0, 0], sizes = [8, 32], strides = [1, 1]} : vector<8x96xf32> to vector<8x32xf32>
    %171 = vector.extract_strided_slice %169 {offsets = [0, 0], sizes = [8, 32], strides = [1, 1]} : vector<8x96xf32> to vector<8x32xf32>
    %172 = arith.addf %170, %171 : vector<8x32xf32>
    %173 = arith.negf %172 : vector<8x32xf32>
    %174 = math.exp %173 : vector<8x32xf32>
    %cst_45 = arith.constant 1.000000e+00 : f32
    %175 = vector.broadcast %cst_45 : f32 to vector<8x32xf32>
    %176 = arith.addf %175, %174 : vector<8x32xf32>
    %177 = arith.divf %175, %176 : vector<8x32xf32>
    %178 = vector.extract_strided_slice %166 {offsets = [0, 32], sizes = [8, 32], strides = [1, 1]} : vector<8x96xf32> to vector<8x32xf32>
    %179 = vector.extract_strided_slice %169 {offsets = [0, 32], sizes = [8, 32], strides = [1, 1]} : vector<8x96xf32> to vector<8x32xf32>
    %180 = arith.addf %178, %179 : vector<8x32xf32>
    %181 = arith.negf %180 : vector<8x32xf32>
    %182 = math.exp %181 : vector<8x32xf32>
    %cst_46 = arith.constant 1.000000e+00 : f32
    %183 = vector.broadcast %cst_46 : f32 to vector<8x32xf32>
    %184 = arith.addf %183, %182 : vector<8x32xf32>
    %185 = arith.divf %183, %184 : vector<8x32xf32>
    %186 = vector.extract_strided_slice %166 {offsets = [0, 64], sizes = [8, 32], strides = [1, 1]} : vector<8x96xf32> to vector<8x32xf32>
    %187 = vector.extract_strided_slice %169 {offsets = [0, 64], sizes = [8, 32], strides = [1, 1]} : vector<8x96xf32> to vector<8x32xf32>
    %188 = arith.mulf %177, %187 : vector<8x32xf32>
    %189 = arith.addf %186, %188 : vector<8x32xf32>
    %190 = math.tanh %189 : vector<8x32xf32>
    %cst_47 = arith.constant 1.000000e+00 : f32
    %191 = vector.broadcast %cst_47 : f32 to vector<8x32xf32>
    %192 = arith.subf %191, %185 : vector<8x32xf32>
    %193 = arith.mulf %192, %190 : vector<8x32xf32>
    %194 = arith.mulf %185, %124 : vector<8x32xf32>
    %195 = arith.addf %193, %194 : vector<8x32xf32>
    %cst_48 = arith.constant dense<0.000000e+00> : vector<8x96xf32>
    %196 = tpu.matmul %195, %15, %cst_48 {dimension_numbers = #tpu.dot_dimension_numbers<[1], [0], [0], [1], [0, 0, 1, 1], [], []>} : vector<8x32xf32>, vector<32x96xf32>, vector<8x96xf32> -> vector<8x96xf32>
    %197 = vector.broadcast %16 : vector<1x96xf32> to vector<8x96xf32>
    %198 = arith.addf %196, %197 : vector<8x96xf32>
    %cst_49 = arith.constant dense<0.000000e+00> : vector<8x96xf32>
    %199 = tpu.matmul %156, %17, %cst_49 {dimension_numbers = #tpu.dot_dimension_numbers<[1], [0], [0], [1], [0, 0, 1, 1], [], []>} : vector<8x32xf32>, vector<32x96xf32>, vector<8x96xf32> -> vector<8x96xf32>
    %200 = vector.broadcast %18 : vector<1x96xf32> to vector<8x96xf32>
    %201 = arith.addf %199, %200 : vector<8x96xf32>
    %202 = vector.extract_strided_slice %198 {offsets = [0, 0], sizes = [8, 32], strides = [1, 1]} : vector<8x96xf32> to vector<8x32xf32>
    %203 = vector.extract_strided_slice %201 {offsets = [0, 0], sizes = [8, 32], strides = [1, 1]} : vector<8x96xf32> to vector<8x32xf32>
    %204 = arith.addf %202, %203 : vector<8x32xf32>
    %205 = arith.negf %204 : vector<8x32xf32>
    %206 = math.exp %205 : vector<8x32xf32>
    %cst_50 = arith.constant 1.000000e+00 : f32
    %207 = vector.broadcast %cst_50 : f32 to vector<8x32xf32>
    %208 = arith.addf %207, %206 : vector<8x32xf32>
    %209 = arith.divf %207, %208 : vector<8x32xf32>
    %210 = vector.extract_strided_slice %198 {offsets = [0, 32], sizes = [8, 32], strides = [1, 1]} : vector<8x96xf32> to vector<8x32xf32>
    %211 = vector.extract_strided_slice %201 {offsets = [0, 32], sizes = [8, 32], strides = [1, 1]} : vector<8x96xf32> to vector<8x32xf32>
    %212 = arith.addf %210, %211 : vector<8x32xf32>
    %213 = arith.negf %212 : vector<8x32xf32>
    %214 = math.exp %213 : vector<8x32xf32>
    %cst_51 = arith.constant 1.000000e+00 : f32
    %215 = vector.broadcast %cst_51 : f32 to vector<8x32xf32>
    %216 = arith.addf %215, %214 : vector<8x32xf32>
    %217 = arith.divf %215, %216 : vector<8x32xf32>
    %218 = vector.extract_strided_slice %198 {offsets = [0, 64], sizes = [8, 32], strides = [1, 1]} : vector<8x96xf32> to vector<8x32xf32>
    %219 = vector.extract_strided_slice %201 {offsets = [0, 64], sizes = [8, 32], strides = [1, 1]} : vector<8x96xf32> to vector<8x32xf32>
    %220 = arith.mulf %209, %219 : vector<8x32xf32>
    %221 = arith.addf %218, %220 : vector<8x32xf32>
    %222 = math.tanh %221 : vector<8x32xf32>
    %cst_52 = arith.constant 1.000000e+00 : f32
    %223 = vector.broadcast %cst_52 : f32 to vector<8x32xf32>
    %224 = arith.subf %223, %217 : vector<8x32xf32>
    %225 = arith.mulf %224, %222 : vector<8x32xf32>
    %226 = arith.mulf %217, %156 : vector<8x32xf32>
    %227 = arith.addf %225, %226 : vector<8x32xf32>
    %c2_i32 = arith.constant 2 : i32
    %228 = vector.broadcast %c2_i32 : i32 to vector<8x8x1xi32>
    %229 = arith.cmpi eq, %22, %228 : vector<8x8x1xi32>
    %230 = vector.shape_cast %227 : vector<8x32xf32> to vector<8x1x32xf32>
    %231 = vector.shape_cast %229 : vector<8x8x1xi1> to vector<8x8x1xi1>
    %232 = vector.broadcast %231 : vector<8x8x1xi1> to vector<8x8x32xi1>
    %233 = vector.shape_cast %230 : vector<8x1x32xf32> to vector<8x1x32xf32>
    %234 = vector.broadcast %233 : vector<8x1x32xf32> to vector<8x8x32xf32>
    %235 = arith.select %232, %234, %164 : vector<8x8x32xi1>, vector<8x8x32xf32>
    %236 = vector.extract_strided_slice %12 {offsets = [0, 3, 0], sizes = [8, 1, 96], strides = [1, 1, 1]} : vector<8x8x96xf32> to vector<8x1x96xf32>
    %237 = vector.shape_cast %236 : vector<8x1x96xf32> to vector<8x96xf32>
    %cst_53 = arith.constant dense<0.000000e+00> : vector<8x96xf32>
    %238 = tpu.matmul %195, %13, %cst_53 {dimension_numbers = #tpu.dot_dimension_numbers<[1], [0], [0], [1], [0, 0, 1, 1], [], []>} : vector<8x32xf32>, vector<32x96xf32>, vector<8x96xf32> -> vector<8x96xf32>
    %239 = vector.broadcast %14 : vector<1x96xf32> to vector<8x96xf32>
    %240 = arith.addf %238, %239 : vector<8x96xf32>
    %241 = vector.extract_strided_slice %237 {offsets = [0, 0], sizes = [8, 32], strides = [1, 1]} : vector<8x96xf32> to vector<8x32xf32>
    %242 = vector.extract_strided_slice %240 {offsets = [0, 0], sizes = [8, 32], strides = [1, 1]} : vector<8x96xf32> to vector<8x32xf32>
    %243 = arith.addf %241, %242 : vector<8x32xf32>
    %244 = arith.negf %243 : vector<8x32xf32>
    %245 = math.exp %244 : vector<8x32xf32>
    %cst_54 = arith.constant 1.000000e+00 : f32
    %246 = vector.broadcast %cst_54 : f32 to vector<8x32xf32>
    %247 = arith.addf %246, %245 : vector<8x32xf32>
    %248 = arith.divf %246, %247 : vector<8x32xf32>
    %249 = vector.extract_strided_slice %237 {offsets = [0, 32], sizes = [8, 32], strides = [1, 1]} : vector<8x96xf32> to vector<8x32xf32>
    %250 = vector.extract_strided_slice %240 {offsets = [0, 32], sizes = [8, 32], strides = [1, 1]} : vector<8x96xf32> to vector<8x32xf32>
    %251 = arith.addf %249, %250 : vector<8x32xf32>
    %252 = arith.negf %251 : vector<8x32xf32>
    %253 = math.exp %252 : vector<8x32xf32>
    %cst_55 = arith.constant 1.000000e+00 : f32
    %254 = vector.broadcast %cst_55 : f32 to vector<8x32xf32>
    %255 = arith.addf %254, %253 : vector<8x32xf32>
    %256 = arith.divf %254, %255 : vector<8x32xf32>
    %257 = vector.extract_strided_slice %237 {offsets = [0, 64], sizes = [8, 32], strides = [1, 1]} : vector<8x96xf32> to vector<8x32xf32>
    %258 = vector.extract_strided_slice %240 {offsets = [0, 64], sizes = [8, 32], strides = [1, 1]} : vector<8x96xf32> to vector<8x32xf32>
    %259 = arith.mulf %248, %258 : vector<8x32xf32>
    %260 = arith.addf %257, %259 : vector<8x32xf32>
    %261 = math.tanh %260 : vector<8x32xf32>
    %cst_56 = arith.constant 1.000000e+00 : f32
    %262 = vector.broadcast %cst_56 : f32 to vector<8x32xf32>
    %263 = arith.subf %262, %256 : vector<8x32xf32>
    %264 = arith.mulf %263, %261 : vector<8x32xf32>
    %265 = arith.mulf %256, %195 : vector<8x32xf32>
    %266 = arith.addf %264, %265 : vector<8x32xf32>
    %cst_57 = arith.constant dense<0.000000e+00> : vector<8x96xf32>
    %267 = tpu.matmul %266, %15, %cst_57 {dimension_numbers = #tpu.dot_dimension_numbers<[1], [0], [0], [1], [0, 0, 1, 1], [], []>} : vector<8x32xf32>, vector<32x96xf32>, vector<8x96xf32> -> vector<8x96xf32>
    %268 = vector.broadcast %16 : vector<1x96xf32> to vector<8x96xf32>
    %269 = arith.addf %267, %268 : vector<8x96xf32>
    %cst_58 = arith.constant dense<0.000000e+00> : vector<8x96xf32>
    %270 = tpu.matmul %227, %17, %cst_58 {dimension_numbers = #tpu.dot_dimension_numbers<[1], [0], [0], [1], [0, 0, 1, 1], [], []>} : vector<8x32xf32>, vector<32x96xf32>, vector<8x96xf32> -> vector<8x96xf32>
    %271 = vector.broadcast %18 : vector<1x96xf32> to vector<8x96xf32>
    %272 = arith.addf %270, %271 : vector<8x96xf32>
    %273 = vector.extract_strided_slice %269 {offsets = [0, 0], sizes = [8, 32], strides = [1, 1]} : vector<8x96xf32> to vector<8x32xf32>
    %274 = vector.extract_strided_slice %272 {offsets = [0, 0], sizes = [8, 32], strides = [1, 1]} : vector<8x96xf32> to vector<8x32xf32>
    %275 = arith.addf %273, %274 : vector<8x32xf32>
    %276 = arith.negf %275 : vector<8x32xf32>
    %277 = math.exp %276 : vector<8x32xf32>
    %cst_59 = arith.constant 1.000000e+00 : f32
    %278 = vector.broadcast %cst_59 : f32 to vector<8x32xf32>
    %279 = arith.addf %278, %277 : vector<8x32xf32>
    %280 = arith.divf %278, %279 : vector<8x32xf32>
    %281 = vector.extract_strided_slice %269 {offsets = [0, 32], sizes = [8, 32], strides = [1, 1]} : vector<8x96xf32> to vector<8x32xf32>
    %282 = vector.extract_strided_slice %272 {offsets = [0, 32], sizes = [8, 32], strides = [1, 1]} : vector<8x96xf32> to vector<8x32xf32>
    %283 = arith.addf %281, %282 : vector<8x32xf32>
    %284 = arith.negf %283 : vector<8x32xf32>
    %285 = math.exp %284 : vector<8x32xf32>
    %cst_60 = arith.constant 1.000000e+00 : f32
    %286 = vector.broadcast %cst_60 : f32 to vector<8x32xf32>
    %287 = arith.addf %286, %285 : vector<8x32xf32>
    %288 = arith.divf %286, %287 : vector<8x32xf32>
    %289 = vector.extract_strided_slice %269 {offsets = [0, 64], sizes = [8, 32], strides = [1, 1]} : vector<8x96xf32> to vector<8x32xf32>
    %290 = vector.extract_strided_slice %272 {offsets = [0, 64], sizes = [8, 32], strides = [1, 1]} : vector<8x96xf32> to vector<8x32xf32>
    %291 = arith.mulf %280, %290 : vector<8x32xf32>
    %292 = arith.addf %289, %291 : vector<8x32xf32>
    %293 = math.tanh %292 : vector<8x32xf32>
    %cst_61 = arith.constant 1.000000e+00 : f32
    %294 = vector.broadcast %cst_61 : f32 to vector<8x32xf32>
    %295 = arith.subf %294, %288 : vector<8x32xf32>
    %296 = arith.mulf %295, %293 : vector<8x32xf32>
    %297 = arith.mulf %288, %227 : vector<8x32xf32>
    %298 = arith.addf %296, %297 : vector<8x32xf32>
    %c3_i32 = arith.constant 3 : i32
    %299 = vector.broadcast %c3_i32 : i32 to vector<8x8x1xi32>
    %300 = arith.cmpi eq, %22, %299 : vector<8x8x1xi32>
    %301 = vector.shape_cast %298 : vector<8x32xf32> to vector<8x1x32xf32>
    %302 = vector.shape_cast %300 : vector<8x8x1xi1> to vector<8x8x1xi1>
    %303 = vector.broadcast %302 : vector<8x8x1xi1> to vector<8x8x32xi1>
    %304 = vector.shape_cast %301 : vector<8x1x32xf32> to vector<8x1x32xf32>
    %305 = vector.broadcast %304 : vector<8x1x32xf32> to vector<8x8x32xf32>
    %306 = arith.select %303, %305, %235 : vector<8x8x32xi1>, vector<8x8x32xf32>
    %307 = vector.extract_strided_slice %12 {offsets = [0, 4, 0], sizes = [8, 1, 96], strides = [1, 1, 1]} : vector<8x8x96xf32> to vector<8x1x96xf32>
    %308 = vector.shape_cast %307 : vector<8x1x96xf32> to vector<8x96xf32>
    %cst_62 = arith.constant dense<0.000000e+00> : vector<8x96xf32>
    %309 = tpu.matmul %266, %13, %cst_62 {dimension_numbers = #tpu.dot_dimension_numbers<[1], [0], [0], [1], [0, 0, 1, 1], [], []>} : vector<8x32xf32>, vector<32x96xf32>, vector<8x96xf32> -> vector<8x96xf32>
    %310 = vector.broadcast %14 : vector<1x96xf32> to vector<8x96xf32>
    %311 = arith.addf %309, %310 : vector<8x96xf32>
    %312 = vector.extract_strided_slice %308 {offsets = [0, 0], sizes = [8, 32], strides = [1, 1]} : vector<8x96xf32> to vector<8x32xf32>
    %313 = vector.extract_strided_slice %311 {offsets = [0, 0], sizes = [8, 32], strides = [1, 1]} : vector<8x96xf32> to vector<8x32xf32>
    %314 = arith.addf %312, %313 : vector<8x32xf32>
    %315 = arith.negf %314 : vector<8x32xf32>
    %316 = math.exp %315 : vector<8x32xf32>
    %cst_63 = arith.constant 1.000000e+00 : f32
    %317 = vector.broadcast %cst_63 : f32 to vector<8x32xf32>
    %318 = arith.addf %317, %316 : vector<8x32xf32>
    %319 = arith.divf %317, %318 : vector<8x32xf32>
    %320 = vector.extract_strided_slice %308 {offsets = [0, 32], sizes = [8, 32], strides = [1, 1]} : vector<8x96xf32> to vector<8x32xf32>
    %321 = vector.extract_strided_slice %311 {offsets = [0, 32], sizes = [8, 32], strides = [1, 1]} : vector<8x96xf32> to vector<8x32xf32>
    %322 = arith.addf %320, %321 : vector<8x32xf32>
    %323 = arith.negf %322 : vector<8x32xf32>
    %324 = math.exp %323 : vector<8x32xf32>
    %cst_64 = arith.constant 1.000000e+00 : f32
    %325 = vector.broadcast %cst_64 : f32 to vector<8x32xf32>
    %326 = arith.addf %325, %324 : vector<8x32xf32>
    %327 = arith.divf %325, %326 : vector<8x32xf32>
    %328 = vector.extract_strided_slice %308 {offsets = [0, 64], sizes = [8, 32], strides = [1, 1]} : vector<8x96xf32> to vector<8x32xf32>
    %329 = vector.extract_strided_slice %311 {offsets = [0, 64], sizes = [8, 32], strides = [1, 1]} : vector<8x96xf32> to vector<8x32xf32>
    %330 = arith.mulf %319, %329 : vector<8x32xf32>
    %331 = arith.addf %328, %330 : vector<8x32xf32>
    %332 = math.tanh %331 : vector<8x32xf32>
    %cst_65 = arith.constant 1.000000e+00 : f32
    %333 = vector.broadcast %cst_65 : f32 to vector<8x32xf32>
    %334 = arith.subf %333, %327 : vector<8x32xf32>
    %335 = arith.mulf %334, %332 : vector<8x32xf32>
    %336 = arith.mulf %327, %266 : vector<8x32xf32>
    %337 = arith.addf %335, %336 : vector<8x32xf32>
    %cst_66 = arith.constant dense<0.000000e+00> : vector<8x96xf32>
    %338 = tpu.matmul %337, %15, %cst_66 {dimension_numbers = #tpu.dot_dimension_numbers<[1], [0], [0], [1], [0, 0, 1, 1], [], []>} : vector<8x32xf32>, vector<32x96xf32>, vector<8x96xf32> -> vector<8x96xf32>
    %339 = vector.broadcast %16 : vector<1x96xf32> to vector<8x96xf32>
    %340 = arith.addf %338, %339 : vector<8x96xf32>
    %cst_67 = arith.constant dense<0.000000e+00> : vector<8x96xf32>
    %341 = tpu.matmul %298, %17, %cst_67 {dimension_numbers = #tpu.dot_dimension_numbers<[1], [0], [0], [1], [0, 0, 1, 1], [], []>} : vector<8x32xf32>, vector<32x96xf32>, vector<8x96xf32> -> vector<8x96xf32>
    %342 = vector.broadcast %18 : vector<1x96xf32> to vector<8x96xf32>
    %343 = arith.addf %341, %342 : vector<8x96xf32>
    %344 = vector.extract_strided_slice %340 {offsets = [0, 0], sizes = [8, 32], strides = [1, 1]} : vector<8x96xf32> to vector<8x32xf32>
    %345 = vector.extract_strided_slice %343 {offsets = [0, 0], sizes = [8, 32], strides = [1, 1]} : vector<8x96xf32> to vector<8x32xf32>
    %346 = arith.addf %344, %345 : vector<8x32xf32>
    %347 = arith.negf %346 : vector<8x32xf32>
    %348 = math.exp %347 : vector<8x32xf32>
    %cst_68 = arith.constant 1.000000e+00 : f32
    %349 = vector.broadcast %cst_68 : f32 to vector<8x32xf32>
    %350 = arith.addf %349, %348 : vector<8x32xf32>
    %351 = arith.divf %349, %350 : vector<8x32xf32>
    %352 = vector.extract_strided_slice %340 {offsets = [0, 32], sizes = [8, 32], strides = [1, 1]} : vector<8x96xf32> to vector<8x32xf32>
    %353 = vector.extract_strided_slice %343 {offsets = [0, 32], sizes = [8, 32], strides = [1, 1]} : vector<8x96xf32> to vector<8x32xf32>
    %354 = arith.addf %352, %353 : vector<8x32xf32>
    %355 = arith.negf %354 : vector<8x32xf32>
    %356 = math.exp %355 : vector<8x32xf32>
    %cst_69 = arith.constant 1.000000e+00 : f32
    %357 = vector.broadcast %cst_69 : f32 to vector<8x32xf32>
    %358 = arith.addf %357, %356 : vector<8x32xf32>
    %359 = arith.divf %357, %358 : vector<8x32xf32>
    %360 = vector.extract_strided_slice %340 {offsets = [0, 64], sizes = [8, 32], strides = [1, 1]} : vector<8x96xf32> to vector<8x32xf32>
    %361 = vector.extract_strided_slice %343 {offsets = [0, 64], sizes = [8, 32], strides = [1, 1]} : vector<8x96xf32> to vector<8x32xf32>
    %362 = arith.mulf %351, %361 : vector<8x32xf32>
    %363 = arith.addf %360, %362 : vector<8x32xf32>
    %364 = math.tanh %363 : vector<8x32xf32>
    %cst_70 = arith.constant 1.000000e+00 : f32
    %365 = vector.broadcast %cst_70 : f32 to vector<8x32xf32>
    %366 = arith.subf %365, %359 : vector<8x32xf32>
    %367 = arith.mulf %366, %364 : vector<8x32xf32>
    %368 = arith.mulf %359, %298 : vector<8x32xf32>
    %369 = arith.addf %367, %368 : vector<8x32xf32>
    %c4_i32 = arith.constant 4 : i32
    %370 = vector.broadcast %c4_i32 : i32 to vector<8x8x1xi32>
    %371 = arith.cmpi eq, %22, %370 : vector<8x8x1xi32>
    %372 = vector.shape_cast %369 : vector<8x32xf32> to vector<8x1x32xf32>
    %373 = vector.shape_cast %371 : vector<8x8x1xi1> to vector<8x8x1xi1>
    %374 = vector.broadcast %373 : vector<8x8x1xi1> to vector<8x8x32xi1>
    %375 = vector.shape_cast %372 : vector<8x1x32xf32> to vector<8x1x32xf32>
    %376 = vector.broadcast %375 : vector<8x1x32xf32> to vector<8x8x32xf32>
    %377 = arith.select %374, %376, %306 : vector<8x8x32xi1>, vector<8x8x32xf32>
    %378 = vector.extract_strided_slice %12 {offsets = [0, 5, 0], sizes = [8, 1, 96], strides = [1, 1, 1]} : vector<8x8x96xf32> to vector<8x1x96xf32>
    %379 = vector.shape_cast %378 : vector<8x1x96xf32> to vector<8x96xf32>
    %cst_71 = arith.constant dense<0.000000e+00> : vector<8x96xf32>
    %380 = tpu.matmul %337, %13, %cst_71 {dimension_numbers = #tpu.dot_dimension_numbers<[1], [0], [0], [1], [0, 0, 1, 1], [], []>} : vector<8x32xf32>, vector<32x96xf32>, vector<8x96xf32> -> vector<8x96xf32>
    %381 = vector.broadcast %14 : vector<1x96xf32> to vector<8x96xf32>
    %382 = arith.addf %380, %381 : vector<8x96xf32>
    %383 = vector.extract_strided_slice %379 {offsets = [0, 0], sizes = [8, 32], strides = [1, 1]} : vector<8x96xf32> to vector<8x32xf32>
    %384 = vector.extract_strided_slice %382 {offsets = [0, 0], sizes = [8, 32], strides = [1, 1]} : vector<8x96xf32> to vector<8x32xf32>
    %385 = arith.addf %383, %384 : vector<8x32xf32>
    %386 = arith.negf %385 : vector<8x32xf32>
    %387 = math.exp %386 : vector<8x32xf32>
    %cst_72 = arith.constant 1.000000e+00 : f32
    %388 = vector.broadcast %cst_72 : f32 to vector<8x32xf32>
    %389 = arith.addf %388, %387 : vector<8x32xf32>
    %390 = arith.divf %388, %389 : vector<8x32xf32>
    %391 = vector.extract_strided_slice %379 {offsets = [0, 32], sizes = [8, 32], strides = [1, 1]} : vector<8x96xf32> to vector<8x32xf32>
    %392 = vector.extract_strided_slice %382 {offsets = [0, 32], sizes = [8, 32], strides = [1, 1]} : vector<8x96xf32> to vector<8x32xf32>
    %393 = arith.addf %391, %392 : vector<8x32xf32>
    %394 = arith.negf %393 : vector<8x32xf32>
    %395 = math.exp %394 : vector<8x32xf32>
    %cst_73 = arith.constant 1.000000e+00 : f32
    %396 = vector.broadcast %cst_73 : f32 to vector<8x32xf32>
    %397 = arith.addf %396, %395 : vector<8x32xf32>
    %398 = arith.divf %396, %397 : vector<8x32xf32>
    %399 = vector.extract_strided_slice %379 {offsets = [0, 64], sizes = [8, 32], strides = [1, 1]} : vector<8x96xf32> to vector<8x32xf32>
    %400 = vector.extract_strided_slice %382 {offsets = [0, 64], sizes = [8, 32], strides = [1, 1]} : vector<8x96xf32> to vector<8x32xf32>
    %401 = arith.mulf %390, %400 : vector<8x32xf32>
    %402 = arith.addf %399, %401 : vector<8x32xf32>
    %403 = math.tanh %402 : vector<8x32xf32>
    %cst_74 = arith.constant 1.000000e+00 : f32
    %404 = vector.broadcast %cst_74 : f32 to vector<8x32xf32>
    %405 = arith.subf %404, %398 : vector<8x32xf32>
    %406 = arith.mulf %405, %403 : vector<8x32xf32>
    %407 = arith.mulf %398, %337 : vector<8x32xf32>
    %408 = arith.addf %406, %407 : vector<8x32xf32>
    %cst_75 = arith.constant dense<0.000000e+00> : vector<8x96xf32>
    %409 = tpu.matmul %408, %15, %cst_75 {dimension_numbers = #tpu.dot_dimension_numbers<[1], [0], [0], [1], [0, 0, 1, 1], [], []>} : vector<8x32xf32>, vector<32x96xf32>, vector<8x96xf32> -> vector<8x96xf32>
    %410 = vector.broadcast %16 : vector<1x96xf32> to vector<8x96xf32>
    %411 = arith.addf %409, %410 : vector<8x96xf32>
    %cst_76 = arith.constant dense<0.000000e+00> : vector<8x96xf32>
    %412 = tpu.matmul %369, %17, %cst_76 {dimension_numbers = #tpu.dot_dimension_numbers<[1], [0], [0], [1], [0, 0, 1, 1], [], []>} : vector<8x32xf32>, vector<32x96xf32>, vector<8x96xf32> -> vector<8x96xf32>
    %413 = vector.broadcast %18 : vector<1x96xf32> to vector<8x96xf32>
    %414 = arith.addf %412, %413 : vector<8x96xf32>
    %415 = vector.extract_strided_slice %411 {offsets = [0, 0], sizes = [8, 32], strides = [1, 1]} : vector<8x96xf32> to vector<8x32xf32>
    %416 = vector.extract_strided_slice %414 {offsets = [0, 0], sizes = [8, 32], strides = [1, 1]} : vector<8x96xf32> to vector<8x32xf32>
    %417 = arith.addf %415, %416 : vector<8x32xf32>
    %418 = arith.negf %417 : vector<8x32xf32>
    %419 = math.exp %418 : vector<8x32xf32>
    %cst_77 = arith.constant 1.000000e+00 : f32
    %420 = vector.broadcast %cst_77 : f32 to vector<8x32xf32>
    %421 = arith.addf %420, %419 : vector<8x32xf32>
    %422 = arith.divf %420, %421 : vector<8x32xf32>
    %423 = vector.extract_strided_slice %411 {offsets = [0, 32], sizes = [8, 32], strides = [1, 1]} : vector<8x96xf32> to vector<8x32xf32>
    %424 = vector.extract_strided_slice %414 {offsets = [0, 32], sizes = [8, 32], strides = [1, 1]} : vector<8x96xf32> to vector<8x32xf32>
    %425 = arith.addf %423, %424 : vector<8x32xf32>
    %426 = arith.negf %425 : vector<8x32xf32>
    %427 = math.exp %426 : vector<8x32xf32>
    %cst_78 = arith.constant 1.000000e+00 : f32
    %428 = vector.broadcast %cst_78 : f32 to vector<8x32xf32>
    %429 = arith.addf %428, %427 : vector<8x32xf32>
    %430 = arith.divf %428, %429 : vector<8x32xf32>
    %431 = vector.extract_strided_slice %411 {offsets = [0, 64], sizes = [8, 32], strides = [1, 1]} : vector<8x96xf32> to vector<8x32xf32>
    %432 = vector.extract_strided_slice %414 {offsets = [0, 64], sizes = [8, 32], strides = [1, 1]} : vector<8x96xf32> to vector<8x32xf32>
    %433 = arith.mulf %422, %432 : vector<8x32xf32>
    %434 = arith.addf %431, %433 : vector<8x32xf32>
    %435 = math.tanh %434 : vector<8x32xf32>
    %cst_79 = arith.constant 1.000000e+00 : f32
    %436 = vector.broadcast %cst_79 : f32 to vector<8x32xf32>
    %437 = arith.subf %436, %430 : vector<8x32xf32>
    %438 = arith.mulf %437, %435 : vector<8x32xf32>
    %439 = arith.mulf %430, %369 : vector<8x32xf32>
    %440 = arith.addf %438, %439 : vector<8x32xf32>
    %c5_i32 = arith.constant 5 : i32
    %441 = vector.broadcast %c5_i32 : i32 to vector<8x8x1xi32>
    %442 = arith.cmpi eq, %22, %441 : vector<8x8x1xi32>
    %443 = vector.shape_cast %440 : vector<8x32xf32> to vector<8x1x32xf32>
    %444 = vector.shape_cast %442 : vector<8x8x1xi1> to vector<8x8x1xi1>
    %445 = vector.broadcast %444 : vector<8x8x1xi1> to vector<8x8x32xi1>
    %446 = vector.shape_cast %443 : vector<8x1x32xf32> to vector<8x1x32xf32>
    %447 = vector.broadcast %446 : vector<8x1x32xf32> to vector<8x8x32xf32>
    %448 = arith.select %445, %447, %377 : vector<8x8x32xi1>, vector<8x8x32xf32>
    %449 = vector.extract_strided_slice %12 {offsets = [0, 6, 0], sizes = [8, 1, 96], strides = [1, 1, 1]} : vector<8x8x96xf32> to vector<8x1x96xf32>
    %450 = vector.shape_cast %449 : vector<8x1x96xf32> to vector<8x96xf32>
    %cst_80 = arith.constant dense<0.000000e+00> : vector<8x96xf32>
    %451 = tpu.matmul %408, %13, %cst_80 {dimension_numbers = #tpu.dot_dimension_numbers<[1], [0], [0], [1], [0, 0, 1, 1], [], []>} : vector<8x32xf32>, vector<32x96xf32>, vector<8x96xf32> -> vector<8x96xf32>
    %452 = vector.broadcast %14 : vector<1x96xf32> to vector<8x96xf32>
    %453 = arith.addf %451, %452 : vector<8x96xf32>
    %454 = vector.extract_strided_slice %450 {offsets = [0, 0], sizes = [8, 32], strides = [1, 1]} : vector<8x96xf32> to vector<8x32xf32>
    %455 = vector.extract_strided_slice %453 {offsets = [0, 0], sizes = [8, 32], strides = [1, 1]} : vector<8x96xf32> to vector<8x32xf32>
    %456 = arith.addf %454, %455 : vector<8x32xf32>
    %457 = arith.negf %456 : vector<8x32xf32>
    %458 = math.exp %457 : vector<8x32xf32>
    %cst_81 = arith.constant 1.000000e+00 : f32
    %459 = vector.broadcast %cst_81 : f32 to vector<8x32xf32>
    %460 = arith.addf %459, %458 : vector<8x32xf32>
    %461 = arith.divf %459, %460 : vector<8x32xf32>
    %462 = vector.extract_strided_slice %450 {offsets = [0, 32], sizes = [8, 32], strides = [1, 1]} : vector<8x96xf32> to vector<8x32xf32>
    %463 = vector.extract_strided_slice %453 {offsets = [0, 32], sizes = [8, 32], strides = [1, 1]} : vector<8x96xf32> to vector<8x32xf32>
    %464 = arith.addf %462, %463 : vector<8x32xf32>
    %465 = arith.negf %464 : vector<8x32xf32>
    %466 = math.exp %465 : vector<8x32xf32>
    %cst_82 = arith.constant 1.000000e+00 : f32
    %467 = vector.broadcast %cst_82 : f32 to vector<8x32xf32>
    %468 = arith.addf %467, %466 : vector<8x32xf32>
    %469 = arith.divf %467, %468 : vector<8x32xf32>
    %470 = vector.extract_strided_slice %450 {offsets = [0, 64], sizes = [8, 32], strides = [1, 1]} : vector<8x96xf32> to vector<8x32xf32>
    %471 = vector.extract_strided_slice %453 {offsets = [0, 64], sizes = [8, 32], strides = [1, 1]} : vector<8x96xf32> to vector<8x32xf32>
    %472 = arith.mulf %461, %471 : vector<8x32xf32>
    %473 = arith.addf %470, %472 : vector<8x32xf32>
    %474 = math.tanh %473 : vector<8x32xf32>
    %cst_83 = arith.constant 1.000000e+00 : f32
    %475 = vector.broadcast %cst_83 : f32 to vector<8x32xf32>
    %476 = arith.subf %475, %469 : vector<8x32xf32>
    %477 = arith.mulf %476, %474 : vector<8x32xf32>
    %478 = arith.mulf %469, %408 : vector<8x32xf32>
    %479 = arith.addf %477, %478 : vector<8x32xf32>
    %cst_84 = arith.constant dense<0.000000e+00> : vector<8x96xf32>
    %480 = tpu.matmul %479, %15, %cst_84 {dimension_numbers = #tpu.dot_dimension_numbers<[1], [0], [0], [1], [0, 0, 1, 1], [], []>} : vector<8x32xf32>, vector<32x96xf32>, vector<8x96xf32> -> vector<8x96xf32>
    %481 = vector.broadcast %16 : vector<1x96xf32> to vector<8x96xf32>
    %482 = arith.addf %480, %481 : vector<8x96xf32>
    %cst_85 = arith.constant dense<0.000000e+00> : vector<8x96xf32>
    %483 = tpu.matmul %440, %17, %cst_85 {dimension_numbers = #tpu.dot_dimension_numbers<[1], [0], [0], [1], [0, 0, 1, 1], [], []>} : vector<8x32xf32>, vector<32x96xf32>, vector<8x96xf32> -> vector<8x96xf32>
    %484 = vector.broadcast %18 : vector<1x96xf32> to vector<8x96xf32>
    %485 = arith.addf %483, %484 : vector<8x96xf32>
    %486 = vector.extract_strided_slice %482 {offsets = [0, 0], sizes = [8, 32], strides = [1, 1]} : vector<8x96xf32> to vector<8x32xf32>
    %487 = vector.extract_strided_slice %485 {offsets = [0, 0], sizes = [8, 32], strides = [1, 1]} : vector<8x96xf32> to vector<8x32xf32>
    %488 = arith.addf %486, %487 : vector<8x32xf32>
    %489 = arith.negf %488 : vector<8x32xf32>
    %490 = math.exp %489 : vector<8x32xf32>
    %cst_86 = arith.constant 1.000000e+00 : f32
    %491 = vector.broadcast %cst_86 : f32 to vector<8x32xf32>
    %492 = arith.addf %491, %490 : vector<8x32xf32>
    %493 = arith.divf %491, %492 : vector<8x32xf32>
    %494 = vector.extract_strided_slice %482 {offsets = [0, 32], sizes = [8, 32], strides = [1, 1]} : vector<8x96xf32> to vector<8x32xf32>
    %495 = vector.extract_strided_slice %485 {offsets = [0, 32], sizes = [8, 32], strides = [1, 1]} : vector<8x96xf32> to vector<8x32xf32>
    %496 = arith.addf %494, %495 : vector<8x32xf32>
    %497 = arith.negf %496 : vector<8x32xf32>
    %498 = math.exp %497 : vector<8x32xf32>
    %cst_87 = arith.constant 1.000000e+00 : f32
    %499 = vector.broadcast %cst_87 : f32 to vector<8x32xf32>
    %500 = arith.addf %499, %498 : vector<8x32xf32>
    %501 = arith.divf %499, %500 : vector<8x32xf32>
    %502 = vector.extract_strided_slice %482 {offsets = [0, 64], sizes = [8, 32], strides = [1, 1]} : vector<8x96xf32> to vector<8x32xf32>
    %503 = vector.extract_strided_slice %485 {offsets = [0, 64], sizes = [8, 32], strides = [1, 1]} : vector<8x96xf32> to vector<8x32xf32>
    %504 = arith.mulf %493, %503 : vector<8x32xf32>
    %505 = arith.addf %502, %504 : vector<8x32xf32>
    %506 = math.tanh %505 : vector<8x32xf32>
    %cst_88 = arith.constant 1.000000e+00 : f32
    %507 = vector.broadcast %cst_88 : f32 to vector<8x32xf32>
    %508 = arith.subf %507, %501 : vector<8x32xf32>
    %509 = arith.mulf %508, %506 : vector<8x32xf32>
    %510 = arith.mulf %501, %440 : vector<8x32xf32>
    %511 = arith.addf %509, %510 : vector<8x32xf32>
    %c6_i32 = arith.constant 6 : i32
    %512 = vector.broadcast %c6_i32 : i32 to vector<8x8x1xi32>
    %513 = arith.cmpi eq, %22, %512 : vector<8x8x1xi32>
    %514 = vector.shape_cast %511 : vector<8x32xf32> to vector<8x1x32xf32>
    %515 = vector.shape_cast %513 : vector<8x8x1xi1> to vector<8x8x1xi1>
    %516 = vector.broadcast %515 : vector<8x8x1xi1> to vector<8x8x32xi1>
    %517 = vector.shape_cast %514 : vector<8x1x32xf32> to vector<8x1x32xf32>
    %518 = vector.broadcast %517 : vector<8x1x32xf32> to vector<8x8x32xf32>
    %519 = arith.select %516, %518, %448 : vector<8x8x32xi1>, vector<8x8x32xf32>
    %520 = vector.extract_strided_slice %12 {offsets = [0, 7, 0], sizes = [8, 1, 96], strides = [1, 1, 1]} : vector<8x8x96xf32> to vector<8x1x96xf32>
    %521 = vector.shape_cast %520 : vector<8x1x96xf32> to vector<8x96xf32>
    %cst_89 = arith.constant dense<0.000000e+00> : vector<8x96xf32>
    %522 = tpu.matmul %479, %13, %cst_89 {dimension_numbers = #tpu.dot_dimension_numbers<[1], [0], [0], [1], [0, 0, 1, 1], [], []>} : vector<8x32xf32>, vector<32x96xf32>, vector<8x96xf32> -> vector<8x96xf32>
    %523 = vector.broadcast %14 : vector<1x96xf32> to vector<8x96xf32>
    %524 = arith.addf %522, %523 : vector<8x96xf32>
    %525 = vector.extract_strided_slice %521 {offsets = [0, 0], sizes = [8, 32], strides = [1, 1]} : vector<8x96xf32> to vector<8x32xf32>
    %526 = vector.extract_strided_slice %524 {offsets = [0, 0], sizes = [8, 32], strides = [1, 1]} : vector<8x96xf32> to vector<8x32xf32>
    %527 = arith.addf %525, %526 : vector<8x32xf32>
    %528 = arith.negf %527 : vector<8x32xf32>
    %529 = math.exp %528 : vector<8x32xf32>
    %cst_90 = arith.constant 1.000000e+00 : f32
    %530 = vector.broadcast %cst_90 : f32 to vector<8x32xf32>
    %531 = arith.addf %530, %529 : vector<8x32xf32>
    %532 = arith.divf %530, %531 : vector<8x32xf32>
    %533 = vector.extract_strided_slice %521 {offsets = [0, 32], sizes = [8, 32], strides = [1, 1]} : vector<8x96xf32> to vector<8x32xf32>
    %534 = vector.extract_strided_slice %524 {offsets = [0, 32], sizes = [8, 32], strides = [1, 1]} : vector<8x96xf32> to vector<8x32xf32>
    %535 = arith.addf %533, %534 : vector<8x32xf32>
    %536 = arith.negf %535 : vector<8x32xf32>
    %537 = math.exp %536 : vector<8x32xf32>
    %cst_91 = arith.constant 1.000000e+00 : f32
    %538 = vector.broadcast %cst_91 : f32 to vector<8x32xf32>
    %539 = arith.addf %538, %537 : vector<8x32xf32>
    %540 = arith.divf %538, %539 : vector<8x32xf32>
    %541 = vector.extract_strided_slice %521 {offsets = [0, 64], sizes = [8, 32], strides = [1, 1]} : vector<8x96xf32> to vector<8x32xf32>
    %542 = vector.extract_strided_slice %524 {offsets = [0, 64], sizes = [8, 32], strides = [1, 1]} : vector<8x96xf32> to vector<8x32xf32>
    %543 = arith.mulf %532, %542 : vector<8x32xf32>
    %544 = arith.addf %541, %543 : vector<8x32xf32>
    %545 = math.tanh %544 : vector<8x32xf32>
    %cst_92 = arith.constant 1.000000e+00 : f32
    %546 = vector.broadcast %cst_92 : f32 to vector<8x32xf32>
    %547 = arith.subf %546, %540 : vector<8x32xf32>
    %548 = arith.mulf %547, %545 : vector<8x32xf32>
    %549 = arith.mulf %540, %479 : vector<8x32xf32>
    %550 = arith.addf %548, %549 : vector<8x32xf32>
    %cst_93 = arith.constant dense<0.000000e+00> : vector<8x96xf32>
    %551 = tpu.matmul %550, %15, %cst_93 {dimension_numbers = #tpu.dot_dimension_numbers<[1], [0], [0], [1], [0, 0, 1, 1], [], []>} : vector<8x32xf32>, vector<32x96xf32>, vector<8x96xf32> -> vector<8x96xf32>
    %552 = vector.broadcast %16 : vector<1x96xf32> to vector<8x96xf32>
    %553 = arith.addf %551, %552 : vector<8x96xf32>
    %cst_94 = arith.constant dense<0.000000e+00> : vector<8x96xf32>
    %554 = tpu.matmul %511, %17, %cst_94 {dimension_numbers = #tpu.dot_dimension_numbers<[1], [0], [0], [1], [0, 0, 1, 1], [], []>} : vector<8x32xf32>, vector<32x96xf32>, vector<8x96xf32> -> vector<8x96xf32>
    %555 = vector.broadcast %18 : vector<1x96xf32> to vector<8x96xf32>
    %556 = arith.addf %554, %555 : vector<8x96xf32>
    %557 = vector.extract_strided_slice %553 {offsets = [0, 0], sizes = [8, 32], strides = [1, 1]} : vector<8x96xf32> to vector<8x32xf32>
    %558 = vector.extract_strided_slice %556 {offsets = [0, 0], sizes = [8, 32], strides = [1, 1]} : vector<8x96xf32> to vector<8x32xf32>
    %559 = arith.addf %557, %558 : vector<8x32xf32>
    %560 = arith.negf %559 : vector<8x32xf32>
    %561 = math.exp %560 : vector<8x32xf32>
    %cst_95 = arith.constant 1.000000e+00 : f32
    %562 = vector.broadcast %cst_95 : f32 to vector<8x32xf32>
    %563 = arith.addf %562, %561 : vector<8x32xf32>
    %564 = arith.divf %562, %563 : vector<8x32xf32>
    %565 = vector.extract_strided_slice %553 {offsets = [0, 32], sizes = [8, 32], strides = [1, 1]} : vector<8x96xf32> to vector<8x32xf32>
    %566 = vector.extract_strided_slice %556 {offsets = [0, 32], sizes = [8, 32], strides = [1, 1]} : vector<8x96xf32> to vector<8x32xf32>
    %567 = arith.addf %565, %566 : vector<8x32xf32>
    %568 = arith.negf %567 : vector<8x32xf32>
    %569 = math.exp %568 : vector<8x32xf32>
    %cst_96 = arith.constant 1.000000e+00 : f32
    %570 = vector.broadcast %cst_96 : f32 to vector<8x32xf32>
    %571 = arith.addf %570, %569 : vector<8x32xf32>
    %572 = arith.divf %570, %571 : vector<8x32xf32>
    %573 = vector.extract_strided_slice %553 {offsets = [0, 64], sizes = [8, 32], strides = [1, 1]} : vector<8x96xf32> to vector<8x32xf32>
    %574 = vector.extract_strided_slice %556 {offsets = [0, 64], sizes = [8, 32], strides = [1, 1]} : vector<8x96xf32> to vector<8x32xf32>
    %575 = arith.mulf %564, %574 : vector<8x32xf32>
    %576 = arith.addf %573, %575 : vector<8x32xf32>
    %577 = math.tanh %576 : vector<8x32xf32>
    %cst_97 = arith.constant 1.000000e+00 : f32
    %578 = vector.broadcast %cst_97 : f32 to vector<8x32xf32>
    %579 = arith.subf %578, %572 : vector<8x32xf32>
    %580 = arith.mulf %579, %577 : vector<8x32xf32>
    %581 = arith.mulf %572, %511 : vector<8x32xf32>
    %582 = arith.addf %580, %581 : vector<8x32xf32>
    %c7_i32 = arith.constant 7 : i32
    %583 = vector.broadcast %c7_i32 : i32 to vector<8x8x1xi32>
    %584 = arith.cmpi eq, %22, %583 : vector<8x8x1xi32>
    %585 = vector.shape_cast %582 : vector<8x32xf32> to vector<8x1x32xf32>
    %586 = vector.shape_cast %584 : vector<8x8x1xi1> to vector<8x8x1xi1>
    %587 = vector.broadcast %586 : vector<8x8x1xi1> to vector<8x8x32xi1>
    %588 = vector.shape_cast %585 : vector<8x1x32xf32> to vector<8x1x32xf32>
    %589 = vector.broadcast %588 : vector<8x1x32xf32> to vector<8x8x32xf32>
    %590 = arith.select %587, %589, %519 : vector<8x8x32xi1>, vector<8x8x32xf32>
    %c0_98 = arith.constant 0 : index
    %c0_99 = arith.constant 0 : index
    %591 = vector.load %arg1[%c0_98, %c0_99] : memref<8x1xi32, #tpu.memory_space<vmem>>, vector<8x1xi32>
    %592 = vector.shape_cast %591 : vector<8x1xi32> to vector<8x1x1xi32>
    %593 = vector.broadcast %592 : vector<8x1x1xi32> to vector<8x8x1xi32>
    %594 = arith.cmpi slt, %22, %593 : vector<8x8x1xi32>
    %cst_100 = arith.constant 0.000000e+00 : f32
    %595 = vector.shape_cast %594 : vector<8x8x1xi1> to vector<8x8x1xi1>
    %596 = vector.broadcast %595 : vector<8x8x1xi1> to vector<8x8x32xi1>
    %597 = vector.broadcast %cst_100 : f32 to vector<8x8x32xf32>
    %598 = arith.select %596, %590, %597 : vector<8x8x32xi1>, vector<8x8x32xf32>
    %599 = vector.shape_cast %598 : vector<8x8x32xf32> to vector<64x32xf32>
    %c0_101 = arith.constant 0 : index
    %c0_102 = arith.constant 0 : index
    %600 = vector.load %arg13[%c0_101, %c0_102] : memref<32x96xf32, #tpu.memory_space<vmem>>, vector<32x96xf32>
    %cst_103 = arith.constant dense<0.000000e+00> : vector<64x96xf32>
    %601 = tpu.matmul %599, %600, %cst_103 {dimension_numbers = #tpu.dot_dimension_numbers<[1], [0], [0], [1], [0, 0, 1, 1], [], []>} : vector<64x32xf32>, vector<32x96xf32>, vector<64x96xf32> -> vector<64x96xf32>
    %c0_104 = arith.constant 0 : index
    %c0_105 = arith.constant 0 : index
    %602 = vector.load %arg14[%c0_104, %c0_105] : memref<1x96xf32, #tpu.memory_space<vmem>>, vector<1x96xf32>
    %603 = vector.broadcast %602 : vector<1x96xf32> to vector<64x96xf32>
    %604 = arith.addf %601, %603 : vector<64x96xf32>
    %605 = vector.extract_strided_slice %604 {offsets = [0, 0], sizes = [64, 32], strides = [1, 1]} : vector<64x96xf32> to vector<64x32xf32>
    %606 = vector.shape_cast %605 : vector<64x32xf32> to vector<8x8x32xf32>
    %607 = vector.extract_strided_slice %604 {offsets = [0, 32], sizes = [64, 32], strides = [1, 1]} : vector<64x96xf32> to vector<64x32xf32>
    %608 = vector.shape_cast %607 : vector<64x32xf32> to vector<8x8x32xf32>
    %609 = vector.extract_strided_slice %604 {offsets = [0, 64], sizes = [64, 32], strides = [1, 1]} : vector<64x96xf32> to vector<64x32xf32>
    %610 = vector.shape_cast %609 : vector<64x32xf32> to vector<8x8x32xf32>
    "tpu.trace_start"() <{level = 10 : i32, message = "bqd,bkd->bqk"}> : () -> ()
    %cst_106 = arith.constant dense<0.000000e+00> : vector<8x8x8xf32>
    %611 = tpu.matmul %606, %608, %cst_106 {dimension_numbers = #tpu.dot_dimension_numbers<[2], [2], [1], [1], [0, 0, 0, 1, 1, 1], [0], [0]>} : vector<8x8x32xf32>, vector<8x8x32xf32>, vector<8x8x8xf32> -> vector<8x8x8xf32>
    "tpu.trace_stop"() : () -> ()
    %cst_107 = arith.constant 0.176776692 : f32
    %612 = vector.broadcast %cst_107 : f32 to vector<8x8x8xf32>
    %613 = arith.mulf %611, %612 : vector<8x8x8xf32>
    %614 = tpu.iota {dimensions = array<i32: 1>} : vector<8x8x8xi32>
    %615 = tpu.iota {dimensions = array<i32: 2>} : vector<8x8x8xi32>
    %616 = arith.cmpi sle, %615, %614 : vector<8x8x8xi32>
    %617 = vector.shape_cast %591 : vector<8x1xi32> to vector<8x1x1xi32>
    %618 = vector.broadcast %617 : vector<8x1x1xi32> to vector<8x8x8xi32>
    %619 = arith.cmpi slt, %615, %618 : vector<8x8x8xi32>
    %620 = arith.andi %616, %619 : vector<8x8x8xi1>
    %cst_108 = arith.constant -1.000000e+09 : f32
    %621 = vector.broadcast %cst_108 : f32 to vector<8x8x8xf32>
    %622 = arith.select %620, %613, %621 : vector<8x8x8xi1>, vector<8x8x8xf32>
    %cst_109 = arith.constant dense<0xFF800000> : vector<8x8xf32>
    %623 = vector.multi_reduction <maximumf>, %622, %cst_109 [2] : vector<8x8x8xf32> to vector<8x8xf32>
    %624 = vector.shape_cast %623 : vector<8x8xf32> to vector<8x8x1xf32>
    %625 = vector.broadcast %624 : vector<8x8x1xf32> to vector<8x8x8xf32>
    %626 = arith.subf %622, %625 : vector<8x8x8xf32>
    %627 = math.exp %626 : vector<8x8x8xf32>
    %cst_110 = arith.constant dense<0.000000e+00> : vector<8x8xf32>
    %628 = vector.multi_reduction <add>, %627, %cst_110 [2] : vector<8x8x8xf32> to vector<8x8xf32>
    %629 = vector.shape_cast %628 : vector<8x8xf32> to vector<8x8x1xf32>
    %630 = tpu.reciprocal %629 {approx = true} : vector<8x8x1xf32> -> vector<8x8x1xf32>
    %631 = vector.broadcast %630 : vector<8x8x1xf32> to vector<8x8x8xf32>
    %632 = arith.mulf %627, %631 : vector<8x8x8xf32>
    "tpu.trace_start"() <{level = 10 : i32, message = "bqk,bkd->bqd"}> : () -> ()
    %cst_111 = arith.constant dense<0.000000e+00> : vector<8x8x32xf32>
    %633 = tpu.matmul %632, %610, %cst_111 {dimension_numbers = #tpu.dot_dimension_numbers<[2], [1], [1], [2], [0, 0, 0, 1, 1, 2], [0], [0]>} : vector<8x8x8xf32>, vector<8x8x32xf32>, vector<8x8x32xf32> -> vector<8x8x32xf32>
    "tpu.trace_stop"() : () -> ()
    %634 = vector.shape_cast %633 : vector<8x8x32xf32> to vector<64x32xf32>
    %c0_112 = arith.constant 0 : index
    %c0_113 = arith.constant 0 : index
    %635 = vector.load %arg15[%c0_112, %c0_113] : memref<32x32xf32, #tpu.memory_space<vmem>>, vector<32x32xf32>
    %cst_114 = arith.constant dense<0.000000e+00> : vector<64x32xf32>
    %636 = tpu.matmul %634, %635, %cst_114 {dimension_numbers = #tpu.dot_dimension_numbers<[1], [0], [0], [1], [0, 0, 1, 1], [], []>} : vector<64x32xf32>, vector<32x32xf32>, vector<64x32xf32> -> vector<64x32xf32>
    %c0_115 = arith.constant 0 : index
    %c0_116 = arith.constant 0 : index
    %637 = vector.load %arg16[%c0_115, %c0_116] : memref<1x32xf32, #tpu.memory_space<vmem>>, vector<1x32xf32>
    %638 = vector.broadcast %637 : vector<1x32xf32> to vector<64x32xf32>
    %639 = arith.addf %636, %638 : vector<64x32xf32>
    %640 = arith.addf %599, %639 : vector<64x32xf32>
    %c0_117 = arith.constant 0 : index
    %c0_118 = arith.constant 0 : index
    %641 = vector.load %arg17[%c0_117, %c0_118] : memref<32x32xf32, #tpu.memory_space<vmem>>, vector<32x32xf32>
    %cst_119 = arith.constant dense<0.000000e+00> : vector<64x32xf32>
    %642 = tpu.matmul %640, %641, %cst_119 {dimension_numbers = #tpu.dot_dimension_numbers<[1], [0], [0], [1], [0, 0, 1, 1], [], []>} : vector<64x32xf32>, vector<32x32xf32>, vector<64x32xf32> -> vector<64x32xf32>
    %c0_120 = arith.constant 0 : index
    %c0_121 = arith.constant 0 : index
    %643 = vector.load %arg18[%c0_120, %c0_121] : memref<1x32xf32, #tpu.memory_space<vmem>>, vector<1x32xf32>
    %644 = vector.broadcast %643 : vector<1x32xf32> to vector<64x32xf32>
    %645 = arith.addf %642, %644 : vector<64x32xf32>
    %cst_122 = arith.constant 0.000000e+00 : f32
    %646 = vector.broadcast %cst_122 : f32 to vector<64x32xf32>
    %647 = arith.maximumf %645, %646 : vector<64x32xf32>
    %c0_123 = arith.constant 0 : index
    %c0_124 = arith.constant 0 : index
    %648 = vector.load %arg19[%c0_123, %c0_124] : memref<32x128xf32, #tpu.memory_space<vmem>>, vector<32x128xf32>
    %cst_125 = arith.constant dense<0.000000e+00> : vector<64x128xf32>
    %649 = tpu.matmul %647, %648, %cst_125 {dimension_numbers = #tpu.dot_dimension_numbers<[1], [0], [0], [1], [0, 0, 1, 1], [], []>} : vector<64x32xf32>, vector<32x128xf32>, vector<64x128xf32> -> vector<64x128xf32>
    %c0_126 = arith.constant 0 : index
    %c0_127 = arith.constant 0 : index
    %650 = vector.load %arg20[%c0_126, %c0_127] : memref<1x128xf32, #tpu.memory_space<vmem>>, vector<1x128xf32>
    %651 = vector.broadcast %650 : vector<1x128xf32> to vector<64x128xf32>
    %652 = arith.addf %649, %651 : vector<64x128xf32>
    %653 = tpu.iota {dimensions = array<i32: 1>} : vector<64x128xi32>
    %c8_i32 = arith.constant 8 : i32
    %654 = vector.broadcast %c8_i32 : i32 to vector<64x128xi32>
    %655 = arith.cmpi slt, %653, %654 : vector<64x128xi32>
    %656 = arith.negf %652 : vector<64x128xf32>
    %657 = math.exp %656 : vector<64x128xf32>
    %cst_128 = arith.constant 1.000000e+00 : f32
    %658 = vector.broadcast %cst_128 : f32 to vector<64x128xf32>
    %659 = arith.addf %658, %657 : vector<64x128xf32>
    %660 = arith.divf %658, %659 : vector<64x128xf32>
    %c10_i32 = arith.constant 10 : i32
    %661 = vector.broadcast %c10_i32 : i32 to vector<64x128xi32>
    %662 = arith.cmpi slt, %653, %661 : vector<64x128xi32>
    %663 = math.tanh %652 : vector<64x128xf32>
    %cst_129 = arith.constant 0.000000e+00 : f32
    %664 = vector.broadcast %cst_129 : f32 to vector<64x128xf32>
    %665 = arith.select %662, %663, %664 : vector<64x128xi1>, vector<64x128xf32>
    %666 = arith.select %655, %660, %665 : vector<64x128xi1>, vector<64x128xf32>
    %667 = vector.shape_cast %666 : vector<64x128xf32> to vector<8x8x128xf32>
    %c0_130 = arith.constant 0 : index
    %c0_131 = arith.constant 0 : index
    %c0_132 = arith.constant 0 : index
    %668 = vector.load %arg21[%c0_130, %c0_131, %c0_132] : memref<8x8x128xf32, #tpu.memory_space<vmem>>, vector<8x8x128xf32>
    tpu.vector_store %arg21[%c0_130, %c0_131, %c0_132], %667 {strides = array<i32>} : memref<8x8x128xf32, #tpu.memory_space<vmem>>, vector<8x8x128xf32>,
    return
  }
  func.func @transform_0(%arg0: i32) -> (i32, i32) {
    %c0_i32 = arith.constant 0 : i32
    %c0_i32_0 = arith.constant 0 : i32
    return %arg0, %c0_i32 : i32, i32
  }
  func.func @transform_1(%arg0: i32) -> (i32, i32, i32) {
    %c0_i32 = arith.constant 0 : i32
    %c0_i32_0 = arith.constant 0 : i32
    %c0_i32_1 = arith.constant 0 : i32
    return %arg0, %c0_i32, %c0_i32_0 : i32, i32, i32
  }
  func.func @transform_2(%arg0: i32) -> (i32, i32) {
    %c0_i32 = arith.constant 0 : i32
    %c0_i32_0 = arith.constant 0 : i32
    %c0_i32_1 = arith.constant 0 : i32
    return %c0_i32, %c0_i32_0 : i32, i32
  }
  func.func @transform_3(%arg0: i32) -> (i32, i32) {
    %c0_i32 = arith.constant 0 : i32
    %c0_i32_0 = arith.constant 0 : i32
    %c0_i32_1 = arith.constant 0 : i32
    return %c0_i32, %c0_i32_0 : i32, i32
  }
  func.func @transform_4(%arg0: i32) -> (i32, i32) {
    %c0_i32 = arith.constant 0 : i32
    %c0_i32_0 = arith.constant 0 : i32
    %c0_i32_1 = arith.constant 0 : i32
    return %c0_i32, %c0_i32_0 : i32, i32
  }
  func.func @transform_5(%arg0: i32) -> (i32, i32) {
    %c0_i32 = arith.constant 0 : i32
    %c0_i32_0 = arith.constant 0 : i32
    %c0_i32_1 = arith.constant 0 : i32
    return %c0_i32, %c0_i32_0 : i32, i32
  }
  func.func @transform_6(%arg0: i32) -> (i32, i32) {
    %c0_i32 = arith.constant 0 : i32
    %c0_i32_0 = arith.constant 0 : i32
    %c0_i32_1 = arith.constant 0 : i32
    return %c0_i32, %c0_i32_0 : i32, i32
  }
  func.func @transform_7(%arg0: i32) -> (i32, i32) {
    %c0_i32 = arith.constant 0 : i32
    %c0_i32_0 = arith.constant 0 : i32
    %c0_i32_1 = arith.constant 0 : i32
    return %c0_i32, %c0_i32_0 : i32, i32
  }
  func.func @transform_8(%arg0: i32) -> (i32, i32) {
    %c0_i32 = arith.constant 0 : i32
    %c0_i32_0 = arith.constant 0 : i32
    %c0_i32_1 = arith.constant 0 : i32
    return %c0_i32, %c0_i32_0 : i32, i32
  }
  func.func @transform_9(%arg0: i32) -> (i32, i32) {
    %c0_i32 = arith.constant 0 : i32
    %c0_i32_0 = arith.constant 0 : i32
    %c0_i32_1 = arith.constant 0 : i32
    return %c0_i32, %c0_i32_0 : i32, i32
  }
  func.func @transform_10(%arg0: i32) -> (i32, i32) {
    %c0_i32 = arith.constant 0 : i32
    %c0_i32_0 = arith.constant 0 : i32
    %c0_i32_1 = arith.constant 0 : i32
    return %c0_i32, %c0_i32_0 : i32, i32
  }
  func.func @transform_11(%arg0: i32) -> (i32, i32) {
    %c0_i32 = arith.constant 0 : i32
    %c0_i32_0 = arith.constant 0 : i32
    %c0_i32_1 = arith.constant 0 : i32
    return %c0_i32, %c0_i32_0 : i32, i32
  }
  func.func @transform_12(%arg0: i32) -> (i32, i32) {
    %c0_i32 = arith.constant 0 : i32
    %c0_i32_0 = arith.constant 0 : i32
    %c0_i32_1 = arith.constant 0 : i32
    return %c0_i32, %c0_i32_0 : i32, i32
  }
  func.func @transform_13(%arg0: i32) -> (i32, i32) {
    %c0_i32 = arith.constant 0 : i32
    %c0_i32_0 = arith.constant 0 : i32
    %c0_i32_1 = arith.constant 0 : i32
    return %c0_i32, %c0_i32_0 : i32, i32
  }
  func.func @transform_14(%arg0: i32) -> (i32, i32) {
    %c0_i32 = arith.constant 0 : i32
    %c0_i32_0 = arith.constant 0 : i32
    %c0_i32_1 = arith.constant 0 : i32
    return %c0_i32, %c0_i32_0 : i32, i32
  }
  func.func @transform_15(%arg0: i32) -> (i32, i32) {
    %c0_i32 = arith.constant 0 : i32
    %c0_i32_0 = arith.constant 0 : i32
    %c0_i32_1 = arith.constant 0 : i32
    return %c0_i32, %c0_i32_0 : i32, i32
  }
  func.func @transform_16(%arg0: i32) -> (i32, i32) {
    %c0_i32 = arith.constant 0 : i32
    %c0_i32_0 = arith.constant 0 : i32
    %c0_i32_1 = arith.constant 0 : i32
    return %c0_i32, %c0_i32_0 : i32, i32
  }
  func.func @transform_17(%arg0: i32) -> (i32, i32) {
    %c0_i32 = arith.constant 0 : i32
    %c0_i32_0 = arith.constant 0 : i32
    %c0_i32_1 = arith.constant 0 : i32
    return %c0_i32, %c0_i32_0 : i32, i32
  }
  func.func @transform_18(%arg0: i32) -> (i32, i32) {
    %c0_i32 = arith.constant 0 : i32
    %c0_i32_0 = arith.constant 0 : i32
    %c0_i32_1 = arith.constant 0 : i32
    return %c0_i32, %c0_i32_0 : i32, i32
  }
  func.func @transform_19(%arg0: i32) -> (i32, i32) {
    %c0_i32 = arith.constant 0 : i32
    %c0_i32_0 = arith.constant 0 : i32
    %c0_i32_1 = arith.constant 0 : i32
    return %c0_i32, %c0_i32_0 : i32, i32
  }
  func.func @transform_20(%arg0: i32) -> (i32, i32, i32) {
    %c0_i32 = arith.constant 0 : i32
    %c0_i32_0 = arith.constant 0 : i32
    %c0_i32_1 = arith.constant 0 : i32
    return %arg0, %c0_i32, %c0_i32_0 : i32, i32, i32
  }
}

</mosaic_0001>

<llo_original>
// kernel: tpu_custom_call.1
$region0: #{tpu_custom_call.1}
  #allocation0 [shape = 'u32[]', space=smem, size = 0x4, offset = 0x4, fixed_abs, tag = 'smem constant byte address 0x4 - core index']
  #allocation1 [shape = 'u32[72,128]{1,0:T(1,128)}', space=vmem, size = 0x9000, scoped, tag = 'internal scratch']
  %s0 = inlined_call_operand.vmem [shape: s32[8,1], index: 0, kind: input, shape index: {}]
  %s1 = inlined_call_operand.hbm [shape: f32[8,8,32], index: 1, kind: input, shape index: {}]
  %s2 = inlined_call_operand.hbm [shape: f32[32,32], index: 2, kind: input, shape index: {}]
  %s3 = inlined_call_operand.vmem [shape: f32[1,32], index: 3, kind: input, shape index: {}]
  %s4 = inlined_call_operand.hbm [shape: f32[32,96], index: 4, kind: input, shape index: {}]
  %s5 = inlined_call_operand.hbm [shape: f32[32,96], index: 5, kind: input, shape index: {}]
  %s6 = inlined_call_operand.vmem [shape: f32[1,96], index: 6, kind: input, shape index: {}]
  %s7 = inlined_call_operand.vmem [shape: f32[1,96], index: 7, kind: input, shape index: {}]
  %s8 = inlined_call_operand.hbm [shape: f32[32,96], index: 8, kind: input, shape index: {}]
  %s9 = inlined_call_operand.hbm [shape: f32[32,96], index: 9, kind: input, shape index: {}]
  %s10 = inlined_call_operand.vmem [shape: f32[1,96], index: 10, kind: input, shape index: {}]
  %s11 = inlined_call_operand.vmem [shape: f32[1,96], index: 11, kind: input, shape index: {}]
  %s12 = inlined_call_operand.hbm [shape: f32[32,96], index: 12, kind: input, shape index: {}]
  %s13 = inlined_call_operand.vmem [shape: f32[1,96], index: 13, kind: input, shape index: {}]
  %s14 = inlined_call_operand.hbm [shape: f32[32,32], index: 14, kind: input, shape index: {}]
  %s15 = inlined_call_operand.vmem [shape: f32[1,32], index: 15, kind: input, shape index: {}]
  %s16 = inlined_call_operand.hbm [shape: f32[32,32], index: 16, kind: input, shape index: {}]
  %s17 = inlined_call_operand.vmem [shape: f32[1,32], index: 17, kind: input, shape index: {}]
  %s18 = inlined_call_operand.hbm [shape: f32[32,128], index: 18, kind: input, shape index: {}]
  %s19 = inlined_call_operand.vmem [shape: f32[1,128], index: 19, kind: input, shape index: {}]
  %s20 = inlined_call_operand.hbm [shape: f32[8,8,128], index: 20, kind: output, shape index: {}]
  %s21 = sld [smem:[#allocation0]]
  $region130: #{tpu_custom_call.1} parent=0
    _
  %s23 = ssub.s32 1, %s21
  %s24 = scalar_select 0, %s23, %s21
  $region1: #{tpu_custom_call.1} parent=0
    #allocation2 [shape = 'u8[32768]{0}', space=vmem, size = 0x8000, scoped, tag = 'input window, operand 1, single buffered']
    #allocation3 [shape = 's32[1]{0}', space=sflag, size = 0x4, scoped, tag = 'scoped memory for tpu_custom_call.1']
    #allocation4 [shape = 's32[1]{0}', space=sflag, size = 0x4, scoped, tag = 'scoped memory for tpu_custom_call.1']
    #allocation5 [shape = 'u8[16384]{0}', space=vmem, size = 0x4000, scoped, tag = 'input window, operand 2, single buffered']
    #allocation6 [shape = 's32[1]{0}', space=sflag, size = 0x4, scoped, tag = 'scoped memory for tpu_custom_call.1']
    #allocation7 [shape = 'u8[16384]{0}', space=vmem, size = 0x4000, scoped, tag = 'input window, operand 4, single buffered']
    #allocation8 [shape = 'u8[16384]{0}', space=vmem, size = 0x4000, scoped, tag = 'input window, operand 5, single buffered']
    #allocation9 [shape = 's32[1]{0}', space=sflag, size = 0x4, scoped, tag = 'scoped memory for tpu_custom_call.1']
    #allocation10 [shape = 'u8[16384]{0}', space=vmem, size = 0x4000, scoped, tag = 'input window, operand 8, single buffered']
    #allocation11 [shape = 'u8[16384]{0}', space=vmem, size = 0x4000, scoped, tag = 'input window, operand 9, single buffered']
    #allocation12 [shape = 's32[1]{0}', space=sflag, size = 0x4, scoped, tag = 'scoped memory for tpu_custom_call.1']
    #allocation13 [shape = 'u8[16384]{0}', space=vmem, size = 0x4000, scoped, tag = 'input window, operand 12, single buffered']
    #allocation14 [shape = 'u8[16384]{0}', space=vmem, size = 0x4000, scoped, tag = 'input window, operand 14, single buffered']
    #allocation15 [shape = 's32[1]{0}', space=sflag, size = 0x4, scoped, tag = 'scoped memory for tpu_custom_call.1']
    #allocation16 [shape = 'u8[16384]{0}', space=vmem, size = 0x4000, scoped, tag = 'input window, operand 16, single buffered']
    #allocation17 [shape = 'u8[16384]{0}', space=vmem, size = 0x4000, scoped, tag = 'input window, operand 18, single buffered']
    #allocation18 [shape = 's32[1]{0}', space=sflag, size = 0x4, scoped, tag = 'scoped memory for tpu_custom_call.1']
    #allocation19 [shape = 'u8[32768]{0}', space=vmem, size = 0x8000, scoped, tag = 'output window, operand 0, single buffered']
    %25 = vsyncpa [#allocation3], 0
    %26 = vsyncpa [#allocation6], 0
    %27 = vsyncpa [#allocation9], 0
    %28 = vsyncpa [#allocation12], 0
    %29 = vsyncpa [#allocation15], 0
    %30 = vsyncpa [#allocation18], 0
    %31 = vsyncpa [#allocation4], 0
    // Predicated region
    $region2: #{tpu_custom_call.1} parent=1 // pred_check
      _
    $region3: #{tpu_custom_call.1} parent=1 // pred_check_branch
      %33 = sbr.rel (0) target = $region5
    $region4: #{tpu_custom_call.1} parent=1 // pred_region
      _
    $region5: #{tpu_custom_call.1} parent=1 // pred_fallthru
      _
    // Predicated region
    $region6: #{tpu_custom_call.1} parent=1 // pred_check
      _
    $region7: #{tpu_custom_call.1} parent=1 // pred_check_branch
      %35 = sbr.rel (0) target = $region9
    $region8: #{tpu_custom_call.1} parent=1 // pred_region
      %37 = vsyncadd [#allocation3], 0
      %s38 = sshll.u32 %s1, 4
      %s39 = int_to_ptr.hbm [resolvable:$true] %s38
      %s40 = sshll.u32 [#allocation2], 4
      %s41 = int_to_ptr.vmem [resolvable:$true] %s40
      %46 = dma.hbm_to_vmem [thread:$0]  %s39, 1024, %s41, [#allocation3], 128, 128, 8
    $region9: #{tpu_custom_call.1} parent=1 // pred_fallthru
      _
    // Predicated region
    $region10: #{tpu_custom_call.1} parent=1 // pred_check
      _
    $region11: #{tpu_custom_call.1} parent=1 // pred_check_branch
      %48 = sbr.rel (0) target = $region13
    $region12: #{tpu_custom_call.1} parent=1 // pred_region
      %50 = vsyncadd [#allocation6], 0
      %s51 = sshll.u32 %s2, 4
      %s52 = int_to_ptr.hbm [resolvable:$true] %s51
      %s53 = sshll.u32 [#allocation5], 4
      %s54 = int_to_ptr.vmem [resolvable:$true] %s53
      %59 = dma.hbm_to_vmem [thread:$0]  %s52, 512, %s54, [#allocation6], 128, 128, 8
    $region13: #{tpu_custom_call.1} parent=1 // pred_fallthru
      _
    // Predicated region
    $region14: #{tpu_custom_call.1} parent=1 // pred_check
      _
    $region15: #{tpu_custom_call.1} parent=1 // pred_check_branch
      %61 = sbr.rel (0) target = $region17
    $region16: #{tpu_custom_call.1} parent=1 // pred_region
      _
    $region17: #{tpu_custom_call.1} parent=1 // pred_fallthru
      _
    // Predicated region
    $region18: #{tpu_custom_call.1} parent=1 // pred_check
      _
    $region19: #{tpu_custom_call.1} parent=1 // pred_check_branch
      %63 = sbr.rel (0) target = $region21
    $region20: #{tpu_custom_call.1} parent=1 // pred_region
      %65 = vsyncadd [#allocation6], 0
      %s66 = sshll.u32 %s4, 4
      %s67 = int_to_ptr.hbm [resolvable:$true] %s66
      %s68 = sshll.u32 [#allocation7], 4
      %s69 = int_to_ptr.vmem [resolvable:$true] %s68
      %74 = dma.hbm_to_vmem [thread:$0]  %s67, 512, %s69, [#allocation6], 128, 128, 8
    $region21: #{tpu_custom_call.1} parent=1 // pred_fallthru
      _
    // Predicated region
    $region22: #{tpu_custom_call.1} parent=1 // pred_check
      _
    $region23: #{tpu_custom_call.1} parent=1 // pred_check_branch
      %76 = sbr.rel (0) target = $region25
    $region24: #{tpu_custom_call.1} parent=1 // pred_region
      %78 = vsyncadd [#allocation9], 0
      %s79 = sshll.u32 %s5, 4
      %s80 = int_to_ptr.hbm [resolvable:$true] %s79
      %s81 = sshll.u32 [#allocation8], 4
      %s82 = int_to_ptr.vmem [resolvable:$true] %s81
      %87 = dma.hbm_to_vmem [thread:$0]  %s80, 512, %s82, [#allocation9], 128, 128, 8
    $region25: #{tpu_custom_call.1} parent=1 // pred_fallthru
      _
    // Predicated region
    $region26: #{tpu_custom_call.1} parent=1 // pred_check
      _
    $region27: #{tpu_custom_call.1} parent=1 // pred_check_branch
      %89 = sbr.rel (0) target = $region29
    $region28: #{tpu_custom_call.1} parent=1 // pred_region
      _
    $region29: #{tpu_custom_call.1} parent=1 // pred_fallthru
      _
    // Predicated region
    $region30: #{tpu_custom_call.1} parent=1 // pred_check
      _
    $region31: #{tpu_custom_call.1} parent=1 // pred_check_branch
      %91 = sbr.rel (0) target = $region33
    $region32: #{tpu_custom_call.1} parent=1 // pred_region
      _
    $region33: #{tpu_custom_call.1} parent=1 // pred_fallthru
      _
    // Predicated region
    $region34: #{tpu_custom_call.1} parent=1 // pred_check
      _
    $region35: #{tpu_custom_call.1} parent=1 // pred_check_branch
      %93 = sbr.rel (0) target = $region37
    $region36: #{tpu_custom_call.1} parent=1 // pred_region
      %95 = vsyncadd [#allocation9], 0
      %s96 = sshll.u32 %s8, 4
      %s97 = int_to_ptr.hbm [resolvable:$true] %s96
      %s98 = sshll.u32 [#allocation10], 4
      %s99 = int_to_ptr.vmem [resolvable:$true] %s98
      %104 = dma.hbm_to_vmem [thread:$0]  %s97, 512, %s99, [#allocation9], 128, 128, 8
    $region37: #{tpu_custom_call.1} parent=1 // pred_fallthru
      _
    // Predicated region
    $region38: #{tpu_custom_call.1} parent=1 // pred_check
      _
    $region39: #{tpu_custom_call.1} parent=1 // pred_check_branch
      %106 = sbr.rel (0) target = $region41
    $region40: #{tpu_custom_call.1} parent=1 // pred_region
      %108 = vsyncadd [#allocation12], 0
      %s109 = sshll.u32 %s9, 4
      %s110 = int_to_ptr.hbm [resolvable:$true] %s109
      %s111 = sshll.u32 [#allocation11], 4
      %s112 = int_to_ptr.vmem [resolvable:$true] %s111
      %117 = dma.hbm_to_vmem [thread:$0]  %s110, 512, %s112, [#allocation12], 128, 128, 8
    $region41: #{tpu_custom_call.1} parent=1 // pred_fallthru
      _
    // Predicated region
    $region42: #{tpu_custom_call.1} parent=1 // pred_check
      _
    $region43: #{tpu_custom_call.1} parent=1 // pred_check_branch
      %119 = sbr.rel (0) target = $region45
    $region44: #{tpu_custom_call.1} parent=1 // pred_region
      _
    $region45: #{tpu_custom_call.1} parent=1 // pred_fallthru
      _
    // Predicated region
    $region46: #{tpu_custom_call.1} parent=1 // pred_check
      _
    $region47: #{tpu_custom_call.1} parent=1 // pred_check_branch
      %121 = sbr.rel (0) target = $region49
    $region48: #{tpu_custom_call.1} parent=1 // pred_region
      _
    $region49: #{tpu_custom_call.1} parent=1 // pred_fallthru
      _
    // Predicated region
    $region50: #{tpu_custom_call.1} parent=1 // pred_check
      _
    $region51: #{tpu_custom_call.1} parent=1 // pred_check_branch
      %123 = sbr.rel (0) target = $region53
    $region52: #{tpu_custom_call.1} parent=1 // pred_region
      %125 = vsyncadd [#allocation12], 0
      %s126 = sshll.u32 %s12, 4
      %s127 = int_to_ptr.hbm [resolvable:$true] %s126
      %s128 = sshll.u32 [#allocation13], 4
      %s129 = int_to_ptr.vmem [resolvable:$true] %s128
      %134 = dma.hbm_to_vmem [thread:$0]  %s127, 512, %s129, [#allocation12], 128, 128, 8
    $region53: #{tpu_custom_call.1} parent=1 // pred_fallthru
      _
    // Predicated region
    $region54: #{tpu_custom_call.1} parent=1 // pred_check
      _
    $region55: #{tpu_custom_call.1} parent=1 // pred_check_branch
      %136 = sbr.rel (0) target = $region57
    $region56: #{tpu_custom_call.1} parent=1 // pred_region
      _
    $region57: #{tpu_custom_call.1} parent=1 // pred_fallthru
      _
    // Predicated region
    $region58: #{tpu_custom_call.1} parent=1 // pred_check
      _
    $region59: #{tpu_custom_call.1} parent=1 // pred_check_branch
      %138 = sbr.rel (0) target = $region61
    $region60: #{tpu_custom_call.1} parent=1 // pred_region
      %140 = vsyncadd [#allocation15], 0
      %s141 = sshll.u32 %s14, 4
      %s142 = int_to_ptr.hbm [resolvable:$true] %s141
      %s143 = sshll.u32 [#allocation14], 4
      %s144 = int_to_ptr.vmem [resolvable:$true] %s143
      %149 = dma.hbm_to_vmem [thread:$0]  %s142, 512, %s144, [#allocation15], 128, 128, 8
    $region61: #{tpu_custom_call.1} parent=1 // pred_fallthru
      _
    // Predicated region
    $region62: #{tpu_custom_call.1} parent=1 // pred_check
      _
    $region63: #{tpu_custom_call.1} parent=1 // pred_check_branch
      %151 = sbr.rel (0) target = $region65
    $region64: #{tpu_custom_call.1} parent=1 // pred_region
      _
    $region65: #{tpu_custom_call.1} parent=1 // pred_fallthru
      _
    // Predicated region
    $region66: #{tpu_custom_call.1} parent=1 // pred_check
      _
    $region67: #{tpu_custom_call.1} parent=1 // pred_check_branch
      %153 = sbr.rel (0) target = $region69
    $region68: #{tpu_custom_call.1} parent=1 // pred_region
      %155 = vsyncadd [#allocation15], 0
      %s156 = sshll.u32 %s16, 4
      %s157 = int_to_ptr.hbm [resolvable:$true] %s156
      %s158 = sshll.u32 [#allocation16], 4
      %s159 = int_to_ptr.vmem [resolvable:$true] %s158
      %164 = dma.hbm_to_vmem [thread:$0]  %s157, 512, %s159, [#allocation15], 128, 128, 8
    $region69: #{tpu_custom_call.1} parent=1 // pred_fallthru
      _
    // Predicated region
    $region70: #{tpu_custom_call.1} parent=1 // pred_check
      _
    $region71: #{tpu_custom_call.1} parent=1 // pred_check_branch
      %166 = sbr.rel (0) target = $region73
    $region72: #{tpu_custom_call.1} parent=1 // pred_region
      _
    $region73: #{tpu_custom_call.1} parent=1 // pred_fallthru
      _
    // Predicated region
    $region74: #{tpu_custom_call.1} parent=1 // pred_check
      _
    $region75: #{tpu_custom_call.1} parent=1 // pred_check_branch
      %168 = sbr.rel (0) target = $region77
    $region76: #{tpu_custom_call.1} parent=1 // pred_region
      %170 = vsyncadd [#allocation18], 0
      %s171 = sshll.u32 %s18, 4
      %s172 = int_to_ptr.hbm [resolvable:$true] %s171
      %s173 = sshll.u32 [#allocation17], 4
      %s174 = int_to_ptr.vmem [resolvable:$true] %s173
      %179 = dma.hbm_to_vmem [thread:$0]  %s172, 512, %s174, [#allocation18], 128, 128, 8
    $region77: #{tpu_custom_call.1} parent=1 // pred_fallthru
      _
    // Predicated region
    $region78: #{tpu_custom_call.1} parent=1 // pred_check
      _
    $region79: #{tpu_custom_call.1} parent=1 // pred_check_branch
      %181 = sbr.rel (0) target = $region81
    $region80: #{tpu_custom_call.1} parent=1 // pred_region
      _
    $region81: #{tpu_custom_call.1} parent=1 // pred_fallthru
      _
    // Predicated region
    $region82: #{tpu_custom_call.1} parent=1 // pred_check
      _
    $region83: #{tpu_custom_call.1} parent=1 // pred_check_branch
      %183 = sbr.rel (0) target = $region85
    $region84: #{tpu_custom_call.1} parent=1 // pred_region
      %185 = dma.done [#allocation3], 1024
    $region85: #{tpu_custom_call.1} parent=1 // pred_fallthru
      _
    // Predicated region
    $region86: #{tpu_custom_call.1} parent=1 // pred_check
      _
    $region87: #{tpu_custom_call.1} parent=1 // pred_check_branch
      %187 = sbr.rel (0) target = $region89
    $region88: #{tpu_custom_call.1} parent=1 // pred_region
      %189 = dma.done [#allocation6], 512
    $region89: #{tpu_custom_call.1} parent=1 // pred_fallthru
      _
    // Predicated region
    $region90: #{tpu_custom_call.1} parent=1 // pred_check
      _
    $region91: #{tpu_custom_call.1} parent=1 // pred_check_branch
      %191 = sbr.rel (0) target = $region93
    $region92: #{tpu_custom_call.1} parent=1 // pred_region
      %193 = dma.done [#allocation6], 512
    $region93: #{tpu_custom_call.1} parent=1 // pred_fallthru
      _
    // Predicated region
    $region94: #{tpu_custom_call.1} parent=1 // pred_check
      _
    $region95: #{tpu_custom_call.1} parent=1 // pred_check_branch
      %195 = sbr.rel (0) target = $region97
    $region96: #{tpu_custom_call.1} parent=1 // pred_region
      %197 = dma.done [#allocation9], 512
    $region97: #{tpu_custom_call.1} parent=1 // pred_fallthru
      _
    // Predicated region
    $region98: #{tpu_custom_call.1} parent=1 // pred_check
      _
    $region99: #{tpu_custom_call.1} parent=1 // pred_check_branch
      %199 = sbr.rel (0) target = $region101
    $region100: #{tpu_custom_call.1} parent=1 // pred_region
      %201 = dma.done [#allocation9], 512
    $region101: #{tpu_custom_call.1} parent=1 // pred_fallthru
      _
    // Predicated region
    $region102: #{tpu_custom_call.1} parent=1 // pred_check
      _
    $region103: #{tpu_custom_call.1} parent=1 // pred_check_branch
      %203 = sbr.rel (0) target = $region105
    $region104: #{tpu_custom_call.1} parent=1 // pred_region
      %205 = dma.done [#allocation12], 512
    $region105: #{tpu_custom_call.1} parent=1 // pred_fallthru
      _
    // Predicated region
    $region106: #{tpu_custom_call.1} parent=1 // pred_check
      _
    $region107: #{tpu_custom_call.1} parent=1 // pred_check_branch
      %207 = sbr.rel (0) target = $region109
    $region108: #{tpu_custom_call.1} parent=1 // pred_region
      %209 = dma.done [#allocation12], 512
    $region109: #{tpu_custom_call.1} parent=1 // pred_fallthru
      _
    // Predicated region
    $region110: #{tpu_custom_call.1} parent=1 // pred_check
      _
    $region111: #{tpu_custom_call.1} parent=1 // pred_check_branch
      %211 = sbr.rel (0) target = $region113
    $region112: #{tpu_custom_call.1} parent=1 // pred_region
      %213 = dma.done [#allocation15], 512
    $region113: #{tpu_custom_call.1} parent=1 // pred_fallthru
      _
    // Predicated region
    $region114: #{tpu_custom_call.1} parent=1 // pred_check
      _
    $region115: #{tpu_custom_call.1} parent=1 // pred_check_branch
      %215 = sbr.rel (0) target = $region117
    $region116: #{tpu_custom_call.1} parent=1 // pred_region
      %217 = dma.done [#allocation15], 512
    $region117: #{tpu_custom_call.1} parent=1 // pred_fallthru
      _
    // Predicated region
    $region118: #{tpu_custom_call.1} parent=1 // pred_check
      _
    $region119: #{tpu_custom_call.1} parent=1 // pred_check_branch
      %219 = sbr.rel (0) target = $region121
    $region120: #{tpu_custom_call.1} parent=1 // pred_region
      %221 = dma.done [#allocation18], 512
    $region121: #{tpu_custom_call.1} parent=1 // pred_fallthru
      _
    %v222 = vld [vmem:[#allocation2] sm:$0xff]
    %v223 = vld [vmem:[#allocation2 + $0x8] sm:$0xff]
    %v224 = vld [vmem:[#allocation2 + $0x10] sm:$0xff]
    %v225 = vld [vmem:[#allocation2 + $0x18] sm:$0xff]
    %v226 = vld [vmem:[#allocation2 + $0x20] sm:$0xff]
    %v227 = vld [vmem:[#allocation2 + $0x28] sm:$0xff]
    %v228 = vld [vmem:[#allocation2 + $0x30] sm:$0xff]
    %v229 = vld [vmem:[#allocation2 + $0x38] sm:$0xff]
    %v230 = vld [vmem:[#allocation5] sm:$0xff]
    %v231 = vld [vmem:[#allocation5 + $0x8] sm:$0xff]
    %v232 = vld [vmem:[#allocation5 + $0x10] sm:$0xff]
    %v233 = vld [vmem:[#allocation5 + $0x18] sm:$0xff]
    %v234 = vld [vmem:[%s3] sm:$0x1]
    %v236 = vperm.slane %v234, 0
    %vm238 = vcmask 261120
    %v240 = vsel %vm238, %v222, 0
    %v243 = vsel %vm238, %v223, 0
    %v246 = vsel %vm238, %v224, 0
    %v249 = vsel %vm238, %v225, 0
    %v252 = vsel %vm238, %v226, 0
    %v255 = vsel %vm238, %v227, 0
    %v258 = vsel %vm238, %v228, 0
    %v261 = vsel %vm238, %v229, 0
    %263 = vmatpush.msra.mxu0 0.0
    %264 = vmatpush.msra.mxu0 0.0
    %265 = vmatpush.msra.mxu0 0.0
    %266 = vmatpush.msra.mxu0 0.0
    %267 = vmatpush.msra.mxu0 0.0
    %268 = vmatpush.msra.mxu0 0.0
    %269 = vmatpush.msra.mxu0 0.0
    %270 = vmatpush.msra.mxu0 0.0
    %271 = vmatpush.msra.mxu0 0.0
    %272 = vmatpush.msra.mxu0 0.0
    %273 = vmatpush.msra.mxu0 0.0
    %274 = vmatpush.msra.mxu0 0.0
    %275 = vmatpush.msra.mxu0 %v233
    %276 = vmatpush.msra.mxu0 %v232
    %277 = vmatpush.msra.mxu0 %v231
    %278 = vmatpush.msra.mxu0 %v230
    %279 = vmatmul.f32.gmra.mxu0 %v240
    %v280 = vpop.f32.mrf.mxu0
    %v281 = vadd.f32 %v236, %v280
    %282 = vmatmul.f32.gmra.mxu0 %v243
    %v283 = vpop.f32.mrf.mxu0
    %v284 = vadd.f32 %v236, %v283
    %285 = vmatmul.f32.gmra.mxu0 %v246
    %v286 = vpop.f32.mrf.mxu0
    %v287 = vadd.f32 %v236, %v286
    %288 = vmatmul.f32.gmra.mxu0 %v249
    %v289 = vpop.f32.mrf.mxu0
    %v290 = vadd.f32 %v236, %v289
    %291 = vmatmul.f32.gmra.mxu0 %v252
    %v292 = vpop.f32.mrf.mxu0
    %v293 = vadd.f32 %v236, %v292
    %294 = vmatmul.f32.gmra.mxu0 %v255
    %v295 = vpop.f32.mrf.mxu0
    %v296 = vadd.f32 %v236, %v295
    %297 = vmatmul.f32.gmra.mxu0 %v258
    %v298 = vpop.f32.mrf.mxu0
    %v299 = vadd.f32 %v236, %v298
    %300 = vmatmul.f32.gmra.mxu0 %v261
    %v301 = vpop.f32.mrf.mxu0
    %v302 = vadd.f32 %v236, %v301
    %303 = vdwg.mxu0
    %v304 = vld [vmem:[#allocation7] sm:$0xff]
    %v305 = vld [vmem:[#allocation7 + $0x8] sm:$0xff]
    %v306 = vld [vmem:[#allocation7 + $0x10] sm:$0xff]
    %v307 = vld [vmem:[#allocation7 + $0x18] sm:$0xff]
    %v308 = vld [vmem:[%s6] sm:$0x1]
    %v310 = vperm.slane %v308, 0
    %v313 = vsel %vm238, %v281, 0
    %v316 = vsel %vm238, %v284, 0
    %v319 = vsel %vm238, %v287, 0
    %v322 = vsel %vm238, %v290, 0
    %v325 = vsel %vm238, %v293, 0
    %v328 = vsel %vm238, %v296, 0
    %v331 = vsel %vm238, %v299, 0
    %v334 = vsel %vm238, %v302, 0
    %336 = vmatpush.msra.mxu0 0.0
    %337 = vmatpush.msra.mxu0 0.0
    %338 = vmatpush.msra.mxu0 0.0
    %339 = vmatpush.msra.mxu0 0.0
    %340 = vmatpush.msra.mxu0 0.0
    %341 = vmatpush.msra.mxu0 0.0
    %342 = vmatpush.msra.mxu0 0.0
    %343 = vmatpush.msra.mxu0 0.0
    %344 = vmatpush.msra.mxu0 0.0
    %345 = vmatpush.msra.mxu0 0.0
    %346 = vmatpush.msra.mxu0 0.0
    %347 = vmatpush.msra.mxu0 0.0
    %348 = vmatpush.msra.mxu0 %v307
    %349 = vmatpush.msra.mxu0 %v306
    %350 = vmatpush.msra.mxu0 %v305
    %351 = vmatpush.msra.mxu0 %v304
    %352 = vmatmul.f32.gmra.mxu0 %v313
    %v353 = vpop.f32.mrf.mxu0
    %v354 = vadd.f32 %v310, %v353
    %355 = vmatmul.f32.gmra.mxu0 %v316
    %v356 = vpop.f32.mrf.mxu0
    %v357 = vadd.f32 %v310, %v356
    %358 = vmatmul.f32.gmra.mxu0 %v319
    %v359 = vpop.f32.mrf.mxu0
    %v360 = vadd.f32 %v310, %v359
    %361 = vmatmul.f32.gmra.mxu0 %v322
    %v362 = vpop.f32.mrf.mxu0
    %v363 = vadd.f32 %v310, %v362
    %364 = vmatmul.f32.gmra.mxu0 %v325
    %v365 = vpop.f32.mrf.mxu0
    %v366 = vadd.f32 %v310, %v365
    %367 = vmatmul.f32.gmra.mxu0 %v328
    %v368 = vpop.f32.mrf.mxu0
    %v369 = vadd.f32 %v310, %v368
    %370 = vmatmul.f32.gmra.mxu0 %v331
    %v371 = vpop.f32.mrf.mxu0
    %v372 = vadd.f32 %v310, %v371
    %373 = vmatmul.f32.gmra.mxu0 %v334
    %v374 = vpop.f32.mrf.mxu0
    %v375 = vadd.f32 %v310, %v374
    %376 = vdwg.mxu0
    %v377 = vld [vmem:[#allocation8] sm:$0xff]
    %v378 = vld [vmem:[#allocation8 + $0x8] sm:$0xff]
    %v379 = vld [vmem:[#allocation8 + $0x10] sm:$0xff]
    %v380 = vld [vmem:[#allocation8 + $0x18] sm:$0xff]
    %v381 = vld [vmem:[%s7] sm:$0x1]
    %v382 = vld [vmem:[#allocation10] sm:$0xff]
    %v383 = vld [vmem:[#allocation10 + $0x8] sm:$0xff]
    %v384 = vld [vmem:[#allocation10 + $0x10] sm:$0xff]
    %v385 = vld [vmem:[#allocation10 + $0x18] sm:$0xff]
    %v386 = vld [vmem:[%s10] sm:$0x1]
    %v387 = vld [vmem:[#allocation11] sm:$0xff]
    %v388 = vld [vmem:[#allocation11 + $0x8] sm:$0xff]
    %v389 = vld [vmem:[#allocation11 + $0x10] sm:$0xff]
    %v390 = vld [vmem:[#allocation11 + $0x18] sm:$0xff]
    %v391 = vld [vmem:[%s11] sm:$0x1]
    %v392 = vlaneseq
    %v393 = vshrl.u32 %v392, 7
    %v395 = vperm.slane %v381, 0
    %v398 = vsel %vm238, 0.0, 0
    %400 = vmatpush.msra.mxu0 0.0
    %401 = vmatpush.msra.mxu0 0.0
    %402 = vmatpush.msra.mxu0 0.0
    %403 = vmatpush.msra.mxu0 0.0
    %404 = vmatpush.msra.mxu0 0.0
    %405 = vmatpush.msra.mxu0 0.0
    %406 = vmatpush.msra.mxu0 0.0
    %407 = vmatpush.msra.mxu0 0.0
    %408 = vmatpush.msra.mxu0 0.0
    %409 = vmatpush.msra.mxu0 0.0
    %410 = vmatpush.msra.mxu0 0.0
    %411 = vmatpush.msra.mxu0 0.0
    %412 = vmatpush.msra.mxu0 %v380
    %413 = vmatpush.msra.mxu0 %v379
    %414 = vmatpush.msra.mxu0 %v378
    %415 = vmatpush.msra.mxu0 %v377
    %416 = vmatmul.f32.gmra.mxu0 %v398
    %v417 = vpop.f32.mrf.mxu0
    %v418 = vadd.f32 %v395, %v417
    %419 = vdwg.mxu0
    %v421 = vrot.slane %v418, 1
    %v422 = vrot.slane %v418, 2
    %v423 = vrot.slane %v418, 3
    %v424 = vrot.slane %v418, 4
    %v425 = vrot.slane %v418, 5
    %v426 = vrot.slane %v418, 6
    %v427 = vrot.slane %v418, 7
    %v436 = vadd.f32 %v354, %v418
    %v437 = vadd.f32 %v357, %v421
    %v438 = vadd.f32 %v360, %v422
    %v439 = vadd.f32 %v363, %v423
    %v440 = vadd.f32 %v366, %v424
    %v441 = vadd.f32 %v369, %v425
    %v442 = vadd.f32 %v372, %v426
    %v443 = vadd.f32 %v375, %v427
    %v444 = vxor.u32 %v436, 2147483648
    %v445 = vxor.u32 %v437, 2147483648
    %v446 = vxor.u32 %v438, 2147483648
    %v447 = vxor.u32 %v439, 2147483648
    %v448 = vxor.u32 %v440, 2147483648
    %v449 = vxor.u32 %v441, 2147483648
    %v450 = vxor.u32 %v442, 2147483648
    %v451 = vxor.u32 %v443, 2147483648
    %v452 = vmul.f32 %v444, 1.442695
    %v453 = vpow.pop %v452
    %v454 = vmul.f32 %v445, 1.442695
    %v455 = vpow.pop %v454
    %v456 = vmul.f32 %v446, 1.442695
    %v457 = vpow.pop %v456
    %v458 = vmul.f32 %v447, 1.442695
    %v459 = vpow.pop %v458
    %v460 = vmul.f32 %v448, 1.442695
    %v461 = vpow.pop %v460
    %v462 = vmul.f32 %v449, 1.442695
    %v463 = vpow.pop %v462
    %v464 = vmul.f32 %v450, 1.442695
    %v465 = vpow.pop %v464
    %v466 = vmul.f32 %v451, 1.442695
    %v467 = vpow.pop %v466
    %v468 = vadd.f32 %v453, 1.0
    %v469 = vadd.f32 %v455, 1.0
    %v470 = vadd.f32 %v457, 1.0
    %v471 = vadd.f32 %v459, 1.0
    %v472 = vadd.f32 %v461, 1.0
    %v473 = vadd.f32 %v463, 1.0
    %v474 = vadd.f32 %v465, 1.0
    %v475 = vadd.f32 %v467, 1.0
    %v476 = vrcp.pop %v468
    %v477 = vmul.f32 %v468, %v476
    %v478 = vsub.f32 1.0, %v477
    %v479 = vmul.f32 %v476, %v478
    %v480 = vadd.f32 %v476, %v479
    %vm481 = vweird.f32 %v468
    %vm482 = vweird.f32 %v476
    %vm483 = vmor %vm481, %vm482
    %v484 = vsel %vm483, %v476, %v480
    %v485 = vand.u32 2147483647, %v468
    %vm486 = vcmp.eq.f32.partialorder %v485, 8.507059e+37
    %v487 = vand.u32 %v468, 2147483648
    %v488 = vor.u32 1.1754944e-38, %v487
    %v489 = vsel %vm486, %v488, %v484
    %v490 = vmul.f32 1.0, %v489
    %v491 = vrcp.pop %v469
    %v492 = vmul.f32 %v469, %v491
    %v493 = vsub.f32 1.0, %v492
    %v494 = vmul.f32 %v491, %v493
    %v495 = vadd.f32 %v491, %v494
    %vm496 = vweird.f32 %v469
    %vm497 = vweird.f32 %v491
    %vm498 = vmor %vm496, %vm497
    %v499 = vsel %vm498, %v491, %v495
    %v500 = vand.u32 2147483647, %v469
    %vm501 = vcmp.eq.f32.partialorder %v500, 8.507059e+37
    %v502 = vand.u32 %v469, 2147483648
    %v503 = vor.u32 1.1754944e-38, %v502
    %v504 = vsel %vm501, %v503, %v499
    %v505 = vmul.f32 1.0, %v504
    %v506 = vrcp.pop %v470
    %v507 = vmul.f32 %v470, %v506
    %v508 = vsub.f32 1.0, %v507
    %v509 = vmul.f32 %v506, %v508
    %v510 = vadd.f32 %v506, %v509
    %vm511 = vweird.f32 %v470
    %vm512 = vweird.f32 %v506
    %vm513 = vmor %vm511, %vm512
    %v514 = vsel %vm513, %v506, %v510
    %v515 = vand.u32 2147483647, %v470
    %vm516 = vcmp.eq.f32.partialorder %v515, 8.507059e+37
    %v517 = vand.u32 %v470, 2147483648
    %v518 = vor.u32 1.1754944e-38, %v517
    %v519 = vsel %vm516, %v518, %v514
    %v520 = vmul.f32 1.0, %v519
    %v521 = vrcp.pop %v471
    %v522 = vmul.f32 %v471, %v521
    %v523 = vsub.f32 1.0, %v522
    %v524 = vmul.f32 %v521, %v523
    %v525 = vadd.f32 %v521, %v524
    %vm526 = vweird.f32 %v471
    %vm527 = vweird.f32 %v521
    %vm528 = vmor %vm526, %vm527
    %v529 = vsel %vm528, %v521, %v525
    %v530 = vand.u32 2147483647, %v471
    %vm531 = vcmp.eq.f32.partialorder %v530, 8.507059e+37
    %v532 = vand.u32 %v471, 2147483648
    %v533 = vor.u32 1.1754944e-38, %v532
    %v534 = vsel %vm531, %v533, %v529
    %v535 = vmul.f32 1.0, %v534
    %v536 = vrcp.pop %v472
    %v537 = vmul.f32 %v472, %v536
    %v538 = vsub.f32 1.0, %v537
    %v539 = vmul.f32 %v536, %v538
    %v540 = vadd.f32 %v536, %v539
    %vm541 = vweird.f32 %v472
    %vm542 = vweird.f32 %v536
    %vm543 = vmor %vm541, %vm542
    %v544 = vsel %vm543, %v536, %v540
    %v545 = vand.u32 2147483647, %v472
    %vm546 = vcmp.eq.f32.partialorder %v545, 8.507059e+37
    %v547 = vand.u32 %v472, 2147483648
    %v548 = vor.u32 1.1754944e-38, %v547
    %v549 = vsel %vm546, %v548, %v544
    %v550 = vmul.f32 1.0, %v549
    %v551 = vrcp.pop %v473
    %v552 = vmul.f32 %v473, %v551
    %v553 = vsub.f32 1.0, %v552
    %v554 = vmul.f32 %v551, %v553
    %v555 = vadd.f32 %v551, %v554
    %vm556 = vweird.f32 %v473
    %vm557 = vweird.f32 %v551
    %vm558 = vmor %vm556, %vm557
    %v559 = vsel %vm558, %v551, %v555
    %v560 = vand.u32 2147483647, %v473
    %vm561 = vcmp.eq.f32.partialorder %v560, 8.507059e+37
    %v562 = vand.u32 %v473, 2147483648
    %v563 = vor.u32 1.1754944e-38, %v562
    %v564 = vsel %vm561, %v563, %v559
    %v565 = vmul.f32 1.0, %v564
    %v566 = vrcp.pop %v474
    %v567 = vmul.f32 %v474, %v566
    %v568 = vsub.f32 1.0, %v567
    %v569 = vmul.f32 %v566, %v568
    %v570 = vadd.f32 %v566, %v569
    %vm571 = vweird.f32 %v474
    %vm572 = vweird.f32 %v566
    %vm573 = vmor %vm571, %vm572
    %v574 = vsel %vm573, %v566, %v570
    %v575 = vand.u32 2147483647, %v474
    %vm576 = vcmp.eq.f32.partialorder %v575, 8.507059e+37
    %v577 = vand.u32 %v474, 2147483648
    %v578 = vor.u32 1.1754944e-38, %v577
    %v579 = vsel %vm576, %v578, %v574
    %v580 = vmul.f32 1.0, %v579
    %v581 = vrcp.pop %v475
    %v582 = vmul.f32 %v475, %v581
    %v583 = vsub.f32 1.0, %v582
    %v584 = vmul.f32 %v581, %v583
    %v585 = vadd.f32 %v581, %v584
    %vm586 = vweird.f32 %v475
    %vm587 = vweird.f32 %v581
    %vm588 = vmor %vm586, %vm587
    %v589 = vsel %vm588, %v581, %v585
    %v590 = vand.u32 2147483647, %v475
    %vm591 = vcmp.eq.f32.partialorder %v590, 8.507059e+37
    %v592 = vand.u32 %v475, 2147483648
    %v593 = vor.u32 1.1754944e-38, %v592
    %v594 = vsel %vm591, %v593, %v589
    %v595 = vmul.f32 1.0, %v594
    %596 = vrot.lane.b32.xlu0 %v418, 64
    %v597 = vpop.permute.xlu0 %596
    %598 = vrot.lane.b32.xlu0 %v421, 64
    %v599 = vpop.permute.xlu0 %598
    %600 = vrot.lane.b32.xlu0 %v422, 64
    %v601 = vpop.permute.xlu0 %600
    %602 = vrot.lane.b32.xlu0 %v423, 64
    %v603 = vpop.permute.xlu0 %602
    %604 = vrot.lane.b32.xlu0 %v424, 64
    %v605 = vpop.permute.xlu0 %604
    %606 = vrot.lane.b32.xlu0 %v425, 64
    %v607 = vpop.permute.xlu0 %606
    %608 = vrot.lane.b32.xlu0 %v426, 64
    %v609 = vpop.permute.xlu0 %608
    %610 = vrot.lane.b32.xlu0 %v427, 64
    %v611 = vpop.permute.xlu0 %610
    %v620 = vmul.f32 %v490, %v597
    %v621 = vmul.f32 %v505, %v599
    %v622 = vmul.f32 %v520, %v601
    %v623 = vmul.f32 %v535, %v603
    %v624 = vmul.f32 %v550, %v605
    %v625 = vmul.f32 %v565, %v607
    %v626 = vmul.f32 %v580, %v609
    %v627 = vmul.f32 %v595, %v611
    %636 = vrot.lane.b32.xlu0 %v620, 64
    %v637 = vpop.permute.xlu0 %636
    %638 = vrot.lane.b32.xlu0 %v621, 64
    %v639 = vpop.permute.xlu0 %638
    %640 = vrot.lane.b32.xlu0 %v622, 64
    %v641 = vpop.permute.xlu0 %640
    %642 = vrot.lane.b32.xlu0 %v623, 64
    %v643 = vpop.permute.xlu0 %642
    %644 = vrot.lane.b32.xlu0 %v624, 64
    %v645 = vpop.permute.xlu0 %644
    %646 = vrot.lane.b32.xlu0 %v625, 64
    %v647 = vpop.permute.xlu0 %646
    %648 = vrot.lane.b32.xlu0 %v626, 64
    %v649 = vpop.permute.xlu0 %648
    %650 = vrot.lane.b32.xlu0 %v627, 64
    %v651 = vpop.permute.xlu0 %650
    %v660 = vadd.f32 %v354, %v637
    %v661 = vadd.f32 %v357, %v639
    %v662 = vadd.f32 %v360, %v641
    %v663 = vadd.f32 %v363, %v643
    %v664 = vadd.f32 %v366, %v645
    %v665 = vadd.f32 %v369, %v647
    %v666 = vadd.f32 %v372, %v649
    %v667 = vadd.f32 %v375, %v651
    %v668 = vtanh.pop %v660
    %v669 = vtanh.pop %v661
    %v670 = vtanh.pop %v662
    %v671 = vtanh.pop %v663
    %v672 = vtanh.pop %v664
    %v673 = vtanh.pop %v665
    %v674 = vtanh.pop %v666
    %v675 = vtanh.pop %v667
    %v676 = vsub.f32 1.0, %v490
    %v677 = vsub.f32 1.0, %v505
    %v678 = vsub.f32 1.0, %v520
    %v679 = vsub.f32 1.0, %v535
    %v680 = vsub.f32 1.0, %v550
    %v681 = vsub.f32 1.0, %v565
    %v682 = vsub.f32 1.0, %v580
    %v683 = vsub.f32 1.0, %v595
    %692 = vrot.lane.b32.xlu0 %v668, 96
    %v693 = vpop.permute.xlu0 %692
    %694 = vrot.lane.b32.xlu0 %v669, 96
    %v695 = vpop.permute.xlu0 %694
    %696 = vrot.lane.b32.xlu0 %v670, 96
    %v697 = vpop.permute.xlu0 %696
    %698 = vrot.lane.b32.xlu0 %v671, 96
    %v699 = vpop.permute.xlu0 %698
    %700 = vrot.lane.b32.xlu0 %v672, 96
    %v701 = vpop.permute.xlu0 %700
    %702 = vrot.lane.b32.xlu0 %v673, 96
    %v703 = vpop.permute.xlu0 %702
    %704 = vrot.lane.b32.xlu0 %v674, 96
    %v705 = vpop.permute.xlu0 %704
    %706 = vrot.lane.b32.xlu0 %v675, 96
    %v707 = vpop.permute.xlu0 %706
    %v716 = vmul.f32 %v676, %v693
    %v717 = vmul.f32 %v677, %v695
    %v718 = vmul.f32 %v678, %v697
    %v719 = vmul.f32 %v679, %v699
    %v720 = vmul.f32 %v680, %v701
    %v721 = vmul.f32 %v681, %v703
    %v722 = vmul.f32 %v682, %v705
    %v723 = vmul.f32 %v683, %v707
    %v724 = vmul.f32 %v490, 0.0
    %v725 = vmul.f32 %v505, 0.0
    %v726 = vmul.f32 %v520, 0.0
    %v727 = vmul.f32 %v535, 0.0
    %v728 = vmul.f32 %v550, 0.0
    %v729 = vmul.f32 %v565, 0.0
    %v730 = vmul.f32 %v580, 0.0
    %v731 = vmul.f32 %v595, 0.0
    %v732 = vadd.f32 %v716, %v724
    %v733 = vadd.f32 %v717, %v725
    %v734 = vadd.f32 %v718, %v726
    %v735 = vadd.f32 %v719, %v727
    %v736 = vadd.f32 %v720, %v728
    %v737 = vadd.f32 %v721, %v729
    %v738 = vadd.f32 %v722, %v730
    %v739 = vadd.f32 %v723, %v731
    %v741 = vperm.slane %v386, 0
    %v751 = vrot.slane %v733, 7
    %vm752 = vcmask 1041409
    %v753 = vsel %vm752, %v751, %v732
    %v754 = vrot.slane %v734, 6
    %vm755 = vcmask 1042434
    %v756 = vsel %vm755, %v754, %v753
    %v757 = vrot.slane %v735, 5
    %vm758 = vcmask 1043459
    %v759 = vsel %vm758, %v757, %v756
    %v760 = vrot.slane %v736, 4
    %vm761 = vcmask 1044484
    %v762 = vsel %vm761, %v760, %v759
    %v763 = vrot.slane %v737, 3
    %vm764 = vcmask 1045509
    %v765 = vsel %vm764, %v763, %v762
    %v766 = vrot.slane %v738, 2
    %vm767 = vcmask 1046534
    %v768 = vsel %vm767, %v766, %v765
    %v769 = vrot.slane %v739, 1
    %vm770 = vcmask 1047559
    %v771 = vsel %vm770, %v769, %v768
    %772 = vrot.lane.b32.xlu0 %v771, 96
    %v773 = vpop.permute.xlu0 %772
    %v774 = vsel %vm238, %v773, 0
    %776 = vmatpush.msra.mxu0 0.0
    %777 = vmatpush.msra.mxu0 0.0
    %778 = vmatpush.msra.mxu0 0.0
    %779 = vmatpush.msra.mxu0 0.0
    %780 = vmatpush.msra.mxu0 0.0
    %781 = vmatpush.msra.mxu0 0.0
    %782 = vmatpush.msra.mxu0 0.0
    %783 = vmatpush.msra.mxu0 0.0
    %784 = vmatpush.msra.mxu0 0.0
    %785 = vmatpush.msra.mxu0 0.0
    %786 = vmatpush.msra.mxu0 0.0
    %787 = vmatpush.msra.mxu0 0.0
    %788 = vmatpush.msra.mxu0 %v385
    %789 = vmatpush.msra.mxu0 %v384
    %790 = vmatpush.msra.mxu0 %v383
    %791 = vmatpush.msra.mxu0 %v382
    %792 = vmatmul.f32.gmra.mxu0 %v774
    %v793 = vpop.f32.mrf.mxu0
    %v794 = vadd.f32 %v741, %v793
    %795 = vdwg.mxu0
    %v797 = vperm.slane %v391, 0
    %799 = vmatpush.msra.mxu0 0.0
    %800 = vmatpush.msra.mxu0 0.0
    %801 = vmatpush.msra.mxu0 0.0
    %802 = vmatpush.msra.mxu0 0.0
    %803 = vmatpush.msra.mxu0 0.0
    %804 = vmatpush.msra.mxu0 0.0
    %805 = vmatpush.msra.mxu0 0.0
    %806 = vmatpush.msra.mxu0 0.0
    %807 = vmatpush.msra.mxu0 0.0
    %808 = vmatpush.msra.mxu0 0.0
    %809 = vmatpush.msra.mxu0 0.0
    %810 = vmatpush.msra.mxu0 0.0
    %811 = vmatpush.msra.mxu0 %v390
    %812 = vmatpush.msra.mxu0 %v389
    %813 = vmatpush.msra.mxu0 %v388
    %814 = vmatpush.msra.mxu0 %v387
    %815 = vmatmul.f32.gmra.mxu0 %v398
    %v816 = vpop.f32.mrf.mxu0
    %v817 = vadd.f32 %v797, %v816
    %818 = vdwg.mxu0
    %v819 = vadd.f32 %v794, %v817
    %v820 = vxor.u32 %v819, 2147483648
    %v821 = vmul.f32 %v820, 1.442695
    %v822 = vpow.pop %v821
    %v823 = vadd.f32 %v822, 1.0
    %v824 = vrcp.pop %v823
    %v825 = vmul.f32 %v823, %v824
    %v826 = vsub.f32 1.0, %v825
    %v827 = vmul.f32 %v824, %v826
    %v828 = vadd.f32 %v824, %v827
    %vm829 = vweird.f32 %v823
    %vm830 = vweird.f32 %v824
    %vm831 = vmor %vm829, %vm830
    %v832 = vsel %vm831, %v824, %v828
    %v833 = vand.u32 2147483647, %v823
    %vm834 = vcmp.eq.f32.partialorder %v833, 8.507059e+37
    %v835 = vand.u32 %v823, 2147483648
    %v836 = vor.u32 1.1754944e-38, %v835
    %v837 = vsel %vm834, %v836, %v832
    %v838 = vmul.f32 1.0, %v837
    %840 = vrot.lane.b32.xlu0 %v817, 64
    %v841 = vpop.permute.xlu0 %840
    %v843 = vmul.f32 %v838, %v841
    %845 = vrot.lane.b32.xlu0 %v843, 64
    %v846 = vpop.permute.xlu0 %845
    %v848 = vadd.f32 %v794, %v846
    %v849 = vtanh.pop %v848
    %v850 = vsub.f32 1.0, %v838
    %852 = vrot.lane.b32.xlu0 %v849, 96
    %v853 = vpop.permute.xlu0 %852
    %v855 = vmul.f32 %v850, %v853
    %v856 = vmul.f32 %v838, 0.0
    %v857 = vadd.f32 %v855, %v856
    %vm858 = vcmp.eq.s32.totalorder %v393, 0
    %v860 = vrot.slane %v857, 1
    %v861 = vrot.slane %v857, 2
    %v862 = vrot.slane %v857, 3
    %v863 = vrot.slane %v857, 4
    %v864 = vrot.slane %v857, 5
    %v865 = vrot.slane %v857, 6
    %v866 = vrot.slane %v857, 7
    %v867 = vsel %vm858, 1, 0
    %vm868 = vcmp.eq.s32.totalorder %v867, 1
    %v869 = vperm.slane %v857, 0
    %v870 = vperm.slane %v860, 0
    %v871 = vperm.slane %v861, 0
    %v872 = vperm.slane %v862, 0
    %v873 = vperm.slane %v863, 0
    %v874 = vperm.slane %v864, 0
    %v875 = vperm.slane %v865, 0
    %v876 = vperm.slane %v866, 0
    %v885 = vsel %vm868, %v869, 0.0
    %v886 = vsel %vm868, %v870, 0.0
    %v887 = vsel %vm868, %v871, 0.0
    %v888 = vsel %vm868, %v872, 0.0
    %v889 = vsel %vm868, %v873, 0.0
    %v890 = vsel %vm868, %v874, 0.0
    %v891 = vsel %vm868, %v875, 0.0
    %v892 = vsel %vm868, %v876, 0.0
    %893 = vmatpush.msra.mxu0 0.0
    %894 = vmatpush.msra.mxu0 0.0
    %895 = vmatpush.msra.mxu0 0.0
    %896 = vmatpush.msra.mxu0 0.0
    %897 = vmatpush.msra.mxu0 0.0
    %898 = vmatpush.msra.mxu0 0.0
    %899 = vmatpush.msra.mxu0 0.0
    %900 = vmatpush.msra.mxu0 0.0
    %901 = vmatpush.msra.mxu0 0.0
    %902 = vmatpush.msra.mxu0 0.0
    %903 = vmatpush.msra.mxu0 0.0
    %904 = vmatpush.msra.mxu0 0.0
    %905 = vmatpush.msra.mxu0 %v380
    %906 = vmatpush.msra.mxu0 %v379
    %907 = vmatpush.msra.mxu0 %v378
    %908 = vmatpush.msra.mxu0 %v377
    %909 = vmatmul.f32.gmra.mxu0 %v774
    %v910 = vpop.f32.mrf.mxu0
    %v911 = vadd.f32 %v395, %v910
    %912 = vdwg.mxu0
    %v914 = vrot.slane %v911, 7
    %v915 = vrot.slane %v911, 1
    %v916 = vrot.slane %v911, 2
    %v917 = vrot.slane %v911, 3
    %v918 = vrot.slane %v911, 4
    %v919 = vrot.slane %v911, 5
    %v920 = vrot.slane %v911, 6
    %v929 = vadd.f32 %v354, %v914
    %v930 = vadd.f32 %v357, %v911
    %v931 = vadd.f32 %v360, %v915
    %v932 = vadd.f32 %v363, %v916
    %v933 = vadd.f32 %v366, %v917
    %v934 = vadd.f32 %v369, %v918
    %v935 = vadd.f32 %v372, %v919
    %v936 = vadd.f32 %v375, %v920
    %v937 = vxor.u32 %v929, 2147483648
    %v938 = vxor.u32 %v930, 2147483648
    %v939 = vxor.u32 %v931, 2147483648
    %v940 = vxor.u32 %v932, 2147483648
    %v941 = vxor.u32 %v933, 2147483648
    %v942 = vxor.u32 %v934, 2147483648
    %v943 = vxor.u32 %v935, 2147483648
    %v944 = vxor.u32 %v936, 2147483648
    %v945 = vmul.f32 %v937, 1.442695
    %v946 = vpow.pop %v945
    %v947 = vmul.f32 %v938, 1.442695
    %v948 = vpow.pop %v947
    %v949 = vmul.f32 %v939, 1.442695
    %v950 = vpow.pop %v949
    %v951 = vmul.f32 %v940, 1.442695
    %v952 = vpow.pop %v951
    %v953 = vmul.f32 %v941, 1.442695
    %v954 = vpow.pop %v953
    %v955 = vmul.f32 %v942, 1.442695
    %v956 = vpow.pop %v955
    %v957 = vmul.f32 %v943, 1.442695
    %v958 = vpow.pop %v957
    %v959 = vmul.f32 %v944, 1.442695
    %v960 = vpow.pop %v959
    %v961 = vadd.f32 %v946, 1.0
    %v962 = vadd.f32 %v948, 1.0
    %v963 = vadd.f32 %v950, 1.0
    %v964 = vadd.f32 %v952, 1.0
    %v965 = vadd.f32 %v954, 1.0
    %v966 = vadd.f32 %v956, 1.0
    %v967 = vadd.f32 %v958, 1.0
    %v968 = vadd.f32 %v960, 1.0
    %v969 = vrcp.pop %v961
    %v970 = vmul.f32 %v961, %v969
    %v971 = vsub.f32 1.0, %v970
    %v972 = vmul.f32 %v969, %v971
    %v973 = vadd.f32 %v969, %v972
    %vm974 = vweird.f32 %v961
    %vm975 = vweird.f32 %v969
    %vm976 = vmor %vm974, %vm975
    %v977 = vsel %vm976, %v969, %v973
    %v978 = vand.u32 2147483647, %v961
    %vm979 = vcmp.eq.f32.partialorder %v978, 8.507059e+37
    %v980 = vand.u32 %v961, 2147483648
    %v981 = vor.u32 1.1754944e-38, %v980
    %v982 = vsel %vm979, %v981, %v977
    %v983 = vmul.f32 1.0, %v982
    %v984 = vrcp.pop %v962
    %v985 = vmul.f32 %v962, %v984
    %v986 = vsub.f32 1.0, %v985
    %v987 = vmul.f32 %v984, %v986
    %v988 = vadd.f32 %v984, %v987
    %vm989 = vweird.f32 %v962
    %vm990 = vweird.f32 %v984
    %vm991 = vmor %vm989, %vm990
    %v992 = vsel %vm991, %v984, %v988
    %v993 = vand.u32 2147483647, %v962
    %vm994 = vcmp.eq.f32.partialorder %v993, 8.507059e+37
    %v995 = vand.u32 %v962, 2147483648
    %v996 = vor.u32 1.1754944e-38, %v995
    %v997 = vsel %vm994, %v996, %v992
    %v998 = vmul.f32 1.0, %v997
    %v999 = vrcp.pop %v963
    %v1000 = vmul.f32 %v963, %v999
    %v1001 = vsub.f32 1.0, %v1000
    %v1002 = vmul.f32 %v999, %v1001
    %v1003 = vadd.f32 %v999, %v1002
    %vm1004 = vweird.f32 %v963
    %vm1005 = vweird.f32 %v999
    %vm1006 = vmor %vm1004, %vm1005
    %v1007 = vsel %vm1006, %v999, %v1003
    %v1008 = vand.u32 2147483647, %v963
    %vm1009 = vcmp.eq.f32.partialorder %v1008, 8.507059e+37
    %v1010 = vand.u32 %v963, 2147483648
    %v1011 = vor.u32 1.1754944e-38, %v1010
    %v1012 = vsel %vm1009, %v1011, %v1007
    %v1013 = vmul.f32 1.0, %v1012
    %v1014 = vrcp.pop %v964
    %v1015 = vmul.f32 %v964, %v1014
    %v1016 = vsub.f32 1.0, %v1015
    %v1017 = vmul.f32 %v1014, %v1016
    %v1018 = vadd.f32 %v1014, %v1017
    %vm1019 = vweird.f32 %v964
    %vm1020 = vweird.f32 %v1014
    %vm1021 = vmor %vm1019, %vm1020
    %v1022 = vsel %vm1021, %v1014, %v1018
    %v1023 = vand.u32 2147483647, %v964
    %vm1024 = vcmp.eq.f32.partialorder %v1023, 8.507059e+37
    %v1025 = vand.u32 %v964, 2147483648
    %v1026 = vor.u32 1.1754944e-38, %v1025
    %v1027 = vsel %vm1024, %v1026, %v1022
    %v1028 = vmul.f32 1.0, %v1027
    %v1029 = vrcp.pop %v965
    %v1030 = vmul.f32 %v965, %v1029
    %v1031 = vsub.f32 1.0, %v1030
    %v1032 = vmul.f32 %v1029, %v1031
    %v1033 = vadd.f32 %v1029, %v1032
    %vm1034 = vweird.f32 %v965
    %vm1035 = vweird.f32 %v1029
    %vm1036 = vmor %vm1034, %vm1035
    %v1037 = vsel %vm1036, %v1029, %v1033
    %v1038 = vand.u32 2147483647, %v965
    %vm1039 = vcmp.eq.f32.partialorder %v1038, 8.507059e+37
    %v1040 = vand.u32 %v965, 2147483648
    %v1041 = vor.u32 1.1754944e-38, %v1040
    %v1042 = vsel %vm1039, %v1041, %v1037
    %v1043 = vmul.f32 1.0, %v1042
    %v1044 = vrcp.pop %v966
    %v1045 = vmul.f32 %v966, %v1044
    %v1046 = vsub.f32 1.0, %v1045
    %v1047 = vmul.f32 %v1044, %v1046
    %v1048 = vadd.f32 %v1044, %v1047
    %vm1049 = vweird.f32 %v966
    %vm1050 = vweird.f32 %v1044
    %vm1051 = vmor %vm1049, %vm1050
    %v1052 = vsel %vm1051, %v1044, %v1048
    %v1053 = vand.u32 2147483647, %v966
    %vm1054 = vcmp.eq.f32.partialorder %v1053, 8.507059e+37
    %v1055 = vand.u32 %v966, 2147483648
    %v1056 = vor.u32 1.1754944e-38, %v1055
    %v1057 = vsel %vm1054, %v1056, %v1052
    %v1058 = vmul.f32 1.0, %v1057
    %v1059 = vrcp.pop %v967
    %v1060 = vmul.f32 %v967, %v1059
    %v1061 = vsub.f32 1.0, %v1060
    %v1062 = vmul.f32 %v1059, %v1061
    %v1063 = vadd.f32 %v1059, %v1062
    %vm1064 = vweird.f32 %v967
    %vm1065 = vweird.f32 %v1059
    %vm1066 = vmor %vm1064, %vm1065
    %v1067 = vsel %vm1066, %v1059, %v1063
    %v1068 = vand.u32 2147483647, %v967
    %vm1069 = vcmp.eq.f32.partialorder %v1068, 8.507059e+37
    %v1070 = vand.u32 %v967, 2147483648
    %v1071 = vor.u32 1.1754944e-38, %v1070
    %v1072 = vsel %vm1069, %v1071, %v1067
    %v1073 = vmul.f32 1.0, %v1072
    %v1074 = vrcp.pop %v968
    %v1075 = vmul.f32 %v968, %v1074
    %v1076 = vsub.f32 1.0, %v1075
    %v1077 = vmul.f32 %v1074, %v1076
    %v1078 = vadd.f32 %v1074, %v1077
    %vm1079 = vweird.f32 %v968
    %vm1080 = vweird.f32 %v1074
    %vm1081 = vmor %vm1079, %vm1080
    %v1082 = vsel %vm1081, %v1074, %v1078
    %v1083 = vand.u32 2147483647, %v968
    %vm1084 = vcmp.eq.f32.partialorder %v1083, 8.507059e+37
    %v1085 = vand.u32 %v968, 2147483648
    %v1086 = vor.u32 1.1754944e-38, %v1085
    %v1087 = vsel %vm1084, %v1086, %v1082
    %v1088 = vmul.f32 1.0, %v1087
    %1089 = vrot.lane.b32.xlu0 %v914, 64
    %v1090 = vpop.permute.xlu0 %1089
    %1091 = vrot.lane.b32.xlu0 %v911, 64
    %v1092 = vpop.permute.xlu0 %1091
    %1093 = vrot.lane.b32.xlu0 %v915, 64
    %v1094 = vpop.permute.xlu0 %1093
    %1095 = vrot.lane.b32.xlu0 %v916, 64
    %v1096 = vpop.permute.xlu0 %1095
    %1097 = vrot.lane.b32.xlu0 %v917, 64
    %v1098 = vpop.permute.xlu0 %1097
    %1099 = vrot.lane.b32.xlu0 %v918, 64
    %v1100 = vpop.permute.xlu0 %1099
    %1101 = vrot.lane.b32.xlu0 %v919, 64
    %v1102 = vpop.permute.xlu0 %1101
    %1103 = vrot.lane.b32.xlu0 %v920, 64
    %v1104 = vpop.permute.xlu0 %1103
    %v1113 = vmul.f32 %v983, %v1090
    %v1114 = vmul.f32 %v998, %v1092
    %v1115 = vmul.f32 %v1013, %v1094
    %v1116 = vmul.f32 %v1028, %v1096
    %v1117 = vmul.f32 %v1043, %v1098
    %v1118 = vmul.f32 %v1058, %v1100
    %v1119 = vmul.f32 %v1073, %v1102
    %v1120 = vmul.f32 %v1088, %v1104
    %1129 = vrot.lane.b32.xlu0 %v1113, 64
    %v1130 = vpop.permute.xlu0 %1129
    %1131 = vrot.lane.b32.xlu0 %v1114, 64
    %v1132 = vpop.permute.xlu0 %1131
    %1133 = vrot.lane.b32.xlu0 %v1115, 64
    %v1134 = vpop.permute.xlu0 %1133
    %1135 = vrot.lane.b32.xlu0 %v1116, 64
    %v1136 = vpop.permute.xlu0 %1135
    %1137 = vrot.lane.b32.xlu0 %v1117, 64
    %v1138 = vpop.permute.xlu0 %1137
    %1139 = vrot.lane.b32.xlu0 %v1118, 64
    %v1140 = vpop.permute.xlu0 %1139
    %1141 = vrot.lane.b32.xlu0 %v1119, 64
    %v1142 = vpop.permute.xlu0 %1141
    %1143 = vrot.lane.b32.xlu0 %v1120, 64
    %v1144 = vpop.permute.xlu0 %1143
    %v1153 = vadd.f32 %v354, %v1130
    %v1154 = vadd.f32 %v357, %v1132
    %v1155 = vadd.f32 %v360, %v1134
    %v1156 = vadd.f32 %v363, %v1136
    %v1157 = vadd.f32 %v366, %v1138
    %v1158 = vadd.f32 %v369, %v1140
    %v1159 = vadd.f32 %v372, %v1142
    %v1160 = vadd.f32 %v375, %v1144
    %v1161 = vtanh.pop %v1153
    %v1162 = vtanh.pop %v1154
    %v1163 = vtanh.pop %v1155
    %v1164 = vtanh.pop %v1156
    %v1165 = vtanh.pop %v1157
    %v1166 = vtanh.pop %v1158
    %v1167 = vtanh.pop %v1159
    %v1168 = vtanh.pop %v1160
    %v1169 = vsub.f32 1.0, %v983
    %v1170 = vsub.f32 1.0, %v998
    %v1171 = vsub.f32 1.0, %v1013
    %v1172 = vsub.f32 1.0, %v1028
    %v1173 = vsub.f32 1.0, %v1043
    %v1174 = vsub.f32 1.0, %v1058
    %v1175 = vsub.f32 1.0, %v1073
    %v1176 = vsub.f32 1.0, %v1088
    %1185 = vrot.lane.b32.xlu0 %v1161, 96
    %v1186 = vpop.permute.xlu0 %1185
    %1187 = vrot.lane.b32.xlu0 %v1162, 96
    %v1188 = vpop.permute.xlu0 %1187
    %1189 = vrot.lane.b32.xlu0 %v1163, 96
    %v1190 = vpop.permute.xlu0 %1189
    %1191 = vrot.lane.b32.xlu0 %v1164, 96
    %v1192 = vpop.permute.xlu0 %1191
    %1193 = vrot.lane.b32.xlu0 %v1165, 96
    %v1194 = vpop.permute.xlu0 %1193
    %1195 = vrot.lane.b32.xlu0 %v1166, 96
    %v1196 = vpop.permute.xlu0 %1195
    %1197 = vrot.lane.b32.xlu0 %v1167, 96
    %v1198 = vpop.permute.xlu0 %1197
    %1199 = vrot.lane.b32.xlu0 %v1168, 96
    %v1200 = vpop.permute.xlu0 %1199
    %v1209 = vmul.f32 %v1169, %v1186
    %v1210 = vmul.f32 %v1170, %v1188
    %v1211 = vmul.f32 %v1171, %v1190
    %v1212 = vmul.f32 %v1172, %v1192
    %v1213 = vmul.f32 %v1173, %v1194
    %v1214 = vmul.f32 %v1174, %v1196
    %v1215 = vmul.f32 %v1175, %v1198
    %v1216 = vmul.f32 %v1176, %v1200
    %v1217 = vrot.slane %v732, 7
    %v1218 = vrot.slane %v734, 7
    %v1219 = vrot.slane %v735, 7
    %v1220 = vrot.slane %v736, 7
    %v1221 = vrot.slane %v737, 7
    %v1222 = vrot.slane %v738, 7
    %v1223 = vrot.slane %v739, 7
    %v1232 = vmul.f32 %v983, %v1217
    %v1233 = vmul.f32 %v998, %v751
    %v1234 = vmul.f32 %v1013, %v1218
    %v1235 = vmul.f32 %v1028, %v1219
    %v1236 = vmul.f32 %v1043, %v1220
    %v1237 = vmul.f32 %v1058, %v1221
    %v1238 = vmul.f32 %v1073, %v1222
    %v1239 = vmul.f32 %v1088, %v1223
    %v1240 = vadd.f32 %v1209, %v1232
    %v1241 = vadd.f32 %v1210, %v1233
    %v1242 = vadd.f32 %v1211, %v1234
    %v1243 = vadd.f32 %v1212, %v1235
    %v1244 = vadd.f32 %v1213, %v1236
    %v1245 = vadd.f32 %v1214, %v1237
    %v1246 = vadd.f32 %v1215, %v1238
    %v1247 = vadd.f32 %v1216, %v1239
    %v1256 = vrot.slane %v1240, 1
    %v1257 = vsel %vm752, %v1241, %v1256
    %v1258 = vrot.slane %v1242, 7
    %v1259 = vsel %vm755, %v1258, %v1257
    %v1260 = vrot.slane %v1243, 6
    %v1261 = vsel %vm758, %v1260, %v1259
    %v1262 = vrot.slane %v1244, 5
    %v1263 = vsel %vm761, %v1262, %v1261
    %v1264 = vrot.slane %v1245, 4
    %v1265 = vsel %vm764, %v1264, %v1263
    %v1266 = vrot.slane %v1246, 3
    %v1267 = vsel %vm767, %v1266, %v1265
    %v1268 = vrot.slane %v1247, 2
    %v1269 = vsel %vm770, %v1268, %v1267
    %1270 = vrot.lane.b32.xlu0 %v1269, 96
    %v1271 = vpop.permute.xlu0 %1270
    %v1272 = vsel %vm238, %v1271, 0
    %1274 = vmatpush.msra.mxu0 0.0
    %1275 = vmatpush.msra.mxu0 0.0
    %1276 = vmatpush.msra.mxu0 0.0
    %1277 = vmatpush.msra.mxu0 0.0
    %1278 = vmatpush.msra.mxu0 0.0
    %1279 = vmatpush.msra.mxu0 0.0
    %1280 = vmatpush.msra.mxu0 0.0
    %1281 = vmatpush.msra.mxu0 0.0
    %1282 = vmatpush.msra.mxu0 0.0
    %1283 = vmatpush.msra.mxu0 0.0
    %1284 = vmatpush.msra.mxu0 0.0
    %1285 = vmatpush.msra.mxu0 0.0
    %1286 = vmatpush.msra.mxu0 %v385
    %1287 = vmatpush.msra.mxu0 %v384
    %1288 = vmatpush.msra.mxu0 %v383
    %1289 = vmatpush.msra.mxu0 %v382
    %1290 = vmatmul.f32.gmra.mxu0 %v1272
    %v1291 = vpop.f32.mrf.mxu0
    %v1292 = vadd.f32 %v741, %v1291
    %1293 = vdwg.mxu0
    %1294 = vrot.lane.b32.xlu0 %v857, 96
    %v1295 = vpop.permute.xlu0 %1294
    %v1296 = vsel %vm238, %v1295, 0
    %1298 = vmatpush.msra.mxu0 0.0
    %1299 = vmatpush.msra.mxu0 0.0
    %1300 = vmatpush.msra.mxu0 0.0
    %1301 = vmatpush.msra.mxu0 0.0
    %1302 = vmatpush.msra.mxu0 0.0
    %1303 = vmatpush.msra.mxu0 0.0
    %1304 = vmatpush.msra.mxu0 0.0
    %1305 = vmatpush.msra.mxu0 0.0
    %1306 = vmatpush.msra.mxu0 0.0
    %1307 = vmatpush.msra.mxu0 0.0
    %1308 = vmatpush.msra.mxu0 0.0
    %1309 = vmatpush.msra.mxu0 0.0
    %1310 = vmatpush.msra.mxu0 %v390
    %1311 = vmatpush.msra.mxu0 %v389
    %1312 = vmatpush.msra.mxu0 %v388
    %1313 = vmatpush.msra.mxu0 %v387
    %1314 = vmatmul.f32.gmra.mxu0 %v1296
    %v1315 = vpop.f32.mrf.mxu0
    %v1316 = vadd.f32 %v797, %v1315
    %1317 = vdwg.mxu0
    %v1318 = vadd.f32 %v1292, %v1316
    %v1319 = vxor.u32 %v1318, 2147483648
    %v1320 = vmul.f32 %v1319, 1.442695
    %v1321 = vpow.pop %v1320
    %v1322 = vadd.f32 %v1321, 1.0
    %v1323 = vrcp.pop %v1322
    %v1324 = vmul.f32 %v1322, %v1323
    %v1325 = vsub.f32 1.0, %v1324
    %v1326 = vmul.f32 %v1323, %v1325
    %v1327 = vadd.f32 %v1323, %v1326
    %vm1328 = vweird.f32 %v1322
    %vm1329 = vweird.f32 %v1323
    %vm1330 = vmor %vm1328, %vm1329
    %v1331 = vsel %vm1330, %v1323, %v1327
    %v1332 = vand.u32 2147483647, %v1322
    %vm1333 = vcmp.eq.f32.partialorder %v1332, 8.507059e+37
    %v1334 = vand.u32 %v1322, 2147483648
    %v1335 = vor.u32 1.1754944e-38, %v1334
    %v1336 = vsel %vm1333, %v1335, %v1331
    %v1337 = vmul.f32 1.0, %v1336
    %1339 = vrot.lane.b32.xlu0 %v1316, 64
    %v1340 = vpop.permute.xlu0 %1339
    %v1342 = vmul.f32 %v1337, %v1340
    %1344 = vrot.lane.b32.xlu0 %v1342, 64
    %v1345 = vpop.permute.xlu0 %1344
    %v1347 = vadd.f32 %v1292, %v1345
    %v1348 = vtanh.pop %v1347
    %v1349 = vsub.f32 1.0, %v1337
    %1351 = vrot.lane.b32.xlu0 %v1348, 96
    %v1352 = vpop.permute.xlu0 %1351
    %v1354 = vmul.f32 %v1349, %v1352
    %v1355 = vmul.f32 %v1337, %v857
    %v1356 = vadd.f32 %v1354, %v1355
    %vm1357 = vcmp.eq.s32.totalorder %v393, 1
    %v1359 = vrot.slane %v1356, 1
    %v1360 = vrot.slane %v1356, 2
    %v1361 = vrot.slane %v1356, 3
    %v1362 = vrot.slane %v1356, 4
    %v1363 = vrot.slane %v1356, 5
    %v1364 = vrot.slane %v1356, 6
    %v1365 = vrot.slane %v1356, 7
    %v1366 = vsel %vm1357, 1, 0
    %vm1367 = vcmp.eq.s32.totalorder %v1366, 1
    %v1368 = vperm.slane %v1356, 0
    %v1369 = vperm.slane %v1359, 0
    %v1370 = vperm.slane %v1360, 0
    %v1371 = vperm.slane %v1361, 0
    %v1372 = vperm.slane %v1362, 0
    %v1373 = vperm.slane %v1363, 0
    %v1374 = vperm.slane %v1364, 0
    %v1375 = vperm.slane %v1365, 0
    %v1384 = vsel %vm1367, %v1368, %v885
    %v1385 = vsel %vm1367, %v1369, %v886
    %v1386 = vsel %vm1367, %v1370, %v887
    %v1387 = vsel %vm1367, %v1371, %v888
    %v1388 = vsel %vm1367, %v1372, %v889
    %v1389 = vsel %vm1367, %v1373, %v890
    %v1390 = vsel %vm1367, %v1374, %v891
    %v1391 = vsel %vm1367, %v1375, %v892
    %1392 = vmatpush.msra.mxu0 0.0
    %1393 = vmatpush.msra.mxu0 0.0
    %1394 = vmatpush.msra.mxu0 0.0
    %1395 = vmatpush.msra.mxu0 0.0
    %1396 = vmatpush.msra.mxu0 0.0
    %1397 = vmatpush.msra.mxu0 0.0
    %1398 = vmatpush.msra.mxu0 0.0
    %1399 = vmatpush.msra.mxu0 0.0
    %1400 = vmatpush.msra.mxu0 0.0
    %1401 = vmatpush.msra.mxu0 0.0
    %1402 = vmatpush.msra.mxu0 0.0
    %1403 = vmatpush.msra.mxu0 0.0
    %1404 = vmatpush.msra.mxu0 %v380
    %1405 = vmatpush.msra.mxu0 %v379
    %1406 = vmatpush.msra.mxu0 %v378
    %1407 = vmatpush.msra.mxu0 %v377
    %1408 = vmatmul.f32.gmra.mxu0 %v1272
    %v1409 = vpop.f32.mrf.mxu0
    %v1410 = vadd.f32 %v395, %v1409
    %1411 = vdwg.mxu0
    %v1413 = vrot.slane %v1410, 6
    %v1414 = vrot.slane %v1410, 7
    %v1415 = vrot.slane %v1410, 1
    %v1416 = vrot.slane %v1410, 2
    %v1417 = vrot.slane %v1410, 3
    %v1418 = vrot.slane %v1410, 4
    %v1419 = vrot.slane %v1410, 5
    %v1428 = vadd.f32 %v354, %v1413
    %v1429 = vadd.f32 %v357, %v1414
    %v1430 = vadd.f32 %v360, %v1410
    %v1431 = vadd.f32 %v363, %v1415
    %v1432 = vadd.f32 %v366, %v1416
    %v1433 = vadd.f32 %v369, %v1417
    %v1434 = vadd.f32 %v372, %v1418
    %v1435 = vadd.f32 %v375, %v1419
    %v1436 = vxor.u32 %v1428, 2147483648
    %v1437 = vxor.u32 %v1429, 2147483648
    %v1438 = vxor.u32 %v1430, 2147483648
    %v1439 = vxor.u32 %v1431, 2147483648
    %v1440 = vxor.u32 %v1432, 2147483648
    %v1441 = vxor.u32 %v1433, 2147483648
    %v1442 = vxor.u32 %v1434, 2147483648
    %v1443 = vxor.u32 %v1435, 2147483648
    %v1444 = vmul.f32 %v1436, 1.442695
    %v1445 = vpow.pop %v1444
    %v1446 = vmul.f32 %v1437, 1.442695
    %v1447 = vpow.pop %v1446
    %v1448 = vmul.f32 %v1438, 1.442695
    %v1449 = vpow.pop %v1448
    %v1450 = vmul.f32 %v1439, 1.442695
    %v1451 = vpow.pop %v1450
    %v1452 = vmul.f32 %v1440, 1.442695
    %v1453 = vpow.pop %v1452
    %v1454 = vmul.f32 %v1441, 1.442695
    %v1455 = vpow.pop %v1454
    %v1456 = vmul.f32 %v1442, 1.442695
    %v1457 = vpow.pop %v1456
    %v1458 = vmul.f32 %v1443, 1.442695
    %v1459 = vpow.pop %v1458
    %v1460 = vadd.f32 %v1445, 1.0
    %v1461 = vadd.f32 %v1447, 1.0
    %v1462 = vadd.f32 %v1449, 1.0
    %v1463 = vadd.f32 %v1451, 1.0
    %v1464 = vadd.f32 %v1453, 1.0
    %v1465 = vadd.f32 %v1455, 1.0
    %v1466 = vadd.f32 %v1457, 1.0
    %v1467 = vadd.f32 %v1459, 1.0
    %v1468 = vrcp.pop %v1460
    %v1469 = vmul.f32 %v1460, %v1468
    %v1470 = vsub.f32 1.0, %v1469
    %v1471 = vmul.f32 %v1468, %v1470
    %v1472 = vadd.f32 %v1468, %v1471
    %vm1473 = vweird.f32 %v1460
    %vm1474 = vweird.f32 %v1468
    %vm1475 = vmor %vm1473, %vm1474
    %v1476 = vsel %vm1475, %v1468, %v1472
    %v1477 = vand.u32 2147483647, %v1460
    %vm1478 = vcmp.eq.f32.partialorder %v1477, 8.507059e+37
    %v1479 = vand.u32 %v1460, 2147483648
    %v1480 = vor.u32 1.1754944e-38, %v1479
    %v1481 = vsel %vm1478, %v1480, %v1476
    %v1482 = vmul.f32 1.0, %v1481
    %v1483 = vrcp.pop %v1461
    %v1484 = vmul.f32 %v1461, %v1483
    %v1485 = vsub.f32 1.0, %v1484
    %v1486 = vmul.f32 %v1483, %v1485
    %v1487 = vadd.f32 %v1483, %v1486
    %vm1488 = vweird.f32 %v1461
    %vm1489 = vweird.f32 %v1483
    %vm1490 = vmor %vm1488, %vm1489
    %v1491 = vsel %vm1490, %v1483, %v1487
    %v1492 = vand.u32 2147483647, %v1461
    %vm1493 = vcmp.eq.f32.partialorder %v1492, 8.507059e+37
    %v1494 = vand.u32 %v1461, 2147483648
    %v1495 = vor.u32 1.1754944e-38, %v1494
    %v1496 = vsel %vm1493, %v1495, %v1491
    %v1497 = vmul.f32 1.0, %v1496
    %v1498 = vrcp.pop %v1462
    %v1499 = vmul.f32 %v1462, %v1498
    %v1500 = vsub.f32 1.0, %v1499
    %v1501 = vmul.f32 %v1498, %v1500
    %v1502 = vadd.f32 %v1498, %v1501
    %vm1503 = vweird.f32 %v1462
    %vm1504 = vweird.f32 %v1498
    %vm1505 = vmor %vm1503, %vm1504
    %v1506 = vsel %vm1505, %v1498, %v1502
    %v1507 = vand.u32 2147483647, %v1462
    %vm1508 = vcmp.eq.f32.partialorder %v1507, 8.507059e+37
    %v1509 = vand.u32 %v1462, 2147483648
    %v1510 = vor.u32 1.1754944e-38, %v1509
    %v1511 = vsel %vm1508, %v1510, %v1506
    %v1512 = vmul.f32 1.0, %v1511
    %v1513 = vrcp.pop %v1463
    %v1514 = vmul.f32 %v1463, %v1513
    %v1515 = vsub.f32 1.0, %v1514
    %v1516 = vmul.f32 %v1513, %v1515
    %v1517 = vadd.f32 %v1513, %v1516
    %vm1518 = vweird.f32 %v1463
    %vm1519 = vweird.f32 %v1513
    %vm1520 = vmor %vm1518, %vm1519
    %v1521 = vsel %vm1520, %v1513, %v1517
    %v1522 = vand.u32 2147483647, %v1463
    %vm1523 = vcmp.eq.f32.partialorder %v1522, 8.507059e+37
    %v1524 = vand.u32 %v1463, 2147483648
    %v1525 = vor.u32 1.1754944e-38, %v1524
    %v1526 = vsel %vm1523, %v1525, %v1521
    %v1527 = vmul.f32 1.0, %v1526
    %v1528 = vrcp.pop %v1464
    %v1529 = vmul.f32 %v1464, %v1528
    %v1530 = vsub.f32 1.0, %v1529
    %v1531 = vmul.f32 %v1528, %v1530
    %v1532 = vadd.f32 %v1528, %v1531
    %vm1533 = vweird.f32 %v1464
    %vm1534 = vweird.f32 %v1528
    %vm1535 = vmor %vm1533, %vm1534
    %v1536 = vsel %vm1535, %v1528, %v1532
    %v1537 = vand.u32 2147483647, %v1464
    %vm1538 = vcmp.eq.f32.partialorder %v1537, 8.507059e+37
    %v1539 = vand.u32 %v1464, 2147483648
    %v1540 = vor.u32 1.1754944e-38, %v1539
    %v1541 = vsel %vm1538, %v1540, %v1536
    %v1542 = vmul.f32 1.0, %v1541
    %v1543 = vrcp.pop %v1465
    %v1544 = vmul.f32 %v1465, %v1543
    %v1545 = vsub.f32 1.0, %v1544
    %v1546 = vmul.f32 %v1543, %v1545
    %v1547 = vadd.f32 %v1543, %v1546
    %vm1548 = vweird.f32 %v1465
    %vm1549 = vweird.f32 %v1543
    %vm1550 = vmor %vm1548, %vm1549
    %v1551 = vsel %vm1550, %v1543, %v1547
    %v1552 = vand.u32 2147483647, %v1465
    %vm1553 = vcmp.eq.f32.partialorder %v1552, 8.507059e+37
    %v1554 = vand.u32 %v1465, 2147483648
    %v1555 = vor.u32 1.1754944e-38, %v1554
    %v1556 = vsel %vm1553, %v1555, %v1551
    %v1557 = vmul.f32 1.0, %v1556
    %v1558 = vrcp.pop %v1466
    %v1559 = vmul.f32 %v1466, %v1558
    %v1560 = vsub.f32 1.0, %v1559
    %v1561 = vmul.f32 %v1558, %v1560
    %v1562 = vadd.f32 %v1558, %v1561
    %vm1563 = vweird.f32 %v1466
    %vm1564 = vweird.f32 %v1558
    %vm1565 = vmor %vm1563, %vm1564
    %v1566 = vsel %vm1565, %v1558, %v1562
    %v1567 = vand.u32 2147483647, %v1466
    %vm1568 = vcmp.eq.f32.partialorder %v1567, 8.507059e+37
    %v1569 = vand.u32 %v1466, 2147483648
    %v1570 = vor.u32 1.1754944e-38, %v1569
    %v1571 = vsel %vm1568, %v1570, %v1566
    %v1572 = vmul.f32 1.0, %v1571
    %v1573 = vrcp.pop %v1467
    %v1574 = vmul.f32 %v1467, %v1573
    %v1575 = vsub.f32 1.0, %v1574
    %v1576 = vmul.f32 %v1573, %v1575
    %v1577 = vadd.f32 %v1573, %v1576
    %vm1578 = vweird.f32 %v1467
    %vm1579 = vweird.f32 %v1573
    %vm1580 = vmor %vm1578, %vm1579
    %v1581 = vsel %vm1580, %v1573, %v1577
    %v1582 = vand.u32 2147483647, %v1467
    %vm1583 = vcmp.eq.f32.partialorder %v1582, 8.507059e+37
    %v1584 = vand.u32 %v1467, 2147483648
    %v1585 = vor.u32 1.1754944e-38, %v1584
    %v1586 = vsel %vm1583, %v1585, %v1581
    %v1587 = vmul.f32 1.0, %v1586
    %1588 = vrot.lane.b32.xlu0 %v1413, 64
    %v1589 = vpop.permute.xlu0 %1588
    %1590 = vrot.lane.b32.xlu0 %v1414, 64
    %v1591 = vpop.permute.xlu0 %1590
    %1592 = vrot.lane.b32.xlu0 %v1410, 64
    %v1593 = vpop.permute.xlu0 %1592
    %1594 = vrot.lane.b32.xlu0 %v1415, 64
    %v1595 = vpop.permute.xlu0 %1594
    %1596 = vrot.lane.b32.xlu0 %v1416, 64
    %v1597 = vpop.permute.xlu0 %1596
    %1598 = vrot.lane.b32.xlu0 %v1417, 64
    %v1599 = vpop.permute.xlu0 %1598
    %1600 = vrot.lane.b32.xlu0 %v1418, 64
    %v1601 = vpop.permute.xlu0 %1600
    %1602 = vrot.lane.b32.xlu0 %v1419, 64
    %v1603 = vpop.permute.xlu0 %1602
    %v1612 = vmul.f32 %v1482, %v1589
    %v1613 = vmul.f32 %v1497, %v1591
    %v1614 = vmul.f32 %v1512, %v1593
    %v1615 = vmul.f32 %v1527, %v1595
    %v1616 = vmul.f32 %v1542, %v1597
    %v1617 = vmul.f32 %v1557, %v1599
    %v1618 = vmul.f32 %v1572, %v1601
    %v1619 = vmul.f32 %v1587, %v1603
    %1628 = vrot.lane.b32.xlu0 %v1612, 64
    %v1629 = vpop.permute.xlu0 %1628
    %1630 = vrot.lane.b32.xlu0 %v1613, 64
    %v1631 = vpop.permute.xlu0 %1630
    %1632 = vrot.lane.b32.xlu0 %v1614, 64
    %v1633 = vpop.permute.xlu0 %1632
    %1634 = vrot.lane.b32.xlu0 %v1615, 64
    %v1635 = vpop.permute.xlu0 %1634
    %1636 = vrot.lane.b32.xlu0 %v1616, 64
    %v1637 = vpop.permute.xlu0 %1636
    %1638 = vrot.lane.b32.xlu0 %v1617, 64
    %v1639 = vpop.permute.xlu0 %1638
    %1640 = vrot.lane.b32.xlu0 %v1618, 64
    %v1641 = vpop.permute.xlu0 %1640
    %1642 = vrot.lane.b32.xlu0 %v1619, 64
    %v1643 = vpop.permute.xlu0 %1642
    %v1652 = vadd.f32 %v354, %v1629
    %v1653 = vadd.f32 %v357, %v1631
    %v1654 = vadd.f32 %v360, %v1633
    %v1655 = vadd.f32 %v363, %v1635
    %v1656 = vadd.f32 %v366, %v1637
    %v1657 = vadd.f32 %v369, %v1639
    %v1658 = vadd.f32 %v372, %v1641
    %v1659 = vadd.f32 %v375, %v1643
    %v1660 = vtanh.pop %v1652
    %v1661 = vtanh.pop %v1653
    %v1662 = vtanh.pop %v1654
    %v1663 = vtanh.pop %v1655
    %v1664 = vtanh.pop %v1656
    %v1665 = vtanh.pop %v1657
    %v1666 = vtanh.pop %v1658
    %v1667 = vtanh.pop %v1659
    %v1668 = vsub.f32 1.0, %v1482
    %v1669 = vsub.f32 1.0, %v1497
    %v1670 = vsub.f32 1.0, %v1512
    %v1671 = vsub.f32 1.0, %v1527
    %v1672 = vsub.f32 1.0, %v1542
    %v1673 = vsub.f32 1.0, %v1557
    %v1674 = vsub.f32 1.0, %v1572
    %v1675 = vsub.f32 1.0, %v1587
    %1684 = vrot.lane.b32.xlu0 %v1660, 96
    %v1685 = vpop.permute.xlu0 %1684
    %1686 = vrot.lane.b32.xlu0 %v1661, 96
    %v1687 = vpop.permute.xlu0 %1686
    %1688 = vrot.lane.b32.xlu0 %v1662, 96
    %v1689 = vpop.permute.xlu0 %1688
    %1690 = vrot.lane.b32.xlu0 %v1663, 96
    %v1691 = vpop.permute.xlu0 %1690
    %1692 = vrot.lane.b32.xlu0 %v1664, 96
    %v1693 = vpop.permute.xlu0 %1692
    %1694 = vrot.lane.b32.xlu0 %v1665, 96
    %v1695 = vpop.permute.xlu0 %1694
    %1696 = vrot.lane.b32.xlu0 %v1666, 96
    %v1697 = vpop.permute.xlu0 %1696
    %1698 = vrot.lane.b32.xlu0 %v1667, 96
    %v1699 = vpop.permute.xlu0 %1698
    %v1708 = vmul.f32 %v1668, %v1685
    %v1709 = vmul.f32 %v1669, %v1687
    %v1710 = vmul.f32 %v1670, %v1689
    %v1711 = vmul.f32 %v1671, %v1691
    %v1712 = vmul.f32 %v1672, %v1693
    %v1713 = vmul.f32 %v1673, %v1695
    %v1714 = vmul.f32 %v1674, %v1697
    %v1715 = vmul.f32 %v1675, %v1699
    %v1716 = vrot.slane %v1240, 7
    %v1717 = vrot.slane %v1241, 7
    %v1718 = vrot.slane %v1243, 7
    %v1719 = vrot.slane %v1244, 7
    %v1720 = vrot.slane %v1245, 7
    %v1721 = vrot.slane %v1246, 7
    %v1722 = vrot.slane %v1247, 7
    %v1731 = vmul.f32 %v1482, %v1716
    %v1732 = vmul.f32 %v1497, %v1717
    %v1733 = vmul.f32 %v1512, %v1258
    %v1734 = vmul.f32 %v1527, %v1718
    %v1735 = vmul.f32 %v1542, %v1719
    %v1736 = vmul.f32 %v1557, %v1720
    %v1737 = vmul.f32 %v1572, %v1721
    %v1738 = vmul.f32 %v1587, %v1722
    %v1739 = vadd.f32 %v1708, %v1731
    %v1740 = vadd.f32 %v1709, %v1732
    %v1741 = vadd.f32 %v1710, %v1733
    %v1742 = vadd.f32 %v1711, %v1734
    %v1743 = vadd.f32 %v1712, %v1735
    %v1744 = vadd.f32 %v1713, %v1736
    %v1745 = vadd.f32 %v1714, %v1737
    %v1746 = vadd.f32 %v1715, %v1738
    %v1755 = vrot.slane %v1739, 2
    %v1756 = vrot.slane %v1740, 1
    %v1757 = vsel %vm752, %v1756, %v1755
    %v1758 = vsel %vm755, %v1741, %v1757
    %v1759 = vrot.slane %v1742, 7
    %v1760 = vsel %vm758, %v1759, %v1758
    %v1761 = vrot.slane %v1743, 6
    %v1762 = vsel %vm761, %v1761, %v1760
    %v1763 = vrot.slane %v1744, 5
    %v1764 = vsel %vm764, %v1763, %v1762
    %v1765 = vrot.slane %v1745, 4
    %v1766 = vsel %vm767, %v1765, %v1764
    %v1767 = vrot.slane %v1746, 3
    %v1768 = vsel %vm770, %v1767, %v1766
    %1769 = vrot.lane.b32.xlu0 %v1768, 96
    %v1770 = vpop.permute.xlu0 %1769
    %v1771 = vsel %vm238, %v1770, 0
    %1773 = vmatpush.msra.mxu0 0.0
    %1774 = vmatpush.msra.mxu0 0.0
    %1775 = vmatpush.msra.mxu0 0.0
    %1776 = vmatpush.msra.mxu0 0.0
    %1777 = vmatpush.msra.mxu0 0.0
    %1778 = vmatpush.msra.mxu0 0.0
    %1779 = vmatpush.msra.mxu0 0.0
    %1780 = vmatpush.msra.mxu0 0.0
    %1781 = vmatpush.msra.mxu0 0.0
    %1782 = vmatpush.msra.mxu0 0.0
    %1783 = vmatpush.msra.mxu0 0.0
    %1784 = vmatpush.msra.mxu0 0.0
    %1785 = vmatpush.msra.mxu0 %v385
    %1786 = vmatpush.msra.mxu0 %v384
    %1787 = vmatpush.msra.mxu0 %v383
    %1788 = vmatpush.msra.mxu0 %v382
    %1789 = vmatmul.f32.gmra.mxu0 %v1771
    %v1790 = vpop.f32.mrf.mxu0
    %v1791 = vadd.f32 %v741, %v1790
    %1792 = vdwg.mxu0
    %1793 = vrot.lane.b32.xlu0 %v1356, 96
    %v1794 = vpop.permute.xlu0 %1793
    %v1795 = vsel %vm238, %v1794, 0
    %1797 = vmatpush.msra.mxu0 0.0
    %1798 = vmatpush.msra.mxu0 0.0
    %1799 = vmatpush.msra.mxu0 0.0
    %1800 = vmatpush.msra.mxu0 0.0
    %1801 = vmatpush.msra.mxu0 0.0
    %1802 = vmatpush.msra.mxu0 0.0
    %1803 = vmatpush.msra.mxu0 0.0
    %1804 = vmatpush.msra.mxu0 0.0
    %1805 = vmatpush.msra.mxu0 0.0
    %1806 = vmatpush.msra.mxu0 0.0
    %1807 = vmatpush.msra.mxu0 0.0
    %1808 = vmatpush.msra.mxu0 0.0
    %1809 = vmatpush.msra.mxu0 %v390
    %1810 = vmatpush.msra.mxu0 %v389
    %1811 = vmatpush.msra.mxu0 %v388
    %1812 = vmatpush.msra.mxu0 %v387
    %1813 = vmatmul.f32.gmra.mxu0 %v1795
    %v1814 = vpop.f32.mrf.mxu0
    %v1815 = vadd.f32 %v797, %v1814
    %1816 = vdwg.mxu0
    %v1817 = vadd.f32 %v1791, %v1815
    %v1818 = vxor.u32 %v1817, 2147483648
    %v1819 = vmul.f32 %v1818, 1.442695
    %v1820 = vpow.pop %v1819
    %v1821 = vadd.f32 %v1820, 1.0
    %v1822 = vrcp.pop %v1821
    %v1823 = vmul.f32 %v1821, %v1822
    %v1824 = vsub.f32 1.0, %v1823
    %v1825 = vmul.f32 %v1822, %v1824
    %v1826 = vadd.f32 %v1822, %v1825
    %vm1827 = vweird.f32 %v1821
    %vm1828 = vweird.f32 %v1822
    %vm1829 = vmor %vm1827, %vm1828
    %v1830 = vsel %vm1829, %v1822, %v1826
    %v1831 = vand.u32 2147483647, %v1821
    %vm1832 = vcmp.eq.f32.partialorder %v1831, 8.507059e+37
    %v1833 = vand.u32 %v1821, 2147483648
    %v1834 = vor.u32 1.1754944e-38, %v1833
    %v1835 = vsel %vm1832, %v1834, %v1830
    %v1836 = vmul.f32 1.0, %v1835
    %1838 = vrot.lane.b32.xlu0 %v1815, 64
    %v1839 = vpop.permute.xlu0 %1838
    %v1841 = vmul.f32 %v1836, %v1839
    %1843 = vrot.lane.b32.xlu0 %v1841, 64
    %v1844 = vpop.permute.xlu0 %1843
    %v1846 = vadd.f32 %v1791, %v1844
    %v1847 = vtanh.pop %v1846
    %v1848 = vsub.f32 1.0, %v1836
    %1850 = vrot.lane.b32.xlu0 %v1847, 96
    %v1851 = vpop.permute.xlu0 %1850
    %v1853 = vmul.f32 %v1848, %v1851
    %v1854 = vmul.f32 %v1836, %v1356
    %v1855 = vadd.f32 %v1853, %v1854
    %vm1856 = vcmp.eq.s32.totalorder %v393, 2
    %v1858 = vrot.slane %v1855, 1
    %v1859 = vrot.slane %v1855, 2
    %v1860 = vrot.slane %v1855, 3
    %v1861 = vrot.slane %v1855, 4
    %v1862 = vrot.slane %v1855, 5
    %v1863 = vrot.slane %v1855, 6
    %v1864 = vrot.slane %v1855, 7
    %v1865 = vsel %vm1856, 1, 0
    %vm1866 = vcmp.eq.s32.totalorder %v1865, 1
    %v1867 = vperm.slane %v1855, 0
    %v1868 = vperm.slane %v1858, 0
    %v1869 = vperm.slane %v1859, 0
    %v1870 = vperm.slane %v1860, 0
    %v1871 = vperm.slane %v1861, 0
    %v1872 = vperm.slane %v1862, 0
    %v1873 = vperm.slane %v1863, 0
    %v1874 = vperm.slane %v1864, 0
    %v1883 = vsel %vm1866, %v1867, %v1384
    %v1884 = vsel %vm1866, %v1868, %v1385
    %v1885 = vsel %vm1866, %v1869, %v1386
    %v1886 = vsel %vm1866, %v1870, %v1387
    %v1887 = vsel %vm1866, %v1871, %v1388
    %v1888 = vsel %vm1866, %v1872, %v1389
    %v1889 = vsel %vm1866, %v1873, %v1390
    %v1890 = vsel %vm1866, %v1874, %v1391
    %1891 = vmatpush.msra.mxu0 0.0
    %1892 = vmatpush.msra.mxu0 0.0
    %1893 = vmatpush.msra.mxu0 0.0
    %1894 = vmatpush.msra.mxu0 0.0
    %1895 = vmatpush.msra.mxu0 0.0
    %1896 = vmatpush.msra.mxu0 0.0
    %1897 = vmatpush.msra.mxu0 0.0
    %1898 = vmatpush.msra.mxu0 0.0
    %1899 = vmatpush.msra.mxu0 0.0
    %1900 = vmatpush.msra.mxu0 0.0
    %1901 = vmatpush.msra.mxu0 0.0
    %1902 = vmatpush.msra.mxu0 0.0
    %1903 = vmatpush.msra.mxu0 %v380
    %1904 = vmatpush.msra.mxu0 %v379
    %1905 = vmatpush.msra.mxu0 %v378
    %1906 = vmatpush.msra.mxu0 %v377
    %1907 = vmatmul.f32.gmra.mxu0 %v1771
    %v1908 = vpop.f32.mrf.mxu0
    %v1909 = vadd.f32 %v395, %v1908
    %1910 = vdwg.mxu0
    %v1912 = vrot.slane %v1909, 5
    %v1913 = vrot.slane %v1909, 6
    %v1914 = vrot.slane %v1909, 7
    %v1915 = vrot.slane %v1909, 1
    %v1916 = vrot.slane %v1909, 2
    %v1917 = vrot.slane %v1909, 3
    %v1918 = vrot.slane %v1909, 4
    %v1927 = vadd.f32 %v354, %v1912
    %v1928 = vadd.f32 %v357, %v1913
    %v1929 = vadd.f32 %v360, %v1914
    %v1930 = vadd.f32 %v363, %v1909
    %v1931 = vadd.f32 %v366, %v1915
    %v1932 = vadd.f32 %v369, %v1916
    %v1933 = vadd.f32 %v372, %v1917
    %v1934 = vadd.f32 %v375, %v1918
    %v1935 = vxor.u32 %v1927, 2147483648
    %v1936 = vxor.u32 %v1928, 2147483648
    %v1937 = vxor.u32 %v1929, 2147483648
    %v1938 = vxor.u32 %v1930, 2147483648
    %v1939 = vxor.u32 %v1931, 2147483648
    %v1940 = vxor.u32 %v1932, 2147483648
    %v1941 = vxor.u32 %v1933, 2147483648
    %v1942 = vxor.u32 %v1934, 2147483648
    %v1943 = vmul.f32 %v1935, 1.442695
    %v1944 = vpow.pop %v1943
    %v1945 = vmul.f32 %v1936, 1.442695
    %v1946 = vpow.pop %v1945
    %v1947 = vmul.f32 %v1937, 1.442695
    %v1948 = vpow.pop %v1947
    %v1949 = vmul.f32 %v1938, 1.442695
    %v1950 = vpow.pop %v1949
    %v1951 = vmul.f32 %v1939, 1.442695
    %v1952 = vpow.pop %v1951
    %v1953 = vmul.f32 %v1940, 1.442695
    %v1954 = vpow.pop %v1953
    %v1955 = vmul.f32 %v1941, 1.442695
    %v1956 = vpow.pop %v1955
    %v1957 = vmul.f32 %v1942, 1.442695
    %v1958 = vpow.pop %v1957
    %v1959 = vadd.f32 %v1944, 1.0
    %v1960 = vadd.f32 %v1946, 1.0
    %v1961 = vadd.f32 %v1948, 1.0
    %v1962 = vadd.f32 %v1950, 1.0
    %v1963 = vadd.f32 %v1952, 1.0
    %v1964 = vadd.f32 %v1954, 1.0
    %v1965 = vadd.f32 %v1956, 1.0
    %v1966 = vadd.f32 %v1958, 1.0
    %v1967 = vrcp.pop %v1959
    %v1968 = vmul.f32 %v1959, %v1967
    %v1969 = vsub.f32 1.0, %v1968
    %v1970 = vmul.f32 %v1967, %v1969
    %v1971 = vadd.f32 %v1967, %v1970
    %vm1972 = vweird.f32 %v1959
    %vm1973 = vweird.f32 %v1967
    %vm1974 = vmor %vm1972, %vm1973
    %v1975 = vsel %vm1974, %v1967, %v1971
    %v1976 = vand.u32 2147483647, %v1959
    %vm1977 = vcmp.eq.f32.partialorder %v1976, 8.507059e+37
    %v1978 = vand.u32 %v1959, 2147483648
    %v1979 = vor.u32 1.1754944e-38, %v1978
    %v1980 = vsel %vm1977, %v1979, %v1975
    %v1981 = vmul.f32 1.0, %v1980
    %v1982 = vrcp.pop %v1960
    %v1983 = vmul.f32 %v1960, %v1982
    %v1984 = vsub.f32 1.0, %v1983
    %v1985 = vmul.f32 %v1982, %v1984
    %v1986 = vadd.f32 %v1982, %v1985
    %vm1987 = vweird.f32 %v1960
    %vm1988 = vweird.f32 %v1982
    %vm1989 = vmor %vm1987, %vm1988
    %v1990 = vsel %vm1989, %v1982, %v1986
    %v1991 = vand.u32 2147483647, %v1960
    %vm1992 = vcmp.eq.f32.partialorder %v1991, 8.507059e+37
    %v1993 = vand.u32 %v1960, 2147483648
    %v1994 = vor.u32 1.1754944e-38, %v1993
    %v1995 = vsel %vm1992, %v1994, %v1990
    %v1996 = vmul.f32 1.0, %v1995
    %v1997 = vrcp.pop %v1961
    %v1998 = vmul.f32 %v1961, %v1997
    %v1999 = vsub.f32 1.0, %v1998
    %v2000 = vmul.f32 %v1997, %v1999
    %v2001 = vadd.f32 %v1997, %v2000
    %vm2002 = vweird.f32 %v1961
    %vm2003 = vweird.f32 %v1997
    %vm2004 = vmor %vm2002, %vm2003
    %v2005 = vsel %vm2004, %v1997, %v2001
    %v2006 = vand.u32 2147483647, %v1961
    %vm2007 = vcmp.eq.f32.partialorder %v2006, 8.507059e+37
    %v2008 = vand.u32 %v1961, 2147483648
    %v2009 = vor.u32 1.1754944e-38, %v2008
    %v2010 = vsel %vm2007, %v2009, %v2005
    %v2011 = vmul.f32 1.0, %v2010
    %v2012 = vrcp.pop %v1962
    %v2013 = vmul.f32 %v1962, %v2012
    %v2014 = vsub.f32 1.0, %v2013
    %v2015 = vmul.f32 %v2012, %v2014
    %v2016 = vadd.f32 %v2012, %v2015
    %vm2017 = vweird.f32 %v1962
    %vm2018 = vweird.f32 %v2012
    %vm2019 = vmor %vm2017, %vm2018
    %v2020 = vsel %vm2019, %v2012, %v2016
    %v2021 = vand.u32 2147483647, %v1962
    %vm2022 = vcmp.eq.f32.partialorder %v2021, 8.507059e+37
    %v2023 = vand.u32 %v1962, 2147483648
    %v2024 = vor.u32 1.1754944e-38, %v2023
    %v2025 = vsel %vm2022, %v2024, %v2020
    %v2026 = vmul.f32 1.0, %v2025
    %v2027 = vrcp.pop %v1963
    %v2028 = vmul.f32 %v1963, %v2027
    %v2029 = vsub.f32 1.0, %v2028
    %v2030 = vmul.f32 %v2027, %v2029
    %v2031 = vadd.f32 %v2027, %v2030
    %vm2032 = vweird.f32 %v1963
    %vm2033 = vweird.f32 %v2027
    %vm2034 = vmor %vm2032, %vm2033
    %v2035 = vsel %vm2034, %v2027, %v2031
    %v2036 = vand.u32 2147483647, %v1963
    %vm2037 = vcmp.eq.f32.partialorder %v2036, 8.507059e+37
    %v2038 = vand.u32 %v1963, 2147483648
    %v2039 = vor.u32 1.1754944e-38, %v2038
    %v2040 = vsel %vm2037, %v2039, %v2035
    %v2041 = vmul.f32 1.0, %v2040
    %v2042 = vrcp.pop %v1964
    %v2043 = vmul.f32 %v1964, %v2042
    %v2044 = vsub.f32 1.0, %v2043
    %v2045 = vmul.f32 %v2042, %v2044
    %v2046 = vadd.f32 %v2042, %v2045
    %vm2047 = vweird.f32 %v1964
    %vm2048 = vweird.f32 %v2042
    %vm2049 = vmor %vm2047, %vm2048
    %v2050 = vsel %vm2049, %v2042, %v2046
    %v2051 = vand.u32 2147483647, %v1964
    %vm2052 = vcmp.eq.f32.partialorder %v2051, 8.507059e+37
    %v2053 = vand.u32 %v1964, 2147483648
    %v2054 = vor.u32 1.1754944e-38, %v2053
    %v2055 = vsel %vm2052, %v2054, %v2050
    %v2056 = vmul.f32 1.0, %v2055
    %v2057 = vrcp.pop %v1965
    %v2058 = vmul.f32 %v1965, %v2057
    %v2059 = vsub.f32 1.0, %v2058
    %v2060 = vmul.f32 %v2057, %v2059
    %v2061 = vadd.f32 %v2057, %v2060
    %vm2062 = vweird.f32 %v1965
    %vm2063 = vweird.f32 %v2057
    %vm2064 = vmor %vm2062, %vm2063
    %v2065 = vsel %vm2064, %v2057, %v2061
    %v2066 = vand.u32 2147483647, %v1965
    %vm2067 = vcmp.eq.f32.partialorder %v2066, 8.507059e+37
    %v2068 = vand.u32 %v1965, 2147483648
    %v2069 = vor.u32 1.1754944e-38, %v2068
    %v2070 = vsel %vm2067, %v2069, %v2065
    %v2071 = vmul.f32 1.0, %v2070
    %v2072 = vrcp.pop %v1966
    %v2073 = vmul.f32 %v1966, %v2072
    %v2074 = vsub.f32 1.0, %v2073
    %v2075 = vmul.f32 %v2072, %v2074
    %v2076 = vadd.f32 %v2072, %v2075
    %vm2077 = vweird.f32 %v1966
    %vm2078 = vweird.f32 %v2072
    %vm2079 = vmor %vm2077, %vm2078
    %v2080 = vsel %vm2079, %v2072, %v2076
    %v2081 = vand.u32 2147483647, %v1966
    %vm2082 = vcmp.eq.f32.partialorder %v2081, 8.507059e+37
    %v2083 = vand.u32 %v1966, 2147483648
    %v2084 = vor.u32 1.1754944e-38, %v2083
    %v2085 = vsel %vm2082, %v2084, %v2080
    %v2086 = vmul.f32 1.0, %v2085
    %2087 = vrot.lane.b32.xlu0 %v1912, 64
    %v2088 = vpop.permute.xlu0 %2087
    %2089 = vrot.lane.b32.xlu0 %v1913, 64
    %v2090 = vpop.permute.xlu0 %2089
    %2091 = vrot.lane.b32.xlu0 %v1914, 64
    %v2092 = vpop.permute.xlu0 %2091
    %2093 = vrot.lane.b32.xlu0 %v1909, 64
    %v2094 = vpop.permute.xlu0 %2093
    %2095 = vrot.lane.b32.xlu0 %v1915, 64
    %v2096 = vpop.permute.xlu0 %2095
    %2097 = vrot.lane.b32.xlu0 %v1916, 64
    %v2098 = vpop.permute.xlu0 %2097
    %2099 = vrot.lane.b32.xlu0 %v1917, 64
    %v2100 = vpop.permute.xlu0 %2099
    %2101 = vrot.lane.b32.xlu0 %v1918, 64
    %v2102 = vpop.permute.xlu0 %2101
    %v2111 = vmul.f32 %v1981, %v2088
    %v2112 = vmul.f32 %v1996, %v2090
    %v2113 = vmul.f32 %v2011, %v2092
    %v2114 = vmul.f32 %v2026, %v2094
    %v2115 = vmul.f32 %v2041, %v2096
    %v2116 = vmul.f32 %v2056, %v2098
    %v2117 = vmul.f32 %v2071, %v2100
    %v2118 = vmul.f32 %v2086, %v2102
    %2127 = vrot.lane.b32.xlu0 %v2111, 64
    %v2128 = vpop.permute.xlu0 %2127
    %2129 = vrot.lane.b32.xlu0 %v2112, 64
    %v2130 = vpop.permute.xlu0 %2129
    %2131 = vrot.lane.b32.xlu0 %v2113, 64
    %v2132 = vpop.permute.xlu0 %2131
    %2133 = vrot.lane.b32.xlu0 %v2114, 64
    %v2134 = vpop.permute.xlu0 %2133
    %2135 = vrot.lane.b32.xlu0 %v2115, 64
    %v2136 = vpop.permute.xlu0 %2135
    %2137 = vrot.lane.b32.xlu0 %v2116, 64
    %v2138 = vpop.permute.xlu0 %2137
    %2139 = vrot.lane.b32.xlu0 %v2117, 64
    %v2140 = vpop.permute.xlu0 %2139
    %2141 = vrot.lane.b32.xlu0 %v2118, 64
    %v2142 = vpop.permute.xlu0 %2141
    %v2151 = vadd.f32 %v354, %v2128
    %v2152 = vadd.f32 %v357, %v2130
    %v2153 = vadd.f32 %v360, %v2132
    %v2154 = vadd.f32 %v363, %v2134
    %v2155 = vadd.f32 %v366, %v2136
    %v2156 = vadd.f32 %v369, %v2138
    %v2157 = vadd.f32 %v372, %v2140
    %v2158 = vadd.f32 %v375, %v2142
    %v2159 = vtanh.pop %v2151
    %v2160 = vtanh.pop %v2152
    %v2161 = vtanh.pop %v2153
    %v2162 = vtanh.pop %v2154
    %v2163 = vtanh.pop %v2155
    %v2164 = vtanh.pop %v2156
    %v2165 = vtanh.pop %v2157
    %v2166 = vtanh.pop %v2158
    %v2167 = vsub.f32 1.0, %v1981
    %v2168 = vsub.f32 1.0, %v1996
    %v2169 = vsub.f32 1.0, %v2011
    %v2170 = vsub.f32 1.0, %v2026
    %v2171 = vsub.f32 1.0, %v2041
    %v2172 = vsub.f32 1.0, %v2056
    %v2173 = vsub.f32 1.0, %v2071
    %v2174 = vsub.f32 1.0, %v2086
    %2183 = vrot.lane.b32.xlu0 %v2159, 96
    %v2184 = vpop.permute.xlu0 %2183
    %2185 = vrot.lane.b32.xlu0 %v2160, 96
    %v2186 = vpop.permute.xlu0 %2185
    %2187 = vrot.lane.b32.xlu0 %v2161, 96
    %v2188 = vpop.permute.xlu0 %2187
    %2189 = vrot.lane.b32.xlu0 %v2162, 96
    %v2190 = vpop.permute.xlu0 %2189
    %2191 = vrot.lane.b32.xlu0 %v2163, 96
    %v2192 = vpop.permute.xlu0 %2191
    %2193 = vrot.lane.b32.xlu0 %v2164, 96
    %v2194 = vpop.permute.xlu0 %2193
    %2195 = vrot.lane.b32.xlu0 %v2165, 96
    %v2196 = vpop.permute.xlu0 %2195
    %2197 = vrot.lane.b32.xlu0 %v2166, 96
    %v2198 = vpop.permute.xlu0 %2197
    %v2207 = vmul.f32 %v2167, %v2184
    %v2208 = vmul.f32 %v2168, %v2186
    %v2209 = vmul.f32 %v2169, %v2188
    %v2210 = vmul.f32 %v2170, %v2190
    %v2211 = vmul.f32 %v2171, %v2192
    %v2212 = vmul.f32 %v2172, %v2194
    %v2213 = vmul.f32 %v2173, %v2196
    %v2214 = vmul.f32 %v2174, %v2198
    %v2215 = vrot.slane %v1739, 7
    %v2216 = vrot.slane %v1740, 7
    %v2217 = vrot.slane %v1741, 7
    %v2218 = vrot.slane %v1743, 7
    %v2219 = vrot.slane %v1744, 7
    %v2220 = vrot.slane %v1745, 7
    %v2221 = vrot.slane %v1746, 7
    %v2230 = vmul.f32 %v1981, %v2215
    %v2231 = vmul.f32 %v1996, %v2216
    %v2232 = vmul.f32 %v2011, %v2217
    %v2233 = vmul.f32 %v2026, %v1759
    %v2234 = vmul.f32 %v2041, %v2218
    %v2235 = vmul.f32 %v2056, %v2219
    %v2236 = vmul.f32 %v2071, %v2220
    %v2237 = vmul.f32 %v2086, %v2221
    %v2238 = vadd.f32 %v2207, %v2230
    %v2239 = vadd.f32 %v2208, %v2231
    %v2240 = vadd.f32 %v2209, %v2232
    %v2241 = vadd.f32 %v2210, %v2233
    %v2242 = vadd.f32 %v2211, %v2234
    %v2243 = vadd.f32 %v2212, %v2235
    %v2244 = vadd.f32 %v2213, %v2236
    %v2245 = vadd.f32 %v2214, %v2237
    %v2254 = vrot.slane %v2238, 3
    %v2255 = vrot.slane %v2239, 2
    %v2256 = vsel %vm752, %v2255, %v2254
    %v2257 = vrot.slane %v2240, 1
    %v2258 = vsel %vm755, %v2257, %v2256
    %v2259 = vsel %vm758, %v2241, %v2258
    %v2260 = vrot.slane %v2242, 7
    %v2261 = vsel %vm761, %v2260, %v2259
    %v2262 = vrot.slane %v2243, 6
    %v2263 = vsel %vm764, %v2262, %v2261
    %v2264 = vrot.slane %v2244, 5
    %v2265 = vsel %vm767, %v2264, %v2263
    %v2266 = vrot.slane %v2245, 4
    %v2267 = vsel %vm770, %v2266, %v2265
    %2268 = vrot.lane.b32.xlu0 %v2267, 96
    %v2269 = vpop.permute.xlu0 %2268
    %v2270 = vsel %vm238, %v2269, 0
    %2272 = vmatpush.msra.mxu0 0.0
    %2273 = vmatpush.msra.mxu0 0.0
    %2274 = vmatpush.msra.mxu0 0.0
    %2275 = vmatpush.msra.mxu0 0.0
    %2276 = vmatpush.msra.mxu0 0.0
    %2277 = vmatpush.msra.mxu0 0.0
    %2278 = vmatpush.msra.mxu0 0.0
    %2279 = vmatpush.msra.mxu0 0.0
    %2280 = vmatpush.msra.mxu0 0.0
    %2281 = vmatpush.msra.mxu0 0.0
    %2282 = vmatpush.msra.mxu0 0.0
    %2283 = vmatpush.msra.mxu0 0.0
    %2284 = vmatpush.msra.mxu0 %v385
    %2285 = vmatpush.msra.mxu0 %v384
    %2286 = vmatpush.msra.mxu0 %v383
    %2287 = vmatpush.msra.mxu0 %v382
    %2288 = vmatmul.f32.gmra.mxu0 %v2270
    %v2289 = vpop.f32.mrf.mxu0
    %v2290 = vadd.f32 %v741, %v2289
    %2291 = vdwg.mxu0
    %2292 = vrot.lane.b32.xlu0 %v1855, 96
    %v2293 = vpop.permute.xlu0 %2292
    %v2294 = vsel %vm238, %v2293, 0
    %2296 = vmatpush.msra.mxu0 0.0
    %2297 = vmatpush.msra.mxu0 0.0
    %2298 = vmatpush.msra.mxu0 0.0
    %2299 = vmatpush.msra.mxu0 0.0
    %2300 = vmatpush.msra.mxu0 0.0
    %2301 = vmatpush.msra.mxu0 0.0
    %2302 = vmatpush.msra.mxu0 0.0
    %2303 = vmatpush.msra.mxu0 0.0
    %2304 = vmatpush.msra.mxu0 0.0
    %2305 = vmatpush.msra.mxu0 0.0
    %2306 = vmatpush.msra.mxu0 0.0
    %2307 = vmatpush.msra.mxu0 0.0
    %2308 = vmatpush.msra.mxu0 %v390
    %2309 = vmatpush.msra.mxu0 %v389
    %2310 = vmatpush.msra.mxu0 %v388
    %2311 = vmatpush.msra.mxu0 %v387
    %2312 = vmatmul.f32.gmra.mxu0 %v2294
    %v2313 = vpop.f32.mrf.mxu0
    %v2314 = vadd.f32 %v797, %v2313
    %2315 = vdwg.mxu0
    %v2316 = vadd.f32 %v2290, %v2314
    %v2317 = vxor.u32 %v2316, 2147483648
    %v2318 = vmul.f32 %v2317, 1.442695
    %v2319 = vpow.pop %v2318
    %v2320 = vadd.f32 %v2319, 1.0
    %v2321 = vrcp.pop %v2320
    %v2322 = vmul.f32 %v2320, %v2321
    %v2323 = vsub.f32 1.0, %v2322
    %v2324 = vmul.f32 %v2321, %v2323
    %v2325 = vadd.f32 %v2321, %v2324
    %vm2326 = vweird.f32 %v2320
    %vm2327 = vweird.f32 %v2321
    %vm2328 = vmor %vm2326, %vm2327
    %v2329 = vsel %vm2328, %v2321, %v2325
    %v2330 = vand.u32 2147483647, %v2320
    %vm2331 = vcmp.eq.f32.partialorder %v2330, 8.507059e+37
    %v2332 = vand.u32 %v2320, 2147483648
    %v2333 = vor.u32 1.1754944e-38, %v2332
    %v2334 = vsel %vm2331, %v2333, %v2329
    %v2335 = vmul.f32 1.0, %v2334
    %2337 = vrot.lane.b32.xlu0 %v2314, 64
    %v2338 = vpop.permute.xlu0 %2337
    %v2340 = vmul.f32 %v2335, %v2338
    %2342 = vrot.lane.b32.xlu0 %v2340, 64
    %v2343 = vpop.permute.xlu0 %2342
    %v2345 = vadd.f32 %v2290, %v2343
    %v2346 = vtanh.pop %v2345
    %v2347 = vsub.f32 1.0, %v2335
    %2349 = vrot.lane.b32.xlu0 %v2346, 96
    %v2350 = vpop.permute.xlu0 %2349
    %v2352 = vmul.f32 %v2347, %v2350
    %v2353 = vmul.f32 %v2335, %v1855
    %v2354 = vadd.f32 %v2352, %v2353
    %vm2355 = vcmp.eq.s32.totalorder %v393, 3
    %v2357 = vrot.slane %v2354, 1
    %v2358 = vrot.slane %v2354, 2
    %v2359 = vrot.slane %v2354, 3
    %v2360 = vrot.slane %v2354, 4
    %v2361 = vrot.slane %v2354, 5
    %v2362 = vrot.slane %v2354, 6
    %v2363 = vrot.slane %v2354, 7
    %v2364 = vsel %vm2355, 1, 0
    %vm2365 = vcmp.eq.s32.totalorder %v2364, 1
    %v2366 = vperm.slane %v2354, 0
    %v2367 = vperm.slane %v2357, 0
    %v2368 = vperm.slane %v2358, 0
    %v2369 = vperm.slane %v2359, 0
    %v2370 = vperm.slane %v2360, 0
    %v2371 = vperm.slane %v2361, 0
    %v2372 = vperm.slane %v2362, 0
    %v2373 = vperm.slane %v2363, 0
    %v2382 = vsel %vm2365, %v2366, %v1883
    %v2383 = vsel %vm2365, %v2367, %v1884
    %v2384 = vsel %vm2365, %v2368, %v1885
    %v2385 = vsel %vm2365, %v2369, %v1886
    %v2386 = vsel %vm2365, %v2370, %v1887
    %v2387 = vsel %vm2365, %v2371, %v1888
    %v2388 = vsel %vm2365, %v2372, %v1889
    %v2389 = vsel %vm2365, %v2373, %v1890
    %2390 = vmatpush.msra.mxu0 0.0
    %2391 = vmatpush.msra.mxu0 0.0
    %2392 = vmatpush.msra.mxu0 0.0
    %2393 = vmatpush.msra.mxu0 0.0
    %2394 = vmatpush.msra.mxu0 0.0
    %2395 = vmatpush.msra.mxu0 0.0
    %2396 = vmatpush.msra.mxu0 0.0
    %2397 = vmatpush.msra.mxu0 0.0
    %2398 = vmatpush.msra.mxu0 0.0
    %2399 = vmatpush.msra.mxu0 0.0
    %2400 = vmatpush.msra.mxu0 0.0
    %2401 = vmatpush.msra.mxu0 0.0
    %2402 = vmatpush.msra.mxu0 %v380
    %2403 = vmatpush.msra.mxu0 %v379
    %2404 = vmatpush.msra.mxu0 %v378
    %2405 = vmatpush.msra.mxu0 %v377
    %2406 = vmatmul.f32.gmra.mxu0 %v2270
    %v2407 = vpop.f32.mrf.mxu0
    %v2408 = vadd.f32 %v395, %v2407
    %2409 = vdwg.mxu0
    %v2411 = vrot.slane %v2408, 4
    %v2412 = vrot.slane %v2408, 5
    %v2413 = vrot.slane %v2408, 6
    %v2414 = vrot.slane %v2408, 7
    %v2415 = vrot.slane %v2408, 1
    %v2416 = vrot.slane %v2408, 2
    %v2417 = vrot.slane %v2408, 3
    %v2426 = vadd.f32 %v354, %v2411
    %v2427 = vadd.f32 %v357, %v2412
    %v2428 = vadd.f32 %v360, %v2413
    %v2429 = vadd.f32 %v363, %v2414
    %v2430 = vadd.f32 %v366, %v2408
    %v2431 = vadd.f32 %v369, %v2415
    %v2432 = vadd.f32 %v372, %v2416
    %v2433 = vadd.f32 %v375, %v2417
    %v2434 = vxor.u32 %v2426, 2147483648
    %v2435 = vxor.u32 %v2427, 2147483648
    %v2436 = vxor.u32 %v2428, 2147483648
    %v2437 = vxor.u32 %v2429, 2147483648
    %v2438 = vxor.u32 %v2430, 2147483648
    %v2439 = vxor.u32 %v2431, 2147483648
    %v2440 = vxor.u32 %v2432, 2147483648
    %v2441 = vxor.u32 %v2433, 2147483648
    %v2442 = vmul.f32 %v2434, 1.442695
    %v2443 = vpow.pop %v2442
    %v2444 = vmul.f32 %v2435, 1.442695
    %v2445 = vpow.pop %v2444
    %v2446 = vmul.f32 %v2436, 1.442695
    %v2447 = vpow.pop %v2446
    %v2448 = vmul.f32 %v2437, 1.442695
    %v2449 = vpow.pop %v2448
    %v2450 = vmul.f32 %v2438, 1.442695
    %v2451 = vpow.pop %v2450
    %v2452 = vmul.f32 %v2439, 1.442695
    %v2453 = vpow.pop %v2452
    %v2454 = vmul.f32 %v2440, 1.442695
    %v2455 = vpow.pop %v2454
    %v2456 = vmul.f32 %v2441, 1.442695
    %v2457 = vpow.pop %v2456
    %v2458 = vadd.f32 %v2443, 1.0
    %v2459 = vadd.f32 %v2445, 1.0
    %v2460 = vadd.f32 %v2447, 1.0
    %v2461 = vadd.f32 %v2449, 1.0
    %v2462 = vadd.f32 %v2451, 1.0
    %v2463 = vadd.f32 %v2453, 1.0
    %v2464 = vadd.f32 %v2455, 1.0
    %v2465 = vadd.f32 %v2457, 1.0
    %v2466 = vrcp.pop %v2458
    %v2467 = vmul.f32 %v2458, %v2466
    %v2468 = vsub.f32 1.0, %v2467
    %v2469 = vmul.f32 %v2466, %v2468
    %v2470 = vadd.f32 %v2466, %v2469
    %vm2471 = vweird.f32 %v2458
    %vm2472 = vweird.f32 %v2466
    %vm2473 = vmor %vm2471, %vm2472
    %v2474 = vsel %vm2473, %v2466, %v2470
    %v2475 = vand.u32 2147483647, %v2458
    %vm2476 = vcmp.eq.f32.partialorder %v2475, 8.507059e+37
    %v2477 = vand.u32 %v2458, 2147483648
    %v2478 = vor.u32 1.1754944e-38, %v2477
    %v2479 = vsel %vm2476, %v2478, %v2474
    %v2480 = vmul.f32 1.0, %v2479
    %v2481 = vrcp.pop %v2459
    %v2482 = vmul.f32 %v2459, %v2481
    %v2483 = vsub.f32 1.0, %v2482
    %v2484 = vmul.f32 %v2481, %v2483
    %v2485 = vadd.f32 %v2481, %v2484
    %vm2486 = vweird.f32 %v2459
    %vm2487 = vweird.f32 %v2481
    %vm2488 = vmor %vm2486, %vm2487
    %v2489 = vsel %vm2488, %v2481, %v2485
    %v2490 = vand.u32 2147483647, %v2459
    %vm2491 = vcmp.eq.f32.partialorder %v2490, 8.507059e+37
    %v2492 = vand.u32 %v2459, 2147483648
    %v2493 = vor.u32 1.1754944e-38, %v2492
    %v2494 = vsel %vm2491, %v2493, %v2489
    %v2495 = vmul.f32 1.0, %v2494
    %v2496 = vrcp.pop %v2460
    %v2497 = vmul.f32 %v2460, %v2496
    %v2498 = vsub.f32 1.0, %v2497
    %v2499 = vmul.f32 %v2496, %v2498
    %v2500 = vadd.f32 %v2496, %v2499
    %vm2501 = vweird.f32 %v2460
    %vm2502 = vweird.f32 %v2496
    %vm2503 = vmor %vm2501, %vm2502
    %v2504 = vsel %vm2503, %v2496, %v2500
    %v2505 = vand.u32 2147483647, %v2460
    %vm2506 = vcmp.eq.f32.partialorder %v2505, 8.507059e+37
    %v2507 = vand.u32 %v2460, 2147483648
    %v2508 = vor.u32 1.1754944e-38, %v2507
    %v2509 = vsel %vm2506, %v2508, %v2504
    %v2510 = vmul.f32 1.0, %v2509
    %v2511 = vrcp.pop %v2461
    %v2512 = vmul.f32 %v2461, %v2511
    %v2513 = vsub.f32 1.0, %v2512
    %v2514 = vmul.f32 %v2511, %v2513
    %v2515 = vadd.f32 %v2511, %v2514
    %vm2516 = vweird.f32 %v2461
    %vm2517 = vweird.f32 %v2511
    %vm2518 = vmor %vm2516, %vm2517
    %v2519 = vsel %vm2518, %v2511, %v2515
    %v2520 = vand.u32 2147483647, %v2461
    %vm2521 = vcmp.eq.f32.partialorder %v2520, 8.507059e+37
    %v2522 = vand.u32 %v2461, 2147483648
    %v2523 = vor.u32 1.1754944e-38, %v2522
    %v2524 = vsel %vm2521, %v2523, %v2519
    %v2525 = vmul.f32 1.0, %v2524
    %v2526 = vrcp.pop %v2462
    %v2527 = vmul.f32 %v2462, %v2526
    %v2528 = vsub.f32 1.0, %v2527
    %v2529 = vmul.f32 %v2526, %v2528
    %v2530 = vadd.f32 %v2526, %v2529
    %vm2531 = vweird.f32 %v2462
    %vm2532 = vweird.f32 %v2526
    %vm2533 = vmor %vm2531, %vm2532
    %v2534 = vsel %vm2533, %v2526, %v2530
    %v2535 = vand.u32 2147483647, %v2462
    %vm2536 = vcmp.eq.f32.partialorder %v2535, 8.507059e+37
    %v2537 = vand.u32 %v2462, 2147483648
    %v2538 = vor.u32 1.1754944e-38, %v2537
    %v2539 = vsel %vm2536, %v2538, %v2534
    %v2540 = vmul.f32 1.0, %v2539
    %v2541 = vrcp.pop %v2463
    %v2542 = vmul.f32 %v2463, %v2541
    %v2543 = vsub.f32 1.0, %v2542
    %v2544 = vmul.f32 %v2541, %v2543
    %v2545 = vadd.f32 %v2541, %v2544
    %vm2546 = vweird.f32 %v2463
    %vm2547 = vweird.f32 %v2541
    %vm2548 = vmor %vm2546, %vm2547
    %v2549 = vsel %vm2548, %v2541, %v2545
    %v2550 = vand.u32 2147483647, %v2463
    %vm2551 = vcmp.eq.f32.partialorder %v2550, 8.507059e+37
    %v2552 = vand.u32 %v2463, 2147483648
    %v2553 = vor.u32 1.1754944e-38, %v2552
    %v2554 = vsel %vm2551, %v2553, %v2549
    %v2555 = vmul.f32 1.0, %v2554
    %v2556 = vrcp.pop %v2464
    %v2557 = vmul.f32 %v2464, %v2556
    %v2558 = vsub.f32 1.0, %v2557
    %v2559 = vmul.f32 %v2556, %v2558
    %v2560 = vadd.f32 %v2556, %v2559
    %vm2561 = vweird.f32 %v2464
    %vm2562 = vweird.f32 %v2556
    %vm2563 = vmor %vm2561, %vm2562
    %v2564 = vsel %vm2563, %v2556, %v2560
    %v2565 = vand.u32 2147483647, %v2464
    %vm2566 = vcmp.eq.f32.partialorder %v2565, 8.507059e+37
    %v2567 = vand.u32 %v2464, 2147483648
    %v2568 = vor.u32 1.1754944e-38, %v2567
    %v2569 = vsel %vm2566, %v2568, %v2564
    %v2570 = vmul.f32 1.0, %v2569
    %v2571 = vrcp.pop %v2465
    %v2572 = vmul.f32 %v2465, %v2571
    %v2573 = vsub.f32 1.0, %v2572
    %v2574 = vmul.f32 %v2571, %v2573
    %v2575 = vadd.f32 %v2571, %v2574
    %vm2576 = vweird.f32 %v2465
    %vm2577 = vweird.f32 %v2571
    %vm2578 = vmor %vm2576, %vm2577
    %v2579 = vsel %vm2578, %v2571, %v2575
    %v2580 = vand.u32 2147483647, %v2465
    %vm2581 = vcmp.eq.f32.partialorder %v2580, 8.507059e+37
    %v2582 = vand.u32 %v2465, 2147483648
    %v2583 = vor.u32 1.1754944e-38, %v2582
    %v2584 = vsel %vm2581, %v2583, %v2579
    %v2585 = vmul.f32 1.0, %v2584
    %2586 = vrot.lane.b32.xlu0 %v2411, 64
    %v2587 = vpop.permute.xlu0 %2586
    %2588 = vrot.lane.b32.xlu0 %v2412, 64
    %v2589 = vpop.permute.xlu0 %2588
    %2590 = vrot.lane.b32.xlu0 %v2413, 64
    %v2591 = vpop.permute.xlu0 %2590
    %2592 = vrot.lane.b32.xlu0 %v2414, 64
    %v2593 = vpop.permute.xlu0 %2592
    %2594 = vrot.lane.b32.xlu0 %v2408, 64
    %v2595 = vpop.permute.xlu0 %2594
    %2596 = vrot.lane.b32.xlu0 %v2415, 64
    %v2597 = vpop.permute.xlu0 %2596
    %2598 = vrot.lane.b32.xlu0 %v2416, 64
    %v2599 = vpop.permute.xlu0 %2598
    %2600 = vrot.lane.b32.xlu0 %v2417, 64
    %v2601 = vpop.permute.xlu0 %2600
    %v2610 = vmul.f32 %v2480, %v2587
    %v2611 = vmul.f32 %v2495, %v2589
    %v2612 = vmul.f32 %v2510, %v2591
    %v2613 = vmul.f32 %v2525, %v2593
    %v2614 = vmul.f32 %v2540, %v2595
    %v2615 = vmul.f32 %v2555, %v2597
    %v2616 = vmul.f32 %v2570, %v2599
    %v2617 = vmul.f32 %v2585, %v2601
    %2626 = vrot.lane.b32.xlu0 %v2610, 64
    %v2627 = vpop.permute.xlu0 %2626
    %2628 = vrot.lane.b32.xlu0 %v2611, 64
    %v2629 = vpop.permute.xlu0 %2628
    %2630 = vrot.lane.b32.xlu0 %v2612, 64
    %v2631 = vpop.permute.xlu0 %2630
    %2632 = vrot.lane.b32.xlu0 %v2613, 64
    %v2633 = vpop.permute.xlu0 %2632
    %2634 = vrot.lane.b32.xlu0 %v2614, 64
    %v2635 = vpop.permute.xlu0 %2634
    %2636 = vrot.lane.b32.xlu0 %v2615, 64
    %v2637 = vpop.permute.xlu0 %2636
    %2638 = vrot.lane.b32.xlu0 %v2616, 64
    %v2639 = vpop.permute.xlu0 %2638
    %2640 = vrot.lane.b32.xlu0 %v2617, 64
    %v2641 = vpop.permute.xlu0 %2640
    %v2650 = vadd.f32 %v354, %v2627
    %v2651 = vadd.f32 %v357, %v2629
    %v2652 = vadd.f32 %v360, %v2631
    %v2653 = vadd.f32 %v363, %v2633
    %v2654 = vadd.f32 %v366, %v2635
    %v2655 = vadd.f32 %v369, %v2637
    %v2656 = vadd.f32 %v372, %v2639
    %v2657 = vadd.f32 %v375, %v2641
    %v2658 = vtanh.pop %v2650
    %v2659 = vtanh.pop %v2651
    %v2660 = vtanh.pop %v2652
    %v2661 = vtanh.pop %v2653
    %v2662 = vtanh.pop %v2654
    %v2663 = vtanh.pop %v2655
    %v2664 = vtanh.pop %v2656
    %v2665 = vtanh.pop %v2657
    %v2666 = vsub.f32 1.0, %v2480
    %v2667 = vsub.f32 1.0, %v2495
    %v2668 = vsub.f32 1.0, %v2510
    %v2669 = vsub.f32 1.0, %v2525
    %v2670 = vsub.f32 1.0, %v2540
    %v2671 = vsub.f32 1.0, %v2555
    %v2672 = vsub.f32 1.0, %v2570
    %v2673 = vsub.f32 1.0, %v2585
    %2682 = vrot.lane.b32.xlu0 %v2658, 96
    %v2683 = vpop.permute.xlu0 %2682
    %2684 = vrot.lane.b32.xlu0 %v2659, 96
    %v2685 = vpop.permute.xlu0 %2684
    %2686 = vrot.lane.b32.xlu0 %v2660, 96
    %v2687 = vpop.permute.xlu0 %2686
    %2688 = vrot.lane.b32.xlu0 %v2661, 96
    %v2689 = vpop.permute.xlu0 %2688
    %2690 = vrot.lane.b32.xlu0 %v2662, 96
    %v2691 = vpop.permute.xlu0 %2690
    %2692 = vrot.lane.b32.xlu0 %v2663, 96
    %v2693 = vpop.permute.xlu0 %2692
    %2694 = vrot.lane.b32.xlu0 %v2664, 96
    %v2695 = vpop.permute.xlu0 %2694
    %2696 = vrot.lane.b32.xlu0 %v2665, 96
    %v2697 = vpop.permute.xlu0 %2696
    %v2706 = vmul.f32 %v2666, %v2683
    %v2707 = vmul.f32 %v2667, %v2685
    %v2708 = vmul.f32 %v2668, %v2687
    %v2709 = vmul.f32 %v2669, %v2689
    %v2710 = vmul.f32 %v2670, %v2691
    %v2711 = vmul.f32 %v2671, %v2693
    %v2712 = vmul.f32 %v2672, %v2695
    %v2713 = vmul.f32 %v2673, %v2697
    %v2714 = vrot.slane %v2238, 7
    %v2715 = vrot.slane %v2239, 7
    %v2716 = vrot.slane %v2240, 7
    %v2717 = vrot.slane %v2241, 7
    %v2718 = vrot.slane %v2243, 7
    %v2719 = vrot.slane %v2244, 7
    %v2720 = vrot.slane %v2245, 7
    %v2729 = vmul.f32 %v2480, %v2714
    %v2730 = vmul.f32 %v2495, %v2715
    %v2731 = vmul.f32 %v2510, %v2716
    %v2732 = vmul.f32 %v2525, %v2717
    %v2733 = vmul.f32 %v2540, %v2260
    %v2734 = vmul.f32 %v2555, %v2718
    %v2735 = vmul.f32 %v2570, %v2719
    %v2736 = vmul.f32 %v2585, %v2720
    %v2737 = vadd.f32 %v2706, %v2729
    %v2738 = vadd.f32 %v2707, %v2730
    %v2739 = vadd.f32 %v2708, %v2731
    %v2740 = vadd.f32 %v2709, %v2732
    %v2741 = vadd.f32 %v2710, %v2733
    %v2742 = vadd.f32 %v2711, %v2734
    %v2743 = vadd.f32 %v2712, %v2735
    %v2744 = vadd.f32 %v2713, %v2736
    %v2753 = vrot.slane %v2737, 4
    %v2754 = vrot.slane %v2738, 3
    %v2755 = vsel %vm752, %v2754, %v2753
    %v2756 = vrot.slane %v2739, 2
    %v2757 = vsel %vm755, %v2756, %v2755
    %v2758 = vrot.slane %v2740, 1
    %v2759 = vsel %vm758, %v2758, %v2757
    %v2760 = vsel %vm761, %v2741, %v2759
    %v2761 = vrot.slane %v2742, 7
    %v2762 = vsel %vm764, %v2761, %v2760
    %v2763 = vrot.slane %v2743, 6
    %v2764 = vsel %vm767, %v2763, %v2762
    %v2765 = vrot.slane %v2744, 5
    %v2766 = vsel %vm770, %v2765, %v2764
    %2767 = vrot.lane.b32.xlu0 %v2766, 96
    %v2768 = vpop.permute.xlu0 %2767
    %v2769 = vsel %vm238, %v2768, 0
    %2771 = vmatpush.msra.mxu0 0.0
    %2772 = vmatpush.msra.mxu0 0.0
    %2773 = vmatpush.msra.mxu0 0.0
    %2774 = vmatpush.msra.mxu0 0.0
    %2775 = vmatpush.msra.mxu0 0.0
    %2776 = vmatpush.msra.mxu0 0.0
    %2777 = vmatpush.msra.mxu0 0.0
    %2778 = vmatpush.msra.mxu0 0.0
    %2779 = vmatpush.msra.mxu0 0.0
    %2780 = vmatpush.msra.mxu0 0.0
    %2781 = vmatpush.msra.mxu0 0.0
    %2782 = vmatpush.msra.mxu0 0.0
    %2783 = vmatpush.msra.mxu0 %v385
    %2784 = vmatpush.msra.mxu0 %v384
    %2785 = vmatpush.msra.mxu0 %v383
    %2786 = vmatpush.msra.mxu0 %v382
    %2787 = vmatmul.f32.gmra.mxu0 %v2769
    %v2788 = vpop.f32.mrf.mxu0
    %v2789 = vadd.f32 %v741, %v2788
    %2790 = vdwg.mxu0
    %2791 = vrot.lane.b32.xlu0 %v2354, 96
    %v2792 = vpop.permute.xlu0 %2791
    %v2793 = vsel %vm238, %v2792, 0
    %2795 = vmatpush.msra.mxu0 0.0
    %2796 = vmatpush.msra.mxu0 0.0
    %2797 = vmatpush.msra.mxu0 0.0
    %2798 = vmatpush.msra.mxu0 0.0
    %2799 = vmatpush.msra.mxu0 0.0
    %2800 = vmatpush.msra.mxu0 0.0
    %2801 = vmatpush.msra.mxu0 0.0
    %2802 = vmatpush.msra.mxu0 0.0
    %2803 = vmatpush.msra.mxu0 0.0
    %2804 = vmatpush.msra.mxu0 0.0
    %2805 = vmatpush.msra.mxu0 0.0
    %2806 = vmatpush.msra.mxu0 0.0
    %2807 = vmatpush.msra.mxu0 %v390
    %2808 = vmatpush.msra.mxu0 %v389
    %2809 = vmatpush.msra.mxu0 %v388
    %2810 = vmatpush.msra.mxu0 %v387
    %2811 = vmatmul.f32.gmra.mxu0 %v2793
    %v2812 = vpop.f32.mrf.mxu0
    %v2813 = vadd.f32 %v797, %v2812
    %2814 = vdwg.mxu0
    %v2815 = vadd.f32 %v2789, %v2813
    %v2816 = vxor.u32 %v2815, 2147483648
    %v2817 = vmul.f32 %v2816, 1.442695
    %v2818 = vpow.pop %v2817
    %v2819 = vadd.f32 %v2818, 1.0
    %v2820 = vrcp.pop %v2819
    %v2821 = vmul.f32 %v2819, %v2820
    %v2822 = vsub.f32 1.0, %v2821
    %v2823 = vmul.f32 %v2820, %v2822
    %v2824 = vadd.f32 %v2820, %v2823
    %vm2825 = vweird.f32 %v2819
    %vm2826 = vweird.f32 %v2820
    %vm2827 = vmor %vm2825, %vm2826
    %v2828 = vsel %vm2827, %v2820, %v2824
    %v2829 = vand.u32 2147483647, %v2819
    %vm2830 = vcmp.eq.f32.partialorder %v2829, 8.507059e+37
    %v2831 = vand.u32 %v2819, 2147483648
    %v2832 = vor.u32 1.1754944e-38, %v2831
    %v2833 = vsel %vm2830, %v2832, %v2828
    %v2834 = vmul.f32 1.0, %v2833
    %2836 = vrot.lane.b32.xlu0 %v2813, 64
    %v2837 = vpop.permute.xlu0 %2836
    %v2839 = vmul.f32 %v2834, %v2837
    %2841 = vrot.lane.b32.xlu0 %v2839, 64
    %v2842 = vpop.permute.xlu0 %2841
    %v2844 = vadd.f32 %v2789, %v2842
    %v2845 = vtanh.pop %v2844
    %v2846 = vsub.f32 1.0, %v2834
    %2848 = vrot.lane.b32.xlu0 %v2845, 96
    %v2849 = vpop.permute.xlu0 %2848
    %v2851 = vmul.f32 %v2846, %v2849
    %v2852 = vmul.f32 %v2834, %v2354
    %v2853 = vadd.f32 %v2851, %v2852
    %vm2854 = vcmp.eq.s32.totalorder %v393, 4
    %v2856 = vrot.slane %v2853, 1
    %v2857 = vrot.slane %v2853, 2
    %v2858 = vrot.slane %v2853, 3
    %v2859 = vrot.slane %v2853, 4
    %v2860 = vrot.slane %v2853, 5
    %v2861 = vrot.slane %v2853, 6
    %v2862 = vrot.slane %v2853, 7
    %v2863 = vsel %vm2854, 1, 0
    %vm2864 = vcmp.eq.s32.totalorder %v2863, 1
    %v2865 = vperm.slane %v2853, 0
    %v2866 = vperm.slane %v2856, 0
    %v2867 = vperm.slane %v2857, 0
    %v2868 = vperm.slane %v2858, 0
    %v2869 = vperm.slane %v2859, 0
    %v2870 = vperm.slane %v2860, 0
    %v2871 = vperm.slane %v2861, 0
    %v2872 = vperm.slane %v2862, 0
    %v2881 = vsel %vm2864, %v2865, %v2382
    %v2882 = vsel %vm2864, %v2866, %v2383
    %v2883 = vsel %vm2864, %v2867, %v2384
    %v2884 = vsel %vm2864, %v2868, %v2385
    %v2885 = vsel %vm2864, %v2869, %v2386
    %v2886 = vsel %vm2864, %v2870, %v2387
    %v2887 = vsel %vm2864, %v2871, %v2388
    %v2888 = vsel %vm2864, %v2872, %v2389
    %2889 = vmatpush.msra.mxu0 0.0
    %2890 = vmatpush.msra.mxu0 0.0
    %2891 = vmatpush.msra.mxu0 0.0
    %2892 = vmatpush.msra.mxu0 0.0
    %2893 = vmatpush.msra.mxu0 0.0
    %2894 = vmatpush.msra.mxu0 0.0
    %2895 = vmatpush.msra.mxu0 0.0
    %2896 = vmatpush.msra.mxu0 0.0
    %2897 = vmatpush.msra.mxu0 0.0
    %2898 = vmatpush.msra.mxu0 0.0
    %2899 = vmatpush.msra.mxu0 0.0
    %2900 = vmatpush.msra.mxu0 0.0
    %2901 = vmatpush.msra.mxu0 %v380
    %2902 = vmatpush.msra.mxu0 %v379
    %2903 = vmatpush.msra.mxu0 %v378
    %2904 = vmatpush.msra.mxu0 %v377
    %2905 = vmatmul.f32.gmra.mxu0 %v2769
    %v2906 = vpop.f32.mrf.mxu0
    %v2907 = vadd.f32 %v395, %v2906
    %2908 = vdwg.mxu0
    %v2910 = vrot.slane %v2907, 3
    %v2911 = vrot.slane %v2907, 4
    %v2912 = vrot.slane %v2907, 5
    %v2913 = vrot.slane %v2907, 6
    %v2914 = vrot.slane %v2907, 7
    %v2915 = vrot.slane %v2907, 1
    %v2916 = vrot.slane %v2907, 2
    %v2925 = vadd.f32 %v354, %v2910
    %v2926 = vadd.f32 %v357, %v2911
    %v2927 = vadd.f32 %v360, %v2912
    %v2928 = vadd.f32 %v363, %v2913
    %v2929 = vadd.f32 %v366, %v2914
    %v2930 = vadd.f32 %v369, %v2907
    %v2931 = vadd.f32 %v372, %v2915
    %v2932 = vadd.f32 %v375, %v2916
    %v2933 = vxor.u32 %v2925, 2147483648
    %v2934 = vxor.u32 %v2926, 2147483648
    %v2935 = vxor.u32 %v2927, 2147483648
    %v2936 = vxor.u32 %v2928, 2147483648
    %v2937 = vxor.u32 %v2929, 2147483648
    %v2938 = vxor.u32 %v2930, 2147483648
    %v2939 = vxor.u32 %v2931, 2147483648
    %v2940 = vxor.u32 %v2932, 2147483648
    %v2941 = vmul.f32 %v2933, 1.442695
    %v2942 = vpow.pop %v2941
    %v2943 = vmul.f32 %v2934, 1.442695
    %v2944 = vpow.pop %v2943
    %v2945 = vmul.f32 %v2935, 1.442695
    %v2946 = vpow.pop %v2945
    %v2947 = vmul.f32 %v2936, 1.442695
    %v2948 = vpow.pop %v2947
    %v2949 = vmul.f32 %v2937, 1.442695
    %v2950 = vpow.pop %v2949
    %v2951 = vmul.f32 %v2938, 1.442695
    %v2952 = vpow.pop %v2951
    %v2953 = vmul.f32 %v2939, 1.442695
    %v2954 = vpow.pop %v2953
    %v2955 = vmul.f32 %v2940, 1.442695
    %v2956 = vpow.pop %v2955
    %v2957 = vadd.f32 %v2942, 1.0
    %v2958 = vadd.f32 %v2944, 1.0
    %v2959 = vadd.f32 %v2946, 1.0
    %v2960 = vadd.f32 %v2948, 1.0
    %v2961 = vadd.f32 %v2950, 1.0
    %v2962 = vadd.f32 %v2952, 1.0
    %v2963 = vadd.f32 %v2954, 1.0
    %v2964 = vadd.f32 %v2956, 1.0
    %v2965 = vrcp.pop %v2957
    %v2966 = vmul.f32 %v2957, %v2965
    %v2967 = vsub.f32 1.0, %v2966
    %v2968 = vmul.f32 %v2965, %v2967
    %v2969 = vadd.f32 %v2965, %v2968
    %vm2970 = vweird.f32 %v2957
    %vm2971 = vweird.f32 %v2965
    %vm2972 = vmor %vm2970, %vm2971
    %v2973 = vsel %vm2972, %v2965, %v2969
    %v2974 = vand.u32 2147483647, %v2957
    %vm2975 = vcmp.eq.f32.partialorder %v2974, 8.507059e+37
    %v2976 = vand.u32 %v2957, 2147483648
    %v2977 = vor.u32 1.1754944e-38, %v2976
    %v2978 = vsel %vm2975, %v2977, %v2973
    %v2979 = vmul.f32 1.0, %v2978
    %v2980 = vrcp.pop %v2958
    %v2981 = vmul.f32 %v2958, %v2980
    %v2982 = vsub.f32 1.0, %v2981
    %v2983 = vmul.f32 %v2980, %v2982
    %v2984 = vadd.f32 %v2980, %v2983
    %vm2985 = vweird.f32 %v2958
    %vm2986 = vweird.f32 %v2980
    %vm2987 = vmor %vm2985, %vm2986
    %v2988 = vsel %vm2987, %v2980, %v2984
    %v2989 = vand.u32 2147483647, %v2958
    %vm2990 = vcmp.eq.f32.partialorder %v2989, 8.507059e+37
    %v2991 = vand.u32 %v2958, 2147483648
    %v2992 = vor.u32 1.1754944e-38, %v2991
    %v2993 = vsel %vm2990, %v2992, %v2988
    %v2994 = vmul.f32 1.0, %v2993
    %v2995 = vrcp.pop %v2959
    %v2996 = vmul.f32 %v2959, %v2995
    %v2997 = vsub.f32 1.0, %v2996
    %v2998 = vmul.f32 %v2995, %v2997
    %v2999 = vadd.f32 %v2995, %v2998
    %vm3000 = vweird.f32 %v2959
    %vm3001 = vweird.f32 %v2995
    %vm3002 = vmor %vm3000, %vm3001
    %v3003 = vsel %vm3002, %v2995, %v2999
    %v3004 = vand.u32 2147483647, %v2959
    %vm3005 = vcmp.eq.f32.partialorder %v3004, 8.507059e+37
    %v3006 = vand.u32 %v2959, 2147483648
    %v3007 = vor.u32 1.1754944e-38, %v3006
    %v3008 = vsel %vm3005, %v3007, %v3003
    %v3009 = vmul.f32 1.0, %v3008
    %v3010 = vrcp.pop %v2960
    %v3011 = vmul.f32 %v2960, %v3010
    %v3012 = vsub.f32 1.0, %v3011
    %v3013 = vmul.f32 %v3010, %v3012
    %v3014 = vadd.f32 %v3010, %v3013
    %vm3015 = vweird.f32 %v2960
    %vm3016 = vweird.f32 %v3010
    %vm3017 = vmor %vm3015, %vm3016
    %v3018 = vsel %vm3017, %v3010, %v3014
    %v3019 = vand.u32 2147483647, %v2960
    %vm3020 = vcmp.eq.f32.partialorder %v3019, 8.507059e+37
    %v3021 = vand.u32 %v2960, 2147483648
    %v3022 = vor.u32 1.1754944e-38, %v3021
    %v3023 = vsel %vm3020, %v3022, %v3018
    %v3024 = vmul.f32 1.0, %v3023
    %v3025 = vrcp.pop %v2961
    %v3026 = vmul.f32 %v2961, %v3025
    %v3027 = vsub.f32 1.0, %v3026
    %v3028 = vmul.f32 %v3025, %v3027
    %v3029 = vadd.f32 %v3025, %v3028
    %vm3030 = vweird.f32 %v2961
    %vm3031 = vweird.f32 %v3025
    %vm3032 = vmor %vm3030, %vm3031
    %v3033 = vsel %vm3032, %v3025, %v3029
    %v3034 = vand.u32 2147483647, %v2961
    %vm3035 = vcmp.eq.f32.partialorder %v3034, 8.507059e+37
    %v3036 = vand.u32 %v2961, 2147483648
    %v3037 = vor.u32 1.1754944e-38, %v3036
    %v3038 = vsel %vm3035, %v3037, %v3033
    %v3039 = vmul.f32 1.0, %v3038
    %v3040 = vrcp.pop %v2962
    %v3041 = vmul.f32 %v2962, %v3040
    %v3042 = vsub.f32 1.0, %v3041
    %v3043 = vmul.f32 %v3040, %v3042
    %v3044 = vadd.f32 %v3040, %v3043
    %vm3045 = vweird.f32 %v2962
    %vm3046 = vweird.f32 %v3040
    %vm3047 = vmor %vm3045, %vm3046
    %v3048 = vsel %vm3047, %v3040, %v3044
    %v3049 = vand.u32 2147483647, %v2962
    %vm3050 = vcmp.eq.f32.partialorder %v3049, 8.507059e+37
    %v3051 = vand.u32 %v2962, 2147483648
    %v3052 = vor.u32 1.1754944e-38, %v3051
    %v3053 = vsel %vm3050, %v3052, %v3048
    %v3054 = vmul.f32 1.0, %v3053
    %v3055 = vrcp.pop %v2963
    %v3056 = vmul.f32 %v2963, %v3055
    %v3057 = vsub.f32 1.0, %v3056
    %v3058 = vmul.f32 %v3055, %v3057
    %v3059 = vadd.f32 %v3055, %v3058
    %vm3060 = vweird.f32 %v2963
    %vm3061 = vweird.f32 %v3055
    %vm3062 = vmor %vm3060, %vm3061
    %v3063 = vsel %vm3062, %v3055, %v3059
    %v3064 = vand.u32 2147483647, %v2963
    %vm3065 = vcmp.eq.f32.partialorder %v3064, 8.507059e+37
    %v3066 = vand.u32 %v2963, 2147483648
    %v3067 = vor.u32 1.1754944e-38, %v3066
    %v3068 = vsel %vm3065, %v3067, %v3063
    %v3069 = vmul.f32 1.0, %v3068
    %v3070 = vrcp.pop %v2964
    %v3071 = vmul.f32 %v2964, %v3070
    %v3072 = vsub.f32 1.0, %v3071
    %v3073 = vmul.f32 %v3070, %v3072
    %v3074 = vadd.f32 %v3070, %v3073
    %vm3075 = vweird.f32 %v2964
    %vm3076 = vweird.f32 %v3070
    %vm3077 = vmor %vm3075, %vm3076
    %v3078 = vsel %vm3077, %v3070, %v3074
    %v3079 = vand.u32 2147483647, %v2964
    %vm3080 = vcmp.eq.f32.partialorder %v3079, 8.507059e+37
    %v3081 = vand.u32 %v2964, 2147483648
    %v3082 = vor.u32 1.1754944e-38, %v3081
    %v3083 = vsel %vm3080, %v3082, %v3078
    %v3084 = vmul.f32 1.0, %v3083
    %3085 = vrot.lane.b32.xlu0 %v2910, 64
    %v3086 = vpop.permute.xlu0 %3085
    %3087 = vrot.lane.b32.xlu0 %v2911, 64
    %v3088 = vpop.permute.xlu0 %3087
    %3089 = vrot.lane.b32.xlu0 %v2912, 64
    %v3090 = vpop.permute.xlu0 %3089
    %3091 = vrot.lane.b32.xlu0 %v2913, 64
    %v3092 = vpop.permute.xlu0 %3091
    %3093 = vrot.lane.b32.xlu0 %v2914, 64
    %v3094 = vpop.permute.xlu0 %3093
    %3095 = vrot.lane.b32.xlu0 %v2907, 64
    %v3096 = vpop.permute.xlu0 %3095
    %3097 = vrot.lane.b32.xlu0 %v2915, 64
    %v3098 = vpop.permute.xlu0 %3097
    %3099 = vrot.lane.b32.xlu0 %v2916, 64
    %v3100 = vpop.permute.xlu0 %3099
    %v3109 = vmul.f32 %v2979, %v3086
    %v3110 = vmul.f32 %v2994, %v3088
    %v3111 = vmul.f32 %v3009, %v3090
    %v3112 = vmul.f32 %v3024, %v3092
    %v3113 = vmul.f32 %v3039, %v3094
    %v3114 = vmul.f32 %v3054, %v3096
    %v3115 = vmul.f32 %v3069, %v3098
    %v3116 = vmul.f32 %v3084, %v3100
    %3125 = vrot.lane.b32.xlu0 %v3109, 64
    %v3126 = vpop.permute.xlu0 %3125
    %3127 = vrot.lane.b32.xlu0 %v3110, 64
    %v3128 = vpop.permute.xlu0 %3127
    %3129 = vrot.lane.b32.xlu0 %v3111, 64
    %v3130 = vpop.permute.xlu0 %3129
    %3131 = vrot.lane.b32.xlu0 %v3112, 64
    %v3132 = vpop.permute.xlu0 %3131
    %3133 = vrot.lane.b32.xlu0 %v3113, 64
    %v3134 = vpop.permute.xlu0 %3133
    %3135 = vrot.lane.b32.xlu0 %v3114, 64
    %v3136 = vpop.permute.xlu0 %3135
    %3137 = vrot.lane.b32.xlu0 %v3115, 64
    %v3138 = vpop.permute.xlu0 %3137
    %3139 = vrot.lane.b32.xlu0 %v3116, 64
    %v3140 = vpop.permute.xlu0 %3139
    %v3149 = vadd.f32 %v354, %v3126
    %v3150 = vadd.f32 %v357, %v3128
    %v3151 = vadd.f32 %v360, %v3130
    %v3152 = vadd.f32 %v363, %v3132
    %v3153 = vadd.f32 %v366, %v3134
    %v3154 = vadd.f32 %v369, %v3136
    %v3155 = vadd.f32 %v372, %v3138
    %v3156 = vadd.f32 %v375, %v3140
    %v3157 = vtanh.pop %v3149
    %v3158 = vtanh.pop %v3150
    %v3159 = vtanh.pop %v3151
    %v3160 = vtanh.pop %v3152
    %v3161 = vtanh.pop %v3153
    %v3162 = vtanh.pop %v3154
    %v3163 = vtanh.pop %v3155
    %v3164 = vtanh.pop %v3156
    %v3165 = vsub.f32 1.0, %v2979
    %v3166 = vsub.f32 1.0, %v2994
    %v3167 = vsub.f32 1.0, %v3009
    %v3168 = vsub.f32 1.0, %v3024
    %v3169 = vsub.f32 1.0, %v3039
    %v3170 = vsub.f32 1.0, %v3054
    %v3171 = vsub.f32 1.0, %v3069
    %v3172 = vsub.f32 1.0, %v3084
    %3181 = vrot.lane.b32.xlu0 %v3157, 96
    %v3182 = vpop.permute.xlu0 %3181
    %3183 = vrot.lane.b32.xlu0 %v3158, 96
    %v3184 = vpop.permute.xlu0 %3183
    %3185 = vrot.lane.b32.xlu0 %v3159, 96
    %v3186 = vpop.permute.xlu0 %3185
    %3187 = vrot.lane.b32.xlu0 %v3160, 96
    %v3188 = vpop.permute.xlu0 %3187
    %3189 = vrot.lane.b32.xlu0 %v3161, 96
    %v3190 = vpop.permute.xlu0 %3189
    %3191 = vrot.lane.b32.xlu0 %v3162, 96
    %v3192 = vpop.permute.xlu0 %3191
    %3193 = vrot.lane.b32.xlu0 %v3163, 96
    %v3194 = vpop.permute.xlu0 %3193
    %3195 = vrot.lane.b32.xlu0 %v3164, 96
    %v3196 = vpop.permute.xlu0 %3195
    %v3205 = vmul.f32 %v3165, %v3182
    %v3206 = vmul.f32 %v3166, %v3184
    %v3207 = vmul.f32 %v3167, %v3186
    %v3208 = vmul.f32 %v3168, %v3188
    %v3209 = vmul.f32 %v3169, %v3190
    %v3210 = vmul.f32 %v3170, %v3192
    %v3211 = vmul.f32 %v3171, %v3194
    %v3212 = vmul.f32 %v3172, %v3196
    %v3213 = vrot.slane %v2737, 7
    %v3214 = vrot.slane %v2738, 7
    %v3215 = vrot.slane %v2739, 7
    %v3216 = vrot.slane %v2740, 7
    %v3217 = vrot.slane %v2741, 7
    %v3218 = vrot.slane %v2743, 7
    %v3219 = vrot.slane %v2744, 7
    %v3228 = vmul.f32 %v2979, %v3213
    %v3229 = vmul.f32 %v2994, %v3214
    %v3230 = vmul.f32 %v3009, %v3215
    %v3231 = vmul.f32 %v3024, %v3216
    %v3232 = vmul.f32 %v3039, %v3217
    %v3233 = vmul.f32 %v3054, %v2761
    %v3234 = vmul.f32 %v3069, %v3218
    %v3235 = vmul.f32 %v3084, %v3219
    %v3236 = vadd.f32 %v3205, %v3228
    %v3237 = vadd.f32 %v3206, %v3229
    %v3238 = vadd.f32 %v3207, %v3230
    %v3239 = vadd.f32 %v3208, %v3231
    %v3240 = vadd.f32 %v3209, %v3232
    %v3241 = vadd.f32 %v3210, %v3233
    %v3242 = vadd.f32 %v3211, %v3234
    %v3243 = vadd.f32 %v3212, %v3235
    %v3252 = vrot.slane %v3236, 5
    %v3253 = vrot.slane %v3237, 4
    %v3254 = vsel %vm752, %v3253, %v3252
    %v3255 = vrot.slane %v3238, 3
    %v3256 = vsel %vm755, %v3255, %v3254
    %v3257 = vrot.slane %v3239, 2
    %v3258 = vsel %vm758, %v3257, %v3256
    %v3259 = vrot.slane %v3240, 1
    %v3260 = vsel %vm761, %v3259, %v3258
    %v3261 = vsel %vm764, %v3241, %v3260
    %v3262 = vrot.slane %v3242, 7
    %v3263 = vsel %vm767, %v3262, %v3261
    %v3264 = vrot.slane %v3243, 6
    %v3265 = vsel %vm770, %v3264, %v3263
    %3266 = vrot.lane.b32.xlu0 %v3265, 96
    %v3267 = vpop.permute.xlu0 %3266
    %v3268 = vsel %vm238, %v3267, 0
    %3270 = vmatpush.msra.mxu0 0.0
    %3271 = vmatpush.msra.mxu0 0.0
    %3272 = vmatpush.msra.mxu0 0.0
    %3273 = vmatpush.msra.mxu0 0.0
    %3274 = vmatpush.msra.mxu0 0.0
    %3275 = vmatpush.msra.mxu0 0.0
    %3276 = vmatpush.msra.mxu0 0.0
    %3277 = vmatpush.msra.mxu0 0.0
    %3278 = vmatpush.msra.mxu0 0.0
    %3279 = vmatpush.msra.mxu0 0.0
    %3280 = vmatpush.msra.mxu0 0.0
    %3281 = vmatpush.msra.mxu0 0.0
    %3282 = vmatpush.msra.mxu0 %v385
    %3283 = vmatpush.msra.mxu0 %v384
    %3284 = vmatpush.msra.mxu0 %v383
    %3285 = vmatpush.msra.mxu0 %v382
    %3286 = vmatmul.f32.gmra.mxu0 %v3268
    %v3287 = vpop.f32.mrf.mxu0
    %v3288 = vadd.f32 %v741, %v3287
    %3289 = vdwg.mxu0
    %3290 = vrot.lane.b32.xlu0 %v2853, 96
    %v3291 = vpop.permute.xlu0 %3290
    %v3292 = vsel %vm238, %v3291, 0
    %3294 = vmatpush.msra.mxu0 0.0
    %3295 = vmatpush.msra.mxu0 0.0
    %3296 = vmatpush.msra.mxu0 0.0
    %3297 = vmatpush.msra.mxu0 0.0
    %3298 = vmatpush.msra.mxu0 0.0
    %3299 = vmatpush.msra.mxu0 0.0
    %3300 = vmatpush.msra.mxu0 0.0
    %3301 = vmatpush.msra.mxu0 0.0
    %3302 = vmatpush.msra.mxu0 0.0
    %3303 = vmatpush.msra.mxu0 0.0
    %3304 = vmatpush.msra.mxu0 0.0
    %3305 = vmatpush.msra.mxu0 0.0
    %3306 = vmatpush.msra.mxu0 %v390
    %3307 = vmatpush.msra.mxu0 %v389
    %3308 = vmatpush.msra.mxu0 %v388
    %3309 = vmatpush.msra.mxu0 %v387
    %3310 = vmatmul.f32.gmra.mxu0 %v3292
    %v3311 = vpop.f32.mrf.mxu0
    %v3312 = vadd.f32 %v797, %v3311
    %3313 = vdwg.mxu0
    %v3314 = vadd.f32 %v3288, %v3312
    %v3315 = vxor.u32 %v3314, 2147483648
    %v3316 = vmul.f32 %v3315, 1.442695
    %v3317 = vpow.pop %v3316
    %v3318 = vadd.f32 %v3317, 1.0
    %v3319 = vrcp.pop %v3318
    %v3320 = vmul.f32 %v3318, %v3319
    %v3321 = vsub.f32 1.0, %v3320
    %v3322 = vmul.f32 %v3319, %v3321
    %v3323 = vadd.f32 %v3319, %v3322
    %vm3324 = vweird.f32 %v3318
    %vm3325 = vweird.f32 %v3319
    %vm3326 = vmor %vm3324, %vm3325
    %v3327 = vsel %vm3326, %v3319, %v3323
    %v3328 = vand.u32 2147483647, %v3318
    %vm3329 = vcmp.eq.f32.partialorder %v3328, 8.507059e+37
    %v3330 = vand.u32 %v3318, 2147483648
    %v3331 = vor.u32 1.1754944e-38, %v3330
    %v3332 = vsel %vm3329, %v3331, %v3327
    %v3333 = vmul.f32 1.0, %v3332
    %3335 = vrot.lane.b32.xlu0 %v3312, 64
    %v3336 = vpop.permute.xlu0 %3335
    %v3338 = vmul.f32 %v3333, %v3336
    %3340 = vrot.lane.b32.xlu0 %v3338, 64
    %v3341 = vpop.permute.xlu0 %3340
    %v3343 = vadd.f32 %v3288, %v3341
    %v3344 = vtanh.pop %v3343
    %v3345 = vsub.f32 1.0, %v3333
    %3347 = vrot.lane.b32.xlu0 %v3344, 96
    %v3348 = vpop.permute.xlu0 %3347
    %v3350 = vmul.f32 %v3345, %v3348
    %v3351 = vmul.f32 %v3333, %v2853
    %v3352 = vadd.f32 %v3350, %v3351
    %vm3353 = vcmp.eq.s32.totalorder %v393, 5
    %v3355 = vrot.slane %v3352, 1
    %v3356 = vrot.slane %v3352, 2
    %v3357 = vrot.slane %v3352, 3
    %v3358 = vrot.slane %v3352, 4
    %v3359 = vrot.slane %v3352, 5
    %v3360 = vrot.slane %v3352, 6
    %v3361 = vrot.slane %v3352, 7
    %v3362 = vsel %vm3353, 1, 0
    %vm3363 = vcmp.eq.s32.totalorder %v3362, 1
    %v3364 = vperm.slane %v3352, 0
    %v3365 = vperm.slane %v3355, 0
    %v3366 = vperm.slane %v3356, 0
    %v3367 = vperm.slane %v3357, 0
    %v3368 = vperm.slane %v3358, 0
    %v3369 = vperm.slane %v3359, 0
    %v3370 = vperm.slane %v3360, 0
    %v3371 = vperm.slane %v3361, 0
    %v3380 = vsel %vm3363, %v3364, %v2881
    %v3381 = vsel %vm3363, %v3365, %v2882
    %v3382 = vsel %vm3363, %v3366, %v2883
    %v3383 = vsel %vm3363, %v3367, %v2884
    %v3384 = vsel %vm3363, %v3368, %v2885
    %v3385 = vsel %vm3363, %v3369, %v2886
    %v3386 = vsel %vm3363, %v3370, %v2887
    %v3387 = vsel %vm3363, %v3371, %v2888
    %3388 = vmatpush.msra.mxu0 0.0
    %3389 = vmatpush.msra.mxu0 0.0
    %3390 = vmatpush.msra.mxu0 0.0
    %3391 = vmatpush.msra.mxu0 0.0
    %3392 = vmatpush.msra.mxu0 0.0
    %3393 = vmatpush.msra.mxu0 0.0
    %3394 = vmatpush.msra.mxu0 0.0
    %3395 = vmatpush.msra.mxu0 0.0
    %3396 = vmatpush.msra.mxu0 0.0
    %3397 = vmatpush.msra.mxu0 0.0
    %3398 = vmatpush.msra.mxu0 0.0
    %3399 = vmatpush.msra.mxu0 0.0
    %3400 = vmatpush.msra.mxu0 %v380
    %3401 = vmatpush.msra.mxu0 %v379
    %3402 = vmatpush.msra.mxu0 %v378
    %3403 = vmatpush.msra.mxu0 %v377
    %3404 = vmatmul.f32.gmra.mxu0 %v3268
    %v3405 = vpop.f32.mrf.mxu0
    %v3406 = vadd.f32 %v395, %v3405
    %3407 = vdwg.mxu0
    %v3409 = vrot.slane %v3406, 2
    %v3410 = vrot.slane %v3406, 3
    %v3411 = vrot.slane %v3406, 4
    %v3412 = vrot.slane %v3406, 5
    %v3413 = vrot.slane %v3406, 6
    %v3414 = vrot.slane %v3406, 7
    %v3415 = vrot.slane %v3406, 1
    %v3424 = vadd.f32 %v354, %v3409
    %v3425 = vadd.f32 %v357, %v3410
    %v3426 = vadd.f32 %v360, %v3411
    %v3427 = vadd.f32 %v363, %v3412
    %v3428 = vadd.f32 %v366, %v3413
    %v3429 = vadd.f32 %v369, %v3414
    %v3430 = vadd.f32 %v372, %v3406
    %v3431 = vadd.f32 %v375, %v3415
    %v3432 = vxor.u32 %v3424, 2147483648
    %v3433 = vxor.u32 %v3425, 2147483648
    %v3434 = vxor.u32 %v3426, 2147483648
    %v3435 = vxor.u32 %v3427, 2147483648
    %v3436 = vxor.u32 %v3428, 2147483648
    %v3437 = vxor.u32 %v3429, 2147483648
    %v3438 = vxor.u32 %v3430, 2147483648
    %v3439 = vxor.u32 %v3431, 2147483648
    %v3440 = vmul.f32 %v3432, 1.442695
    %v3441 = vpow.pop %v3440
    %v3442 = vmul.f32 %v3433, 1.442695
    %v3443 = vpow.pop %v3442
    %v3444 = vmul.f32 %v3434, 1.442695
    %v3445 = vpow.pop %v3444
    %v3446 = vmul.f32 %v3435, 1.442695
    %v3447 = vpow.pop %v3446
    %v3448 = vmul.f32 %v3436, 1.442695
    %v3449 = vpow.pop %v3448
    %v3450 = vmul.f32 %v3437, 1.442695
    %v3451 = vpow.pop %v3450
    %v3452 = vmul.f32 %v3438, 1.442695
    %v3453 = vpow.pop %v3452
    %v3454 = vmul.f32 %v3439, 1.442695
    %v3455 = vpow.pop %v3454
    %v3456 = vadd.f32 %v3441, 1.0
    %v3457 = vadd.f32 %v3443, 1.0
    %v3458 = vadd.f32 %v3445, 1.0
    %v3459 = vadd.f32 %v3447, 1.0
    %v3460 = vadd.f32 %v3449, 1.0
    %v3461 = vadd.f32 %v3451, 1.0
    %v3462 = vadd.f32 %v3453, 1.0
    %v3463 = vadd.f32 %v3455, 1.0
    %v3464 = vrcp.pop %v3456
    %v3465 = vmul.f32 %v3456, %v3464
    %v3466 = vsub.f32 1.0, %v3465
    %v3467 = vmul.f32 %v3464, %v3466
    %v3468 = vadd.f32 %v3464, %v3467
    %vm3469 = vweird.f32 %v3456
    %vm3470 = vweird.f32 %v3464
    %vm3471 = vmor %vm3469, %vm3470
    %v3472 = vsel %vm3471, %v3464, %v3468
    %v3473 = vand.u32 2147483647, %v3456
    %vm3474 = vcmp.eq.f32.partialorder %v3473, 8.507059e+37
    %v3475 = vand.u32 %v3456, 2147483648
    %v3476 = vor.u32 1.1754944e-38, %v3475
    %v3477 = vsel %vm3474, %v3476, %v3472
    %v3478 = vmul.f32 1.0, %v3477
    %v3479 = vrcp.pop %v3457
    %v3480 = vmul.f32 %v3457, %v3479
    %v3481 = vsub.f32 1.0, %v3480
    %v3482 = vmul.f32 %v3479, %v3481
    %v3483 = vadd.f32 %v3479, %v3482
    %vm3484 = vweird.f32 %v3457
    %vm3485 = vweird.f32 %v3479
    %vm3486 = vmor %vm3484, %vm3485
    %v3487 = vsel %vm3486, %v3479, %v3483
    %v3488 = vand.u32 2147483647, %v3457
    %vm3489 = vcmp.eq.f32.partialorder %v3488, 8.507059e+37
    %v3490 = vand.u32 %v3457, 2147483648
    %v3491 = vor.u32 1.1754944e-38, %v3490
    %v3492 = vsel %vm3489, %v3491, %v3487
    %v3493 = vmul.f32 1.0, %v3492
    %v3494 = vrcp.pop %v3458
    %v3495 = vmul.f32 %v3458, %v3494
    %v3496 = vsub.f32 1.0, %v3495
    %v3497 = vmul.f32 %v3494, %v3496
    %v3498 = vadd.f32 %v3494, %v3497
    %vm3499 = vweird.f32 %v3458
    %vm3500 = vweird.f32 %v3494
    %vm3501 = vmor %vm3499, %vm3500
    %v3502 = vsel %vm3501, %v3494, %v3498
    %v3503 = vand.u32 2147483647, %v3458
    %vm3504 = vcmp.eq.f32.partialorder %v3503, 8.507059e+37
    %v3505 = vand.u32 %v3458, 2147483648
    %v3506 = vor.u32 1.1754944e-38, %v3505
    %v3507 = vsel %vm3504, %v3506, %v3502
    %v3508 = vmul.f32 1.0, %v3507
    %v3509 = vrcp.pop %v3459
    %v3510 = vmul.f32 %v3459, %v3509
    %v3511 = vsub.f32 1.0, %v3510
    %v3512 = vmul.f32 %v3509, %v3511
    %v3513 = vadd.f32 %v3509, %v3512
    %vm3514 = vweird.f32 %v3459
    %vm3515 = vweird.f32 %v3509
    %vm3516 = vmor %vm3514, %vm3515
    %v3517 = vsel %vm3516, %v3509, %v3513
    %v3518 = vand.u32 2147483647, %v3459
    %vm3519 = vcmp.eq.f32.partialorder %v3518, 8.507059e+37
    %v3520 = vand.u32 %v3459, 2147483648
    %v3521 = vor.u32 1.1754944e-38, %v3520
    %v3522 = vsel %vm3519, %v3521, %v3517
    %v3523 = vmul.f32 1.0, %v3522
    %v3524 = vrcp.pop %v3460
    %v3525 = vmul.f32 %v3460, %v3524
    %v3526 = vsub.f32 1.0, %v3525
    %v3527 = vmul.f32 %v3524, %v3526
    %v3528 = vadd.f32 %v3524, %v3527
    %vm3529 = vweird.f32 %v3460
    %vm3530 = vweird.f32 %v3524
    %vm3531 = vmor %vm3529, %vm3530
    %v3532 = vsel %vm3531, %v3524, %v3528
    %v3533 = vand.u32 2147483647, %v3460
    %vm3534 = vcmp.eq.f32.partialorder %v3533, 8.507059e+37
    %v3535 = vand.u32 %v3460, 2147483648
    %v3536 = vor.u32 1.1754944e-38, %v3535
    %v3537 = vsel %vm3534, %v3536, %v3532
    %v3538 = vmul.f32 1.0, %v3537
    %v3539 = vrcp.pop %v3461
    %v3540 = vmul.f32 %v3461, %v3539
    %v3541 = vsub.f32 1.0, %v3540
    %v3542 = vmul.f32 %v3539, %v3541
    %v3543 = vadd.f32 %v3539, %v3542
    %vm3544 = vweird.f32 %v3461
    %vm3545 = vweird.f32 %v3539
    %vm3546 = vmor %vm3544, %vm3545
    %v3547 = vsel %vm3546, %v3539, %v3543
    %v3548 = vand.u32 2147483647, %v3461
    %vm3549 = vcmp.eq.f32.partialorder %v3548, 8.507059e+37
    %v3550 = vand.u32 %v3461, 2147483648
    %v3551 = vor.u32 1.1754944e-38, %v3550
    %v3552 = vsel %vm3549, %v3551, %v3547
    %v3553 = vmul.f32 1.0, %v3552
    %v3554 = vrcp.pop %v3462
    %v3555 = vmul.f32 %v3462, %v3554
    %v3556 = vsub.f32 1.0, %v3555
    %v3557 = vmul.f32 %v3554, %v3556
    %v3558 = vadd.f32 %v3554, %v3557
    %vm3559 = vweird.f32 %v3462
    %vm3560 = vweird.f32 %v3554
    %vm3561 = vmor %vm3559, %vm3560
    %v3562 = vsel %vm3561, %v3554, %v3558
    %v3563 = vand.u32 2147483647, %v3462
    %vm3564 = vcmp.eq.f32.partialorder %v3563, 8.507059e+37
    %v3565 = vand.u32 %v3462, 2147483648
    %v3566 = vor.u32 1.1754944e-38, %v3565
    %v3567 = vsel %vm3564, %v3566, %v3562
    %v3568 = vmul.f32 1.0, %v3567
    %v3569 = vrcp.pop %v3463
    %v3570 = vmul.f32 %v3463, %v3569
    %v3571 = vsub.f32 1.0, %v3570
    %v3572 = vmul.f32 %v3569, %v3571
    %v3573 = vadd.f32 %v3569, %v3572
    %vm3574 = vweird.f32 %v3463
    %vm3575 = vweird.f32 %v3569
    %vm3576 = vmor %vm3574, %vm3575
    %v3577 = vsel %vm3576, %v3569, %v3573
    %v3578 = vand.u32 2147483647, %v3463
    %vm3579 = vcmp.eq.f32.partialorder %v3578, 8.507059e+37
    %v3580 = vand.u32 %v3463, 2147483648
    %v3581 = vor.u32 1.1754944e-38, %v3580
    %v3582 = vsel %vm3579, %v3581, %v3577
    %v3583 = vmul.f32 1.0, %v3582
    %3584 = vrot.lane.b32.xlu0 %v3409, 64
    %v3585 = vpop.permute.xlu0 %3584
    %3586 = vrot.lane.b32.xlu0 %v3410, 64
    %v3587 = vpop.permute.xlu0 %3586
    %3588 = vrot.lane.b32.xlu0 %v3411, 64
    %v3589 = vpop.permute.xlu0 %3588
    %3590 = vrot.lane.b32.xlu0 %v3412, 64
    %v3591 = vpop.permute.xlu0 %3590
    %3592 = vrot.lane.b32.xlu0 %v3413, 64
    %v3593 = vpop.permute.xlu0 %3592
    %3594 = vrot.lane.b32.xlu0 %v3414, 64
    %v3595 = vpop.permute.xlu0 %3594
    %3596 = vrot.lane.b32.xlu0 %v3406, 64
    %v3597 = vpop.permute.xlu0 %3596
    %3598 = vrot.lane.b32.xlu0 %v3415, 64
    %v3599 = vpop.permute.xlu0 %3598
    %v3608 = vmul.f32 %v3478, %v3585
    %v3609 = vmul.f32 %v3493, %v3587
    %v3610 = vmul.f32 %v3508, %v3589
    %v3611 = vmul.f32 %v3523, %v3591
    %v3612 = vmul.f32 %v3538, %v3593
    %v3613 = vmul.f32 %v3553, %v3595
    %v3614 = vmul.f32 %v3568, %v3597
    %v3615 = vmul.f32 %v3583, %v3599
    %3624 = vrot.lane.b32.xlu0 %v3608, 64
    %v3625 = vpop.permute.xlu0 %3624
    %3626 = vrot.lane.b32.xlu0 %v3609, 64
    %v3627 = vpop.permute.xlu0 %3626
    %3628 = vrot.lane.b32.xlu0 %v3610, 64
    %v3629 = vpop.permute.xlu0 %3628
    %3630 = vrot.lane.b32.xlu0 %v3611, 64
    %v3631 = vpop.permute.xlu0 %3630
    %3632 = vrot.lane.b32.xlu0 %v3612, 64
    %v3633 = vpop.permute.xlu0 %3632
    %3634 = vrot.lane.b32.xlu0 %v3613, 64
    %v3635 = vpop.permute.xlu0 %3634
    %3636 = vrot.lane.b32.xlu0 %v3614, 64
    %v3637 = vpop.permute.xlu0 %3636
    %3638 = vrot.lane.b32.xlu0 %v3615, 64
    %v3639 = vpop.permute.xlu0 %3638
    %v3648 = vadd.f32 %v354, %v3625
    %v3649 = vadd.f32 %v357, %v3627
    %v3650 = vadd.f32 %v360, %v3629
    %v3651 = vadd.f32 %v363, %v3631
    %v3652 = vadd.f32 %v366, %v3633
    %v3653 = vadd.f32 %v369, %v3635
    %v3654 = vadd.f32 %v372, %v3637
    %v3655 = vadd.f32 %v375, %v3639
    %v3656 = vtanh.pop %v3648
    %v3657 = vtanh.pop %v3649
    %v3658 = vtanh.pop %v3650
    %v3659 = vtanh.pop %v3651
    %v3660 = vtanh.pop %v3652
    %v3661 = vtanh.pop %v3653
    %v3662 = vtanh.pop %v3654
    %v3663 = vtanh.pop %v3655
    %v3664 = vsub.f32 1.0, %v3478
    %v3665 = vsub.f32 1.0, %v3493
    %v3666 = vsub.f32 1.0, %v3508
    %v3667 = vsub.f32 1.0, %v3523
    %v3668 = vsub.f32 1.0, %v3538
    %v3669 = vsub.f32 1.0, %v3553
    %v3670 = vsub.f32 1.0, %v3568
    %v3671 = vsub.f32 1.0, %v3583
    %3680 = vrot.lane.b32.xlu0 %v3656, 96
    %v3681 = vpop.permute.xlu0 %3680
    %3682 = vrot.lane.b32.xlu0 %v3657, 96
    %v3683 = vpop.permute.xlu0 %3682
    %3684 = vrot.lane.b32.xlu0 %v3658, 96
    %v3685 = vpop.permute.xlu0 %3684
    %3686 = vrot.lane.b32.xlu0 %v3659, 96
    %v3687 = vpop.permute.xlu0 %3686
    %3688 = vrot.lane.b32.xlu0 %v3660, 96
    %v3689 = vpop.permute.xlu0 %3688
    %3690 = vrot.lane.b32.xlu0 %v3661, 96
    %v3691 = vpop.permute.xlu0 %3690
    %3692 = vrot.lane.b32.xlu0 %v3662, 96
    %v3693 = vpop.permute.xlu0 %3692
    %3694 = vrot.lane.b32.xlu0 %v3663, 96
    %v3695 = vpop.permute.xlu0 %3694
    %v3704 = vmul.f32 %v3664, %v3681
    %v3705 = vmul.f32 %v3665, %v3683
    %v3706 = vmul.f32 %v3666, %v3685
    %v3707 = vmul.f32 %v3667, %v3687
    %v3708 = vmul.f32 %v3668, %v3689
    %v3709 = vmul.f32 %v3669, %v3691
    %v3710 = vmul.f32 %v3670, %v3693
    %v3711 = vmul.f32 %v3671, %v3695
    %v3712 = vrot.slane %v3236, 7
    %v3713 = vrot.slane %v3237, 7
    %v3714 = vrot.slane %v3238, 7
    %v3715 = vrot.slane %v3239, 7
    %v3716 = vrot.slane %v3240, 7
    %v3717 = vrot.slane %v3241, 7
    %v3718 = vrot.slane %v3243, 7
    %v3727 = vmul.f32 %v3478, %v3712
    %v3728 = vmul.f32 %v3493, %v3713
    %v3729 = vmul.f32 %v3508, %v3714
    %v3730 = vmul.f32 %v3523, %v3715
    %v3731 = vmul.f32 %v3538, %v3716
    %v3732 = vmul.f32 %v3553, %v3717
    %v3733 = vmul.f32 %v3568, %v3262
    %v3734 = vmul.f32 %v3583, %v3718
    %v3735 = vadd.f32 %v3704, %v3727
    %v3736 = vadd.f32 %v3705, %v3728
    %v3737 = vadd.f32 %v3706, %v3729
    %v3738 = vadd.f32 %v3707, %v3730
    %v3739 = vadd.f32 %v3708, %v3731
    %v3740 = vadd.f32 %v3709, %v3732
    %v3741 = vadd.f32 %v3710, %v3733
    %v3742 = vadd.f32 %v3711, %v3734
    %v3751 = vrot.slane %v3735, 6
    %v3752 = vrot.slane %v3736, 5
    %v3753 = vsel %vm752, %v3752, %v3751
    %v3754 = vrot.slane %v3737, 4
    %v3755 = vsel %vm755, %v3754, %v3753
    %v3756 = vrot.slane %v3738, 3
    %v3757 = vsel %vm758, %v3756, %v3755
    %v3758 = vrot.slane %v3739, 2
    %v3759 = vsel %vm761, %v3758, %v3757
    %v3760 = vrot.slane %v3740, 1
    %v3761 = vsel %vm764, %v3760, %v3759
    %v3762 = vsel %vm767, %v3741, %v3761
    %v3763 = vrot.slane %v3742, 7
    %v3764 = vsel %vm770, %v3763, %v3762
    %3765 = vrot.lane.b32.xlu0 %v3764, 96
    %v3766 = vpop.permute.xlu0 %3765
    %v3767 = vsel %vm238, %v3766, 0
    %3769 = vmatpush.msra.mxu0 0.0
    %3770 = vmatpush.msra.mxu0 0.0
    %3771 = vmatpush.msra.mxu0 0.0
    %3772 = vmatpush.msra.mxu0 0.0
    %3773 = vmatpush.msra.mxu0 0.0
    %3774 = vmatpush.msra.mxu0 0.0
    %3775 = vmatpush.msra.mxu0 0.0
    %3776 = vmatpush.msra.mxu0 0.0
    %3777 = vmatpush.msra.mxu0 0.0
    %3778 = vmatpush.msra.mxu0 0.0
    %3779 = vmatpush.msra.mxu0 0.0
    %3780 = vmatpush.msra.mxu0 0.0
    %3781 = vmatpush.msra.mxu0 %v385
    %3782 = vmatpush.msra.mxu0 %v384
    %3783 = vmatpush.msra.mxu0 %v383
    %3784 = vmatpush.msra.mxu0 %v382
    %3785 = vmatmul.f32.gmra.mxu0 %v3767
    %v3786 = vpop.f32.mrf.mxu0
    %v3787 = vadd.f32 %v741, %v3786
    %3788 = vdwg.mxu0
    %3789 = vrot.lane.b32.xlu0 %v3352, 96
    %v3790 = vpop.permute.xlu0 %3789
    %v3791 = vsel %vm238, %v3790, 0
    %3793 = vmatpush.msra.mxu0 0.0
    %3794 = vmatpush.msra.mxu0 0.0
    %3795 = vmatpush.msra.mxu0 0.0
    %3796 = vmatpush.msra.mxu0 0.0
    %3797 = vmatpush.msra.mxu0 0.0
    %3798 = vmatpush.msra.mxu0 0.0
    %3799 = vmatpush.msra.mxu0 0.0
    %3800 = vmatpush.msra.mxu0 0.0
    %3801 = vmatpush.msra.mxu0 0.0
    %3802 = vmatpush.msra.mxu0 0.0
    %3803 = vmatpush.msra.mxu0 0.0
    %3804 = vmatpush.msra.mxu0 0.0
    %3805 = vmatpush.msra.mxu0 %v390
    %3806 = vmatpush.msra.mxu0 %v389
    %3807 = vmatpush.msra.mxu0 %v388
    %3808 = vmatpush.msra.mxu0 %v387
    %3809 = vmatmul.f32.gmra.mxu0 %v3791
    %v3810 = vpop.f32.mrf.mxu0
    %v3811 = vadd.f32 %v797, %v3810
    %3812 = vdwg.mxu0
    %v3813 = vadd.f32 %v3787, %v3811
    %v3814 = vxor.u32 %v3813, 2147483648
    %v3815 = vmul.f32 %v3814, 1.442695
    %v3816 = vpow.pop %v3815
    %v3817 = vadd.f32 %v3816, 1.0
    %v3818 = vrcp.pop %v3817
    %v3819 = vmul.f32 %v3817, %v3818
    %v3820 = vsub.f32 1.0, %v3819
    %v3821 = vmul.f32 %v3818, %v3820
    %v3822 = vadd.f32 %v3818, %v3821
    %vm3823 = vweird.f32 %v3817
    %vm3824 = vweird.f32 %v3818
    %vm3825 = vmor %vm3823, %vm3824
    %v3826 = vsel %vm3825, %v3818, %v3822
    %v3827 = vand.u32 2147483647, %v3817
    %vm3828 = vcmp.eq.f32.partialorder %v3827, 8.507059e+37
    %v3829 = vand.u32 %v3817, 2147483648
    %v3830 = vor.u32 1.1754944e-38, %v3829
    %v3831 = vsel %vm3828, %v3830, %v3826
    %v3832 = vmul.f32 1.0, %v3831
    %3834 = vrot.lane.b32.xlu0 %v3811, 64
    %v3835 = vpop.permute.xlu0 %3834
    %v3837 = vmul.f32 %v3832, %v3835
    %3839 = vrot.lane.b32.xlu0 %v3837, 64
    %v3840 = vpop.permute.xlu0 %3839
    %v3842 = vadd.f32 %v3787, %v3840
    %v3843 = vtanh.pop %v3842
    %v3844 = vsub.f32 1.0, %v3832
    %3846 = vrot.lane.b32.xlu0 %v3843, 96
    %v3847 = vpop.permute.xlu0 %3846
    %v3849 = vmul.f32 %v3844, %v3847
    %v3850 = vmul.f32 %v3832, %v3352
    %v3851 = vadd.f32 %v3849, %v3850
    %vm3852 = vcmp.eq.s32.totalorder %v393, 6
    %v3854 = vrot.slane %v3851, 1
    %v3855 = vrot.slane %v3851, 2
    %v3856 = vrot.slane %v3851, 3
    %v3857 = vrot.slane %v3851, 4
    %v3858 = vrot.slane %v3851, 5
    %v3859 = vrot.slane %v3851, 6
    %v3860 = vrot.slane %v3851, 7
    %v3861 = vsel %vm3852, 1, 0
    %vm3862 = vcmp.eq.s32.totalorder %v3861, 1
    %v3863 = vperm.slane %v3851, 0
    %v3864 = vperm.slane %v3854, 0
    %v3865 = vperm.slane %v3855, 0
    %v3866 = vperm.slane %v3856, 0
    %v3867 = vperm.slane %v3857, 0
    %v3868 = vperm.slane %v3858, 0
    %v3869 = vperm.slane %v3859, 0
    %v3870 = vperm.slane %v3860, 0
    %v3879 = vsel %vm3862, %v3863, %v3380
    %v3880 = vsel %vm3862, %v3864, %v3381
    %v3881 = vsel %vm3862, %v3865, %v3382
    %v3882 = vsel %vm3862, %v3866, %v3383
    %v3883 = vsel %vm3862, %v3867, %v3384
    %v3884 = vsel %vm3862, %v3868, %v3385
    %v3885 = vsel %vm3862, %v3869, %v3386
    %v3886 = vsel %vm3862, %v3870, %v3387
    %3887 = vmatpush.msra.mxu0 0.0
    %3888 = vmatpush.msra.mxu0 0.0
    %3889 = vmatpush.msra.mxu0 0.0
    %3890 = vmatpush.msra.mxu0 0.0
    %3891 = vmatpush.msra.mxu0 0.0
    %3892 = vmatpush.msra.mxu0 0.0
    %3893 = vmatpush.msra.mxu0 0.0
    %3894 = vmatpush.msra.mxu0 0.0
    %3895 = vmatpush.msra.mxu0 0.0
    %3896 = vmatpush.msra.mxu0 0.0
    %3897 = vmatpush.msra.mxu0 0.0
    %3898 = vmatpush.msra.mxu0 0.0
    %3899 = vmatpush.msra.mxu0 %v380
    %3900 = vmatpush.msra.mxu0 %v379
    %3901 = vmatpush.msra.mxu0 %v378
    %3902 = vmatpush.msra.mxu0 %v377
    %3903 = vmatmul.f32.gmra.mxu0 %v3767
    %v3904 = vpop.f32.mrf.mxu0
    %v3905 = vadd.f32 %v395, %v3904
    %3906 = vdwg.mxu0
    %v3908 = vrot.slane %v3905, 1
    %v3909 = vrot.slane %v3905, 2
    %v3910 = vrot.slane %v3905, 3
    %v3911 = vrot.slane %v3905, 4
    %v3912 = vrot.slane %v3905, 5
    %v3913 = vrot.slane %v3905, 6
    %v3914 = vrot.slane %v3905, 7
    %v3923 = vadd.f32 %v354, %v3908
    %v3924 = vadd.f32 %v357, %v3909
    %v3925 = vadd.f32 %v360, %v3910
    %v3926 = vadd.f32 %v363, %v3911
    %v3927 = vadd.f32 %v366, %v3912
    %v3928 = vadd.f32 %v369, %v3913
    %v3929 = vadd.f32 %v372, %v3914
    %v3930 = vadd.f32 %v375, %v3905
    %v3931 = vxor.u32 %v3923, 2147483648
    %v3932 = vxor.u32 %v3924, 2147483648
    %v3933 = vxor.u32 %v3925, 2147483648
    %v3934 = vxor.u32 %v3926, 2147483648
    %v3935 = vxor.u32 %v3927, 2147483648
    %v3936 = vxor.u32 %v3928, 2147483648
    %v3937 = vxor.u32 %v3929, 2147483648
    %v3938 = vxor.u32 %v3930, 2147483648
    %v3939 = vmul.f32 %v3931, 1.442695
    %v3940 = vpow.pop %v3939
    %v3941 = vmul.f32 %v3932, 1.442695
    %v3942 = vpow.pop %v3941
    %v3943 = vmul.f32 %v3933, 1.442695
    %v3944 = vpow.pop %v3943
    %v3945 = vmul.f32 %v3934, 1.442695
    %v3946 = vpow.pop %v3945
    %v3947 = vmul.f32 %v3935, 1.442695
    %v3948 = vpow.pop %v3947
    %v3949 = vmul.f32 %v3936, 1.442695
    %v3950 = vpow.pop %v3949
    %v3951 = vmul.f32 %v3937, 1.442695
    %v3952 = vpow.pop %v3951
    %v3953 = vmul.f32 %v3938, 1.442695
    %v3954 = vpow.pop %v3953
    %v3955 = vadd.f32 %v3940, 1.0
    %v3956 = vadd.f32 %v3942, 1.0
    %v3957 = vadd.f32 %v3944, 1.0
    %v3958 = vadd.f32 %v3946, 1.0
    %v3959 = vadd.f32 %v3948, 1.0
    %v3960 = vadd.f32 %v3950, 1.0
    %v3961 = vadd.f32 %v3952, 1.0
    %v3962 = vadd.f32 %v3954, 1.0
    %v3963 = vrcp.pop %v3955
    %v3964 = vmul.f32 %v3955, %v3963
    %v3965 = vsub.f32 1.0, %v3964
    %v3966 = vmul.f32 %v3963, %v3965
    %v3967 = vadd.f32 %v3963, %v3966
    %vm3968 = vweird.f32 %v3955
    %vm3969 = vweird.f32 %v3963
    %vm3970 = vmor %vm3968, %vm3969
    %v3971 = vsel %vm3970, %v3963, %v3967
    %v3972 = vand.u32 2147483647, %v3955
    %vm3973 = vcmp.eq.f32.partialorder %v3972, 8.507059e+37
    %v3974 = vand.u32 %v3955, 2147483648
    %v3975 = vor.u32 1.1754944e-38, %v3974
    %v3976 = vsel %vm3973, %v3975, %v3971
    %v3977 = vmul.f32 1.0, %v3976
    %v3978 = vrcp.pop %v3956
    %v3979 = vmul.f32 %v3956, %v3978
    %v3980 = vsub.f32 1.0, %v3979
    %v3981 = vmul.f32 %v3978, %v3980
    %v3982 = vadd.f32 %v3978, %v3981
    %vm3983 = vweird.f32 %v3956
    %vm3984 = vweird.f32 %v3978
    %vm3985 = vmor %vm3983, %vm3984
    %v3986 = vsel %vm3985, %v3978, %v3982
    %v3987 = vand.u32 2147483647, %v3956
    %vm3988 = vcmp.eq.f32.partialorder %v3987, 8.507059e+37
    %v3989 = vand.u32 %v3956, 2147483648
    %v3990 = vor.u32 1.1754944e-38, %v3989
    %v3991 = vsel %vm3988, %v3990, %v3986
    %v3992 = vmul.f32 1.0, %v3991
    %v3993 = vrcp.pop %v3957
    %v3994 = vmul.f32 %v3957, %v3993
    %v3995 = vsub.f32 1.0, %v3994
    %v3996 = vmul.f32 %v3993, %v3995
    %v3997 = vadd.f32 %v3993, %v3996
    %vm3998 = vweird.f32 %v3957
    %vm3999 = vweird.f32 %v3993
    %vm4000 = vmor %vm3998, %vm3999
    %v4001 = vsel %vm4000, %v3993, %v3997
    %v4002 = vand.u32 2147483647, %v3957
    %vm4003 = vcmp.eq.f32.partialorder %v4002, 8.507059e+37
    %v4004 = vand.u32 %v3957, 2147483648
    %v4005 = vor.u32 1.1754944e-38, %v4004
    %v4006 = vsel %vm4003, %v4005, %v4001
    %v4007 = vmul.f32 1.0, %v4006
    %v4008 = vrcp.pop %v3958
    %v4009 = vmul.f32 %v3958, %v4008
    %v4010 = vsub.f32 1.0, %v4009
    %v4011 = vmul.f32 %v4008, %v4010
    %v4012 = vadd.f32 %v4008, %v4011
    %vm4013 = vweird.f32 %v3958
    %vm4014 = vweird.f32 %v4008
    %vm4015 = vmor %vm4013, %vm4014
    %v4016 = vsel %vm4015, %v4008, %v4012
    %v4017 = vand.u32 2147483647, %v3958
    %vm4018 = vcmp.eq.f32.partialorder %v4017, 8.507059e+37
    %v4019 = vand.u32 %v3958, 2147483648
    %v4020 = vor.u32 1.1754944e-38, %v4019
    %v4021 = vsel %vm4018, %v4020, %v4016
    %v4022 = vmul.f32 1.0, %v4021
    %v4023 = vrcp.pop %v3959
    %v4024 = vmul.f32 %v3959, %v4023
    %v4025 = vsub.f32 1.0, %v4024
    %v4026 = vmul.f32 %v4023, %v4025
    %v4027 = vadd.f32 %v4023, %v4026
    %vm4028 = vweird.f32 %v3959
    %vm4029 = vweird.f32 %v4023
    %vm4030 = vmor %vm4028, %vm4029
    %v4031 = vsel %vm4030, %v4023, %v4027
    %v4032 = vand.u32 2147483647, %v3959
    %vm4033 = vcmp.eq.f32.partialorder %v4032, 8.507059e+37
    %v4034 = vand.u32 %v3959, 2147483648
    %v4035 = vor.u32 1.1754944e-38, %v4034
    %v4036 = vsel %vm4033, %v4035, %v4031
    %v4037 = vmul.f32 1.0, %v4036
    %v4038 = vrcp.pop %v3960
    %v4039 = vmul.f32 %v3960, %v4038
    %v4040 = vsub.f32 1.0, %v4039
    %v4041 = vmul.f32 %v4038, %v4040
    %v4042 = vadd.f32 %v4038, %v4041
    %vm4043 = vweird.f32 %v3960
    %vm4044 = vweird.f32 %v4038
    %vm4045 = vmor %vm4043, %vm4044
    %v4046 = vsel %vm4045, %v4038, %v4042
    %v4047 = vand.u32 2147483647, %v3960
    %vm4048 = vcmp.eq.f32.partialorder %v4047, 8.507059e+37
    %v4049 = vand.u32 %v3960, 2147483648
    %v4050 = vor.u32 1.1754944e-38, %v4049
    %v4051 = vsel %vm4048, %v4050, %v4046
    %v4052 = vmul.f32 1.0, %v4051
    %v4053 = vrcp.pop %v3961
    %v4054 = vmul.f32 %v3961, %v4053
    %v4055 = vsub.f32 1.0, %v4054
    %v4056 = vmul.f32 %v4053, %v4055
    %v4057 = vadd.f32 %v4053, %v4056
    %vm4058 = vweird.f32 %v3961
    %vm4059 = vweird.f32 %v4053
    %vm4060 = vmor %vm4058, %vm4059
    %v4061 = vsel %vm4060, %v4053, %v4057
    %v4062 = vand.u32 2147483647, %v3961
    %vm4063 = vcmp.eq.f32.partialorder %v4062, 8.507059e+37
    %v4064 = vand.u32 %v3961, 2147483648
    %v4065 = vor.u32 1.1754944e-38, %v4064
    %v4066 = vsel %vm4063, %v4065, %v4061
    %v4067 = vmul.f32 1.0, %v4066
    %v4068 = vrcp.pop %v3962
    %v4069 = vmul.f32 %v3962, %v4068
    %v4070 = vsub.f32 1.0, %v4069
    %v4071 = vmul.f32 %v4068, %v4070
    %v4072 = vadd.f32 %v4068, %v4071
    %vm4073 = vweird.f32 %v3962
    %vm4074 = vweird.f32 %v4068
    %vm4075 = vmor %vm4073, %vm4074
    %v4076 = vsel %vm4075, %v4068, %v4072
    %v4077 = vand.u32 2147483647, %v3962
    %vm4078 = vcmp.eq.f32.partialorder %v4077, 8.507059e+37
    %v4079 = vand.u32 %v3962, 2147483648
    %v4080 = vor.u32 1.1754944e-38, %v4079
    %v4081 = vsel %vm4078, %v4080, %v4076
    %v4082 = vmul.f32 1.0, %v4081
    %4083 = vrot.lane.b32.xlu0 %v3908, 64
    %v4084 = vpop.permute.xlu0 %4083
    %4085 = vrot.lane.b32.xlu0 %v3909, 64
    %v4086 = vpop.permute.xlu0 %4085
    %4087 = vrot.lane.b32.xlu0 %v3910, 64
    %v4088 = vpop.permute.xlu0 %4087
    %4089 = vrot.lane.b32.xlu0 %v3911, 64
    %v4090 = vpop.permute.xlu0 %4089
    %4091 = vrot.lane.b32.xlu0 %v3912, 64
    %v4092 = vpop.permute.xlu0 %4091
    %4093 = vrot.lane.b32.xlu0 %v3913, 64
    %v4094 = vpop.permute.xlu0 %4093
    %4095 = vrot.lane.b32.xlu0 %v3914, 64
    %v4096 = vpop.permute.xlu0 %4095
    %4097 = vrot.lane.b32.xlu0 %v3905, 64
    %v4098 = vpop.permute.xlu0 %4097
    %v4107 = vmul.f32 %v3977, %v4084
    %v4108 = vmul.f32 %v3992, %v4086
    %v4109 = vmul.f32 %v4007, %v4088
    %v4110 = vmul.f32 %v4022, %v4090
    %v4111 = vmul.f32 %v4037, %v4092
    %v4112 = vmul.f32 %v4052, %v4094
    %v4113 = vmul.f32 %v4067, %v4096
    %v4114 = vmul.f32 %v4082, %v4098
    %4123 = vrot.lane.b32.xlu0 %v4107, 64
    %v4124 = vpop.permute.xlu0 %4123
    %4125 = vrot.lane.b32.xlu0 %v4108, 64
    %v4126 = vpop.permute.xlu0 %4125
    %4127 = vrot.lane.b32.xlu0 %v4109, 64
    %v4128 = vpop.permute.xlu0 %4127
    %4129 = vrot.lane.b32.xlu0 %v4110, 64
    %v4130 = vpop.permute.xlu0 %4129
    %4131 = vrot.lane.b32.xlu0 %v4111, 64
    %v4132 = vpop.permute.xlu0 %4131
    %4133 = vrot.lane.b32.xlu0 %v4112, 64
    %v4134 = vpop.permute.xlu0 %4133
    %4135 = vrot.lane.b32.xlu0 %v4113, 64
    %v4136 = vpop.permute.xlu0 %4135
    %4137 = vrot.lane.b32.xlu0 %v4114, 64
    %v4138 = vpop.permute.xlu0 %4137
    %v4147 = vadd.f32 %v354, %v4124
    %v4148 = vadd.f32 %v357, %v4126
    %v4149 = vadd.f32 %v360, %v4128
    %v4150 = vadd.f32 %v363, %v4130
    %v4151 = vadd.f32 %v366, %v4132
    %v4152 = vadd.f32 %v369, %v4134
    %v4153 = vadd.f32 %v372, %v4136
    %v4154 = vadd.f32 %v375, %v4138
    %v4155 = vtanh.pop %v4147
    %v4156 = vtanh.pop %v4148
    %v4157 = vtanh.pop %v4149
    %v4158 = vtanh.pop %v4150
    %v4159 = vtanh.pop %v4151
    %v4160 = vtanh.pop %v4152
    %v4161 = vtanh.pop %v4153
    %v4162 = vtanh.pop %v4154
    %v4163 = vsub.f32 1.0, %v3977
    %v4164 = vsub.f32 1.0, %v3992
    %v4165 = vsub.f32 1.0, %v4007
    %v4166 = vsub.f32 1.0, %v4022
    %v4167 = vsub.f32 1.0, %v4037
    %v4168 = vsub.f32 1.0, %v4052
    %v4169 = vsub.f32 1.0, %v4067
    %v4170 = vsub.f32 1.0, %v4082
    %4179 = vrot.lane.b32.xlu0 %v4155, 96
    %v4180 = vpop.permute.xlu0 %4179
    %4181 = vrot.lane.b32.xlu0 %v4156, 96
    %v4182 = vpop.permute.xlu0 %4181
    %4183 = vrot.lane.b32.xlu0 %v4157, 96
    %v4184 = vpop.permute.xlu0 %4183
    %4185 = vrot.lane.b32.xlu0 %v4158, 96
    %v4186 = vpop.permute.xlu0 %4185
    %4187 = vrot.lane.b32.xlu0 %v4159, 96
    %v4188 = vpop.permute.xlu0 %4187
    %4189 = vrot.lane.b32.xlu0 %v4160, 96
    %v4190 = vpop.permute.xlu0 %4189
    %4191 = vrot.lane.b32.xlu0 %v4161, 96
    %v4192 = vpop.permute.xlu0 %4191
    %4193 = vrot.lane.b32.xlu0 %v4162, 96
    %v4194 = vpop.permute.xlu0 %4193
    %v4203 = vmul.f32 %v4163, %v4180
    %v4204 = vmul.f32 %v4164, %v4182
    %v4205 = vmul.f32 %v4165, %v4184
    %v4206 = vmul.f32 %v4166, %v4186
    %v4207 = vmul.f32 %v4167, %v4188
    %v4208 = vmul.f32 %v4168, %v4190
    %v4209 = vmul.f32 %v4169, %v4192
    %v4210 = vmul.f32 %v4170, %v4194
    %v4211 = vrot.slane %v3735, 7
    %v4212 = vrot.slane %v3736, 7
    %v4213 = vrot.slane %v3737, 7
    %v4214 = vrot.slane %v3738, 7
    %v4215 = vrot.slane %v3739, 7
    %v4216 = vrot.slane %v3740, 7
    %v4217 = vrot.slane %v3741, 7
    %v4226 = vmul.f32 %v3977, %v4211
    %v4227 = vmul.f32 %v3992, %v4212
    %v4228 = vmul.f32 %v4007, %v4213
    %v4229 = vmul.f32 %v4022, %v4214
    %v4230 = vmul.f32 %v4037, %v4215
    %v4231 = vmul.f32 %v4052, %v4216
    %v4232 = vmul.f32 %v4067, %v4217
    %v4233 = vmul.f32 %v4082, %v3763
    %v4234 = vadd.f32 %v4203, %v4226
    %v4235 = vadd.f32 %v4204, %v4227
    %v4236 = vadd.f32 %v4205, %v4228
    %v4237 = vadd.f32 %v4206, %v4229
    %v4238 = vadd.f32 %v4207, %v4230
    %v4239 = vadd.f32 %v4208, %v4231
    %v4240 = vadd.f32 %v4209, %v4232
    %v4241 = vadd.f32 %v4210, %v4233
    %v4250 = vrot.slane %v4234, 7
    %v4251 = vrot.slane %v4235, 6
    %v4252 = vsel %vm752, %v4251, %v4250
    %v4253 = vrot.slane %v4236, 5
    %v4254 = vsel %vm755, %v4253, %v4252
    %v4255 = vrot.slane %v4237, 4
    %v4256 = vsel %vm758, %v4255, %v4254
    %v4257 = vrot.slane %v4238, 3
    %v4258 = vsel %vm761, %v4257, %v4256
    %v4259 = vrot.slane %v4239, 2
    %v4260 = vsel %vm764, %v4259, %v4258
    %v4261 = vrot.slane %v4240, 1
    %v4262 = vsel %vm767, %v4261, %v4260
    %v4263 = vsel %vm770, %v4241, %v4262
    %4264 = vrot.lane.b32.xlu0 %v4263, 96
    %v4265 = vpop.permute.xlu0 %4264
    %v4266 = vsel %vm238, %v4265, 0
    %4268 = vmatpush.msra.mxu0 0.0
    %4269 = vmatpush.msra.mxu0 0.0
    %4270 = vmatpush.msra.mxu0 0.0
    %4271 = vmatpush.msra.mxu0 0.0
    %4272 = vmatpush.msra.mxu0 0.0
    %4273 = vmatpush.msra.mxu0 0.0
    %4274 = vmatpush.msra.mxu0 0.0
    %4275 = vmatpush.msra.mxu0 0.0
    %4276 = vmatpush.msra.mxu0 0.0
    %4277 = vmatpush.msra.mxu0 0.0
    %4278 = vmatpush.msra.mxu0 0.0
    %4279 = vmatpush.msra.mxu0 0.0
    %4280 = vmatpush.msra.mxu0 %v385
    %4281 = vmatpush.msra.mxu0 %v384
    %4282 = vmatpush.msra.mxu0 %v383
    %4283 = vmatpush.msra.mxu0 %v382
    %4284 = vmatmul.f32.gmra.mxu0 %v4266
    %v4285 = vpop.f32.mrf.mxu0
    %v4286 = vadd.f32 %v741, %v4285
    %4287 = vdwg.mxu0
    %4288 = vrot.lane.b32.xlu0 %v3851, 96
    %v4289 = vpop.permute.xlu0 %4288
    %v4290 = vsel %vm238, %v4289, 0
    %4292 = vmatpush.msra.mxu0 0.0
    %4293 = vmatpush.msra.mxu0 0.0
    %4294 = vmatpush.msra.mxu0 0.0
    %4295 = vmatpush.msra.mxu0 0.0
    %4296 = vmatpush.msra.mxu0 0.0
    %4297 = vmatpush.msra.mxu0 0.0
    %4298 = vmatpush.msra.mxu0 0.0
    %4299 = vmatpush.msra.mxu0 0.0
    %4300 = vmatpush.msra.mxu0 0.0
    %4301 = vmatpush.msra.mxu0 0.0
    %4302 = vmatpush.msra.mxu0 0.0
    %4303 = vmatpush.msra.mxu0 0.0
    %4304 = vmatpush.msra.mxu0 %v390
    %4305 = vmatpush.msra.mxu0 %v389
    %4306 = vmatpush.msra.mxu0 %v388
    %4307 = vmatpush.msra.mxu0 %v387
    %4308 = vmatmul.f32.gmra.mxu0 %v4290
    %v4309 = vpop.f32.mrf.mxu0
    %v4310 = vadd.f32 %v797, %v4309
    %4311 = vdwg.mxu0
    %v4312 = vadd.f32 %v4286, %v4310
    %v4313 = vxor.u32 %v4312, 2147483648
    %v4314 = vmul.f32 %v4313, 1.442695
    %v4315 = vpow.pop %v4314
    %v4316 = vadd.f32 %v4315, 1.0
    %v4317 = vrcp.pop %v4316
    %v4318 = vmul.f32 %v4316, %v4317
    %v4319 = vsub.f32 1.0, %v4318
    %v4320 = vmul.f32 %v4317, %v4319
    %v4321 = vadd.f32 %v4317, %v4320
    %vm4322 = vweird.f32 %v4316
    %vm4323 = vweird.f32 %v4317
    %vm4324 = vmor %vm4322, %vm4323
    %v4325 = vsel %vm4324, %v4317, %v4321
    %v4326 = vand.u32 2147483647, %v4316
    %vm4327 = vcmp.eq.f32.partialorder %v4326, 8.507059e+37
    %v4328 = vand.u32 %v4316, 2147483648
    %v4329 = vor.u32 1.1754944e-38, %v4328
    %v4330 = vsel %vm4327, %v4329, %v4325
    %v4331 = vmul.f32 1.0, %v4330
    %4333 = vrot.lane.b32.xlu0 %v4310, 64
    %v4334 = vpop.permute.xlu0 %4333
    %v4336 = vmul.f32 %v4331, %v4334
    %4338 = vrot.lane.b32.xlu0 %v4336, 64
    %v4339 = vpop.permute.xlu0 %4338
    %v4341 = vadd.f32 %v4286, %v4339
    %v4342 = vtanh.pop %v4341
    %v4343 = vsub.f32 1.0, %v4331
    %4345 = vrot.lane.b32.xlu0 %v4342, 96
    %v4346 = vpop.permute.xlu0 %4345
    %v4348 = vmul.f32 %v4343, %v4346
    %v4349 = vmul.f32 %v4331, %v3851
    %v4350 = vadd.f32 %v4348, %v4349
    %vm4351 = vcmp.eq.s32.totalorder %v393, 7
    %v4353 = vrot.slane %v4350, 1
    %v4354 = vrot.slane %v4350, 2
    %v4355 = vrot.slane %v4350, 3
    %v4356 = vrot.slane %v4350, 4
    %v4357 = vrot.slane %v4350, 5
    %v4358 = vrot.slane %v4350, 6
    %v4359 = vrot.slane %v4350, 7
    %v4360 = vsel %vm4351, 1, 0
    %vm4361 = vcmp.eq.s32.totalorder %v4360, 1
    %v4362 = vperm.slane %v4350, 0
    %v4363 = vperm.slane %v4353, 0
    %v4364 = vperm.slane %v4354, 0
    %v4365 = vperm.slane %v4355, 0
    %v4366 = vperm.slane %v4356, 0
    %v4367 = vperm.slane %v4357, 0
    %v4368 = vperm.slane %v4358, 0
    %v4369 = vperm.slane %v4359, 0
    %v4378 = vsel %vm4361, %v4362, %v3879
    %v4379 = vsel %vm4361, %v4363, %v3880
    %v4380 = vsel %vm4361, %v4364, %v3881
    %v4381 = vsel %vm4361, %v4365, %v3882
    %v4382 = vsel %vm4361, %v4366, %v3883
    %v4383 = vsel %vm4361, %v4367, %v3884
    %v4384 = vsel %vm4361, %v4368, %v3885
    %v4385 = vsel %vm4361, %v4369, %v3886
    %v4386 = vld [vmem:[%s0] sm:$0xff]
    %v4387 = vrot.slane %v4386, 1
    %v4388 = vrot.slane %v4386, 2
    %v4389 = vrot.slane %v4386, 3
    %v4390 = vrot.slane %v4386, 4
    %v4391 = vrot.slane %v4386, 5
    %v4392 = vrot.slane %v4386, 6
    %v4393 = vrot.slane %v4386, 7
    %v4394 = vperm.slane %v4386, 0
    %v4395 = vperm.slane %v4387, 0
    %v4396 = vperm.slane %v4388, 0
    %v4397 = vperm.slane %v4389, 0
    %v4398 = vperm.slane %v4390, 0
    %v4399 = vperm.slane %v4391, 0
    %v4400 = vperm.slane %v4392, 0
    %v4401 = vperm.slane %v4393, 0
    %vm4402 = vcmp.lt.s32.totalorder %v393, %v4394
    %vm4403 = vcmp.lt.s32.totalorder %v393, %v4395
    %vm4404 = vcmp.lt.s32.totalorder %v393, %v4396
    %vm4405 = vcmp.lt.s32.totalorder %v393, %v4397
    %vm4406 = vcmp.lt.s32.totalorder %v393, %v4398
    %vm4407 = vcmp.lt.s32.totalorder %v393, %v4399
    %vm4408 = vcmp.lt.s32.totalorder %v393, %v4400
    %vm4409 = vcmp.lt.s32.totalorder %v393, %v4401
    %v4410 = vsel %vm4402, 1, 0
    %v4411 = vsel %vm4403, 1, 0
    %v4412 = vsel %vm4404, 1, 0
    %v4413 = vsel %vm4405, 1, 0
    %v4414 = vsel %vm4406, 1, 0
    %v4415 = vsel %vm4407, 1, 0
    %v4416 = vsel %vm4408, 1, 0
    %v4417 = vsel %vm4409, 1, 0
    %4418 = vset.pattern.permute.xlu0 0
    %4419 = vperm.xlu0 %4418, %v4410
    %v4420 = vpop.permute.xlu0 %4419
    %4421 = vset.pattern.permute.xlu0 0
    %4422 = vperm.xlu0 %4421, %v4411
    %v4423 = vpop.permute.xlu0 %4422
    %4424 = vset.pattern.permute.xlu0 0
    %4425 = vperm.xlu0 %4424, %v4412
    %v4426 = vpop.permute.xlu0 %4425
    %4427 = vset.pattern.permute.xlu0 0
    %4428 = vperm.xlu0 %4427, %v4413
    %v4429 = vpop.permute.xlu0 %4428
    %4430 = vset.pattern.permute.xlu0 0
    %4431 = vperm.xlu0 %4430, %v4414
    %v4432 = vpop.permute.xlu0 %4431
    %4433 = vset.pattern.permute.xlu0 0
    %4434 = vperm.xlu0 %4433, %v4415
    %v4435 = vpop.permute.xlu0 %4434
    %4436 = vset.pattern.permute.xlu0 0
    %4437 = vperm.xlu0 %4436, %v4416
    %v4438 = vpop.permute.xlu0 %4437
    %4439 = vset.pattern.permute.xlu0 0
    %4440 = vperm.xlu0 %4439, %v4417
    %v4441 = vpop.permute.xlu0 %4440
    %vm4442 = vcmp.eq.s32.totalorder %v4420, 1
    %vm4443 = vcmp.eq.s32.totalorder %v4423, 1
    %vm4444 = vcmp.eq.s32.totalorder %v4426, 1
    %vm4445 = vcmp.eq.s32.totalorder %v4429, 1
    %vm4446 = vcmp.eq.s32.totalorder %v4432, 1
    %vm4447 = vcmp.eq.s32.totalorder %v4435, 1
    %vm4448 = vcmp.eq.s32.totalorder %v4438, 1
    %vm4449 = vcmp.eq.s32.totalorder %v4441, 1
    %v4450 = vsel %vm4442, %v4378, 0.0
    %v4451 = vsel %vm4443, %v4379, 0.0
    %v4452 = vsel %vm4444, %v4380, 0.0
    %v4453 = vsel %vm4445, %v4381, 0.0
    %v4454 = vsel %vm4446, %v4382, 0.0
    %v4455 = vsel %vm4447, %v4383, 0.0
    %v4456 = vsel %vm4448, %v4384, 0.0
    %v4457 = vsel %vm4449, %v4385, 0.0
    %v4458 = vld [vmem:[#allocation13] sm:$0xff]
    %v4459 = vld [vmem:[#allocation13 + $0x8] sm:$0xff]
    %v4460 = vld [vmem:[#allocation13 + $0x10] sm:$0xff]
    %v4461 = vld [vmem:[#allocation13 + $0x18] sm:$0xff]
    %v4462 = vld [vmem:[%s13] sm:$0x1]
    %v4464 = vperm.slane %v4462, 0
    %4474 = vrot.lane.b32.xlu0 %v4450, 96
    %v4475 = vpop.permute.xlu0 %4474
    %4476 = vrot.lane.b32.xlu0 %v4451, 96
    %v4477 = vpop.permute.xlu0 %4476
    %4478 = vrot.lane.b32.xlu0 %v4452, 96
    %v4479 = vpop.permute.xlu0 %4478
    %4480 = vrot.lane.b32.xlu0 %v4453, 96
    %v4481 = vpop.permute.xlu0 %4480
    %4482 = vrot.lane.b32.xlu0 %v4454, 96
    %v4483 = vpop.permute.xlu0 %4482
    %4484 = vrot.lane.b32.xlu0 %v4455, 96
    %v4485 = vpop.permute.xlu0 %4484
    %4486 = vrot.lane.b32.xlu0 %v4456, 96
    %v4487 = vpop.permute.xlu0 %4486
    %4488 = vrot.lane.b32.xlu0 %v4457, 96
    %v4489 = vpop.permute.xlu0 %4488
    %v4490 = vsel %vm238, %v4475, 0
    %v4492 = vsel %vm238, %v4477, 0
    %v4494 = vsel %vm238, %v4479, 0
    %v4496 = vsel %vm238, %v4481, 0
    %v4498 = vsel %vm238, %v4483, 0
    %v4500 = vsel %vm238, %v4485, 0
    %v4502 = vsel %vm238, %v4487, 0
    %v4504 = vsel %vm238, %v4489, 0
    %4506 = vmatpush.msra.mxu0 0.0
    %4507 = vmatpush.msra.mxu0 0.0
    %4508 = vmatpush.msra.mxu0 0.0
    %4509 = vmatpush.msra.mxu0 0.0
    %4510 = vmatpush.msra.mxu0 0.0
    %4511 = vmatpush.msra.mxu0 0.0
    %4512 = vmatpush.msra.mxu0 0.0
    %4513 = vmatpush.msra.mxu0 0.0
    %4514 = vmatpush.msra.mxu0 0.0
    %4515 = vmatpush.msra.mxu0 0.0
    %4516 = vmatpush.msra.mxu0 0.0
    %4517 = vmatpush.msra.mxu0 0.0
    %4518 = vmatpush.msra.mxu0 %v4461
    %4519 = vmatpush.msra.mxu0 %v4460
    %4520 = vmatpush.msra.mxu0 %v4459
    %4521 = vmatpush.msra.mxu0 %v4458
    %4522 = vmatmul.f32.gmra.mxu0 %v4490
    %v4523 = vpop.f32.mrf.mxu0
    %v4524 = vadd.f32 %v4464, %v4523
    %4525 = vmatmul.f32.gmra.mxu0 %v4492
    %v4526 = vpop.f32.mrf.mxu0
    %v4527 = vadd.f32 %v4464, %v4526
    %4528 = vmatmul.f32.gmra.mxu0 %v4494
    %v4529 = vpop.f32.mrf.mxu0
    %v4530 = vadd.f32 %v4464, %v4529
    %4531 = vmatmul.f32.gmra.mxu0 %v4496
    %v4532 = vpop.f32.mrf.mxu0
    %v4533 = vadd.f32 %v4464, %v4532
    %4534 = vmatmul.f32.gmra.mxu0 %v4498
    %v4535 = vpop.f32.mrf.mxu0
    %v4536 = vadd.f32 %v4464, %v4535
    %4537 = vmatmul.f32.gmra.mxu0 %v4500
    %v4538 = vpop.f32.mrf.mxu0
    %v4539 = vadd.f32 %v4464, %v4538
    %4540 = vmatmul.f32.gmra.mxu0 %v4502
    %v4541 = vpop.f32.mrf.mxu0
    %v4542 = vadd.f32 %v4464, %v4541
    %4543 = vmatmul.f32.gmra.mxu0 %v4504
    %v4544 = vpop.f32.mrf.mxu0
    %v4545 = vadd.f32 %v4464, %v4544
    %4546 = vdwg.mxu0
    %4548 = vrot.lane.b32.xlu0 %v4524, 96
    %v4549 = vpop.permute.xlu0 %4548
    %v4550 = vsel %vm238, %v4524, 0
    %v4552 = vsel %vm238, %v4549, 0
    %4554 = vmatpush.xpose.msra.mxu0 0.0
    %4555 = vmatpush.xpose.msra.mxu0 0.0
    %4556 = vmatpush.xpose.msra.mxu0 0.0
    %4557 = vmatpush.xpose.msra.mxu0 0.0
    %4558 = vmatpush.xpose.msra.mxu0 0.0
    %4559 = vmatpush.xpose.msra.mxu0 0.0
    %4560 = vmatpush.xpose.msra.mxu0 0.0
    %4561 = vmatpush.xpose.msra.mxu0 0.0
    %4562 = vmatpush.xpose.msra.mxu0 0.0
    %4563 = vmatpush.xpose.msra.mxu0 0.0
    %4564 = vmatpush.xpose.msra.mxu0 0.0
    %4565 = vmatpush.xpose.msra.mxu0 0.0
    %4566 = vmatpush.xpose.msra.mxu0 0.0
    %4567 = vmatpush.xpose.msra.mxu0 0.0
    %4568 = vmatpush.xpose.msra.mxu0 0.0
    %4569 = vmatpush.xpose.msra.mxu0 %v4552
    %4570 = vmatmul.f32.gmra.mxu0 %v4550
    %v4571 = vpop.f32.mrf.mxu0
    %v4572 = vadd.f32 0.0, %v4571
    %4573 = vdwg.mxu0
    %4575 = vrot.lane.b32.xlu0 %v4527, 96
    %v4576 = vpop.permute.xlu0 %4575
    %v4577 = vsel %vm238, %v4527, 0
    %v4579 = vsel %vm238, %v4576, 0
    %4581 = vmatpush.xpose.msra.mxu0 0.0
    %4582 = vmatpush.xpose.msra.mxu0 0.0
    %4583 = vmatpush.xpose.msra.mxu0 0.0
    %4584 = vmatpush.xpose.msra.mxu0 0.0
    %4585 = vmatpush.xpose.msra.mxu0 0.0
    %4586 = vmatpush.xpose.msra.mxu0 0.0
    %4587 = vmatpush.xpose.msra.mxu0 0.0
    %4588 = vmatpush.xpose.msra.mxu0 0.0
    %4589 = vmatpush.xpose.msra.mxu0 0.0
    %4590 = vmatpush.xpose.msra.mxu0 0.0
    %4591 = vmatpush.xpose.msra.mxu0 0.0
    %4592 = vmatpush.xpose.msra.mxu0 0.0
    %4593 = vmatpush.xpose.msra.mxu0 0.0
    %4594 = vmatpush.xpose.msra.mxu0 0.0
    %4595 = vmatpush.xpose.msra.mxu0 0.0
    %4596 = vmatpush.xpose.msra.mxu0 %v4579
    %4597 = vmatmul.f32.gmra.mxu0 %v4577
    %v4598 = vpop.f32.mrf.mxu0
    %v4599 = vadd.f32 0.0, %v4598
    %4600 = vdwg.mxu0
    %4602 = vrot.lane.b32.xlu0 %v4530, 96
    %v4603 = vpop.permute.xlu0 %4602
    %v4604 = vsel %vm238, %v4530, 0
    %v4606 = vsel %vm238, %v4603, 0
    %4608 = vmatpush.xpose.msra.mxu0 0.0
    %4609 = vmatpush.xpose.msra.mxu0 0.0
    %4610 = vmatpush.xpose.msra.mxu0 0.0
    %4611 = vmatpush.xpose.msra.mxu0 0.0
    %4612 = vmatpush.xpose.msra.mxu0 0.0
    %4613 = vmatpush.xpose.msra.mxu0 0.0
    %4614 = vmatpush.xpose.msra.mxu0 0.0
    %4615 = vmatpush.xpose.msra.mxu0 0.0
    %4616 = vmatpush.xpose.msra.mxu0 0.0
    %4617 = vmatpush.xpose.msra.mxu0 0.0
    %4618 = vmatpush.xpose.msra.mxu0 0.0
    %4619 = vmatpush.xpose.msra.mxu0 0.0
    %4620 = vmatpush.xpose.msra.mxu0 0.0
    %4621 = vmatpush.xpose.msra.mxu0 0.0
    %4622 = vmatpush.xpose.msra.mxu0 0.0
    %4623 = vmatpush.xpose.msra.mxu0 %v4606
    %4624 = vmatmul.f32.gmra.mxu0 %v4604
    %v4625 = vpop.f32.mrf.mxu0
    %v4626 = vadd.f32 0.0, %v4625
    %4627 = vdwg.mxu0
    %4629 = vrot.lane.b32.xlu0 %v4533, 96
    %v4630 = vpop.permute.xlu0 %4629
    %v4631 = vsel %vm238, %v4533, 0
    %v4633 = vsel %vm238, %v4630, 0
    %4635 = vmatpush.xpose.msra.mxu0 0.0
    %4636 = vmatpush.xpose.msra.mxu0 0.0
    %4637 = vmatpush.xpose.msra.mxu0 0.0
    %4638 = vmatpush.xpose.msra.mxu0 0.0
    %4639 = vmatpush.xpose.msra.mxu0 0.0
    %4640 = vmatpush.xpose.msra.mxu0 0.0
    %4641 = vmatpush.xpose.msra.mxu0 0.0
    %4642 = vmatpush.xpose.msra.mxu0 0.0
    %4643 = vmatpush.xpose.msra.mxu0 0.0
    %4644 = vmatpush.xpose.msra.mxu0 0.0
    %4645 = vmatpush.xpose.msra.mxu0 0.0
    %4646 = vmatpush.xpose.msra.mxu0 0.0
    %4647 = vmatpush.xpose.msra.mxu0 0.0
    %4648 = vmatpush.xpose.msra.mxu0 0.0
    %4649 = vmatpush.xpose.msra.mxu0 0.0
    %4650 = vmatpush.xpose.msra.mxu0 %v4633
    %4651 = vmatmul.f32.gmra.mxu0 %v4631
    %v4652 = vpop.f32.mrf.mxu0
    %v4653 = vadd.f32 0.0, %v4652
    %4654 = vdwg.mxu0
    %4656 = vrot.lane.b32.xlu0 %v4536, 96
    %v4657 = vpop.permute.xlu0 %4656
    %v4658 = vsel %vm238, %v4536, 0
    %v4660 = vsel %vm238, %v4657, 0
    %4662 = vmatpush.xpose.msra.mxu0 0.0
    %4663 = vmatpush.xpose.msra.mxu0 0.0
    %4664 = vmatpush.xpose.msra.mxu0 0.0
    %4665 = vmatpush.xpose.msra.mxu0 0.0
    %4666 = vmatpush.xpose.msra.mxu0 0.0
    %4667 = vmatpush.xpose.msra.mxu0 0.0
    %4668 = vmatpush.xpose.msra.mxu0 0.0
    %4669 = vmatpush.xpose.msra.mxu0 0.0
    %4670 = vmatpush.xpose.msra.mxu0 0.0
    %4671 = vmatpush.xpose.msra.mxu0 0.0
    %4672 = vmatpush.xpose.msra.mxu0 0.0
    %4673 = vmatpush.xpose.msra.mxu0 0.0
    %4674 = vmatpush.xpose.msra.mxu0 0.0
    %4675 = vmatpush.xpose.msra.mxu0 0.0
    %4676 = vmatpush.xpose.msra.mxu0 0.0
    %4677 = vmatpush.xpose.msra.mxu0 %v4660
    %4678 = vmatmul.f32.gmra.mxu0 %v4658
    %v4679 = vpop.f32.mrf.mxu0
    %v4680 = vadd.f32 0.0, %v4679
    %4681 = vdwg.mxu0
    %4683 = vrot.lane.b32.xlu0 %v4539, 96
    %v4684 = vpop.permute.xlu0 %4683
    %v4685 = vsel %vm238, %v4539, 0
    %v4687 = vsel %vm238, %v4684, 0
    %4689 = vmatpush.xpose.msra.mxu0 0.0
    %4690 = vmatpush.xpose.msra.mxu0 0.0
    %4691 = vmatpush.xpose.msra.mxu0 0.0
    %4692 = vmatpush.xpose.msra.mxu0 0.0
    %4693 = vmatpush.xpose.msra.mxu0 0.0
    %4694 = vmatpush.xpose.msra.mxu0 0.0
    %4695 = vmatpush.xpose.msra.mxu0 0.0
    %4696 = vmatpush.xpose.msra.mxu0 0.0
    %4697 = vmatpush.xpose.msra.mxu0 0.0
    %4698 = vmatpush.xpose.msra.mxu0 0.0
    %4699 = vmatpush.xpose.msra.mxu0 0.0
    %4700 = vmatpush.xpose.msra.mxu0 0.0
    %4701 = vmatpush.xpose.msra.mxu0 0.0
    %4702 = vmatpush.xpose.msra.mxu0 0.0
    %4703 = vmatpush.xpose.msra.mxu0 0.0
    %4704 = vmatpush.xpose.msra.mxu0 %v4687
    %4705 = vmatmul.f32.gmra.mxu0 %v4685
    %v4706 = vpop.f32.mrf.mxu0
    %v4707 = vadd.f32 0.0, %v4706
    %4708 = vdwg.mxu0
    %4710 = vrot.lane.b32.xlu0 %v4542, 96
    %v4711 = vpop.permute.xlu0 %4710
    %v4712 = vsel %vm238, %v4542, 0
    %v4714 = vsel %vm238, %v4711, 0
    %4716 = vmatpush.xpose.msra.mxu0 0.0
    %4717 = vmatpush.xpose.msra.mxu0 0.0
    %4718 = vmatpush.xpose.msra.mxu0 0.0
    %4719 = vmatpush.xpose.msra.mxu0 0.0
    %4720 = vmatpush.xpose.msra.mxu0 0.0
    %4721 = vmatpush.xpose.msra.mxu0 0.0
    %4722 = vmatpush.xpose.msra.mxu0 0.0
    %4723 = vmatpush.xpose.msra.mxu0 0.0
    %4724 = vmatpush.xpose.msra.mxu0 0.0
    %4725 = vmatpush.xpose.msra.mxu0 0.0
    %4726 = vmatpush.xpose.msra.mxu0 0.0
    %4727 = vmatpush.xpose.msra.mxu0 0.0
    %4728 = vmatpush.xpose.msra.mxu0 0.0
    %4729 = vmatpush.xpose.msra.mxu0 0.0
    %4730 = vmatpush.xpose.msra.mxu0 0.0
    %4731 = vmatpush.xpose.msra.mxu0 %v4714
    %4732 = vmatmul.f32.gmra.mxu0 %v4712
    %v4733 = vpop.f32.mrf.mxu0
    %v4734 = vadd.f32 0.0, %v4733
    %4735 = vdwg.mxu0
    %4737 = vrot.lane.b32.xlu0 %v4545, 96
    %v4738 = vpop.permute.xlu0 %4737
    %v4739 = vsel %vm238, %v4545, 0
    %v4741 = vsel %vm238, %v4738, 0
    %4743 = vmatpush.xpose.msra.mxu0 0.0
    %4744 = vmatpush.xpose.msra.mxu0 0.0
    %4745 = vmatpush.xpose.msra.mxu0 0.0
    %4746 = vmatpush.xpose.msra.mxu0 0.0
    %4747 = vmatpush.xpose.msra.mxu0 0.0
    %4748 = vmatpush.xpose.msra.mxu0 0.0
    %4749 = vmatpush.xpose.msra.mxu0 0.0
    %4750 = vmatpush.xpose.msra.mxu0 0.0
    %4751 = vmatpush.xpose.msra.mxu0 0.0
    %4752 = vmatpush.xpose.msra.mxu0 0.0
    %4753 = vmatpush.xpose.msra.mxu0 0.0
    %4754 = vmatpush.xpose.msra.mxu0 0.0
    %4755 = vmatpush.xpose.msra.mxu0 0.0
    %4756 = vmatpush.xpose.msra.mxu0 0.0
    %4757 = vmatpush.xpose.msra.mxu0 0.0
    %4758 = vmatpush.xpose.msra.mxu0 %v4741
    %4759 = vmatmul.f32.gmra.mxu0 %v4739
    %v4760 = vpop.f32.mrf.mxu0
    %v4761 = vadd.f32 0.0, %v4760
    %4762 = vdwg.mxu0
    %v4763 = vmul.f32 %v4572, 0.17677669
    %v4764 = vmul.f32 %v4599, 0.17677669
    %v4765 = vmul.f32 %v4626, 0.17677669
    %v4766 = vmul.f32 %v4653, 0.17677669
    %v4767 = vmul.f32 %v4680, 0.17677669
    %v4768 = vmul.f32 %v4707, 0.17677669
    %v4769 = vmul.f32 %v4734, 0.17677669
    %v4770 = vmul.f32 %v4761, 0.17677669
    %v4771 = vlaneseq
    %v4772 = vand.u32 %v4771, 127
    %vm4773 = vcmp.le.s32.totalorder %v4772, %v393
    %4774 = vset.pattern.permute.xlu0 0
    %4775 = vperm.xlu0 %4774, %v4394
    %v4776 = vpop.permute.xlu0 %4775
    %4777 = vset.pattern.permute.xlu0 0
    %4778 = vperm.xlu0 %4777, %v4395
    %v4779 = vpop.permute.xlu0 %4778
    %4780 = vset.pattern.permute.xlu0 0
    %4781 = vperm.xlu0 %4780, %v4396
    %v4782 = vpop.permute.xlu0 %4781
    %4783 = vset.pattern.permute.xlu0 0
    %4784 = vperm.xlu0 %4783, %v4397
    %v4785 = vpop.permute.xlu0 %4784
    %4786 = vset.pattern.permute.xlu0 0
    %4787 = vperm.xlu0 %4786, %v4398
    %v4788 = vpop.permute.xlu0 %4787
    %4789 = vset.pattern.permute.xlu0 0
    %4790 = vperm.xlu0 %4789, %v4399
    %v4791 = vpop.permute.xlu0 %4790
    %4792 = vset.pattern.permute.xlu0 0
    %4793 = vperm.xlu0 %4792, %v4400
    %v4794 = vpop.permute.xlu0 %4793
    %4795 = vset.pattern.permute.xlu0 0
    %4796 = vperm.xlu0 %4795, %v4401
    %v4797 = vpop.permute.xlu0 %4796
    %vm4798 = vcmp.lt.s32.totalorder %v4772, %v4776
    %vm4799 = vcmp.lt.s32.totalorder %v4772, %v4779
    %vm4800 = vcmp.lt.s32.totalorder %v4772, %v4782
    %vm4801 = vcmp.lt.s32.totalorder %v4772, %v4785
    %vm4802 = vcmp.lt.s32.totalorder %v4772, %v4788
    %vm4803 = vcmp.lt.s32.totalorder %v4772, %v4791
    %vm4804 = vcmp.lt.s32.totalorder %v4772, %v4794
    %vm4805 = vcmp.lt.s32.totalorder %v4772, %v4797
    %vm4806 = vmand %vm4773, %vm4798
    %vm4807 = vmand %vm4773, %vm4799
    %vm4808 = vmand %vm4773, %vm4800
    %vm4809 = vmand %vm4773, %vm4801
    %vm4810 = vmand %vm4773, %vm4802
    %vm4811 = vmand %vm4773, %vm4803
    %vm4812 = vmand %vm4773, %vm4804
    %vm4813 = vmand %vm4773, %vm4805
    %v4814 = vsel %vm4806, %v4763, -1e+09
    %v4815 = vsel %vm4807, %v4764, -1e+09
    %v4816 = vsel %vm4808, %v4765, -1e+09
    %v4817 = vsel %vm4809, %v4766, -1e+09
    %v4818 = vsel %vm4810, %v4767, -1e+09
    %v4819 = vsel %vm4811, %v4768, -1e+09
    %v4820 = vsel %vm4812, %v4769, -1e+09
    %v4821 = vsel %vm4813, %v4770, -1e+09
    %vm4822 = vcmask 64512
    %v4823 = vsel %vm4822, %v4814, -inf
    %4824 = vmax.xlane.f32.xlu0 %v4823
    %v4825 = vpop.xlane.xlu0 %4824
    %v4826 = vsel %vm4822, %v4815, -inf
    %4827 = vmax.xlane.f32.xlu0 %v4826
    %v4828 = vpop.xlane.xlu0 %4827
    %v4829 = vsel %vm4822, %v4816, -inf
    %4830 = vmax.xlane.f32.xlu0 %v4829
    %v4831 = vpop.xlane.xlu0 %4830
    %v4832 = vsel %vm4822, %v4817, -inf
    %4833 = vmax.xlane.f32.xlu0 %v4832
    %v4834 = vpop.xlane.xlu0 %4833
    %v4835 = vsel %vm4822, %v4818, -inf
    %4836 = vmax.xlane.f32.xlu0 %v4835
    %v4837 = vpop.xlane.xlu0 %4836
    %v4838 = vsel %vm4822, %v4819, -inf
    %4839 = vmax.xlane.f32.xlu0 %v4838
    %v4840 = vpop.xlane.xlu0 %4839
    %v4841 = vsel %vm4822, %v4820, -inf
    %4842 = vmax.xlane.f32.xlu0 %v4841
    %v4843 = vpop.xlane.xlu0 %4842
    %v4844 = vsel %vm4822, %v4821, -inf
    %4845 = vmax.xlane.f32.xlu0 %v4844
    %v4846 = vpop.xlane.xlu0 %4845
    %v4847 = vsub.f32 %v4814, %v4825
    %v4848 = vsub.f32 %v4815, %v4828
    %v4849 = vsub.f32 %v4816, %v4831
    %v4850 = vsub.f32 %v4817, %v4834
    %v4851 = vsub.f32 %v4818, %v4837
    %v4852 = vsub.f32 %v4819, %v4840
    %v4853 = vsub.f32 %v4820, %v4843
    %v4854 = vsub.f32 %v4821, %v4846
    %v4855 = vmul.f32 %v4847, 1.442695
    %v4856 = vpow.pop %v4855
    %v4857 = vmul.f32 %v4848, 1.442695
    %v4858 = vpow.pop %v4857
    %v4859 = vmul.f32 %v4849, 1.442695
    %v4860 = vpow.pop %v4859
    %v4861 = vmul.f32 %v4850, 1.442695
    %v4862 = vpow.pop %v4861
    %v4863 = vmul.f32 %v4851, 1.442695
    %v4864 = vpow.pop %v4863
    %v4865 = vmul.f32 %v4852, 1.442695
    %v4866 = vpow.pop %v4865
    %v4867 = vmul.f32 %v4853, 1.442695
    %v4868 = vpow.pop %v4867
    %v4869 = vmul.f32 %v4854, 1.442695
    %v4870 = vpow.pop %v4869
    %v4871 = vsel %vm4822, %v4856, 0.0
    %4872 = vadd.xlane.f32.xlu0 %v4871
    %v4873 = vpop.xlane.xlu0 %4872
    %v4874 = vsel %vm4822, %v4858, 0.0
    %4875 = vadd.xlane.f32.xlu0 %v4874
    %v4876 = vpop.xlane.xlu0 %4875
    %v4877 = vsel %vm4822, %v4860, 0.0
    %4878 = vadd.xlane.f32.xlu0 %v4877
    %v4879 = vpop.xlane.xlu0 %4878
    %v4880 = vsel %vm4822, %v4862, 0.0
    %4881 = vadd.xlane.f32.xlu0 %v4880
    %v4882 = vpop.xlane.xlu0 %4881
    %v4883 = vsel %vm4822, %v4864, 0.0
    %4884 = vadd.xlane.f32.xlu0 %v4883
    %v4885 = vpop.xlane.xlu0 %4884
    %v4886 = vsel %vm4822, %v4866, 0.0
    %4887 = vadd.xlane.f32.xlu0 %v4886
    %v4888 = vpop.xlane.xlu0 %4887
    %v4889 = vsel %vm4822, %v4868, 0.0
    %4890 = vadd.xlane.f32.xlu0 %v4889
    %v4891 = vpop.xlane.xlu0 %4890
    %v4892 = vsel %vm4822, %v4870, 0.0
    %4893 = vadd.xlane.f32.xlu0 %v4892
    %v4894 = vpop.xlane.xlu0 %4893
    %v4895 = vrcp.pop %v4873
    %v4896 = vrcp.pop %v4876
    %v4897 = vrcp.pop %v4879
    %v4898 = vrcp.pop %v4882
    %v4899 = vrcp.pop %v4885
    %v4900 = vrcp.pop %v4888
    %v4901 = vrcp.pop %v4891
    %v4902 = vrcp.pop %v4894
    %v4903 = vmul.f32 %v4856, %v4895
    %v4904 = vmul.f32 %v4858, %v4896
    %v4905 = vmul.f32 %v4860, %v4897
    %v4906 = vmul.f32 %v4862, %v4898
    %v4907 = vmul.f32 %v4864, %v4899
    %v4908 = vmul.f32 %v4866, %v4900
    %v4909 = vmul.f32 %v4868, %v4901
    %v4910 = vmul.f32 %v4870, %v4902
    %4911 = vrot.lane.b32.xlu0 %v4524, 64
    %v4912 = vpop.permute.xlu0 %4911
    %v4915 = vsel %vm4822, %v4903, 0
    %4917 = vmatpush.msra.mxu0 0.0
    %4918 = vmatpush.msra.mxu0 0.0
    %4919 = vmatpush.msra.mxu0 0.0
    %4920 = vmatpush.msra.mxu0 0.0
    %4921 = vmatpush.msra.mxu0 0.0
    %4922 = vmatpush.msra.mxu0 0.0
    %4923 = vmatpush.msra.mxu0 0.0
    %4924 = vmatpush.msra.mxu0 0.0
    %4925 = vmatpush.msra.mxu0 0.0
    %4926 = vmatpush.msra.mxu0 0.0
    %4927 = vmatpush.msra.mxu0 0.0
    %4928 = vmatpush.msra.mxu0 0.0
    %4929 = vmatpush.msra.mxu0 0.0
    %4930 = vmatpush.msra.mxu0 0.0
    %4931 = vmatpush.msra.mxu0 0.0
    %4932 = vmatpush.msra.mxu0 %v4912
    %4933 = vmatmul.f32.gmra.mxu0 %v4915
    %v4934 = vpop.f32.mrf.mxu0
    %v4935 = vadd.f32 0.0, %v4934
    %4936 = vdwg.mxu0
    %4937 = vrot.lane.b32.xlu0 %v4527, 64
    %v4938 = vpop.permute.xlu0 %4937
    %v4941 = vsel %vm4822, %v4904, 0
    %4943 = vmatpush.msra.mxu0 0.0
    %4944 = vmatpush.msra.mxu0 0.0
    %4945 = vmatpush.msra.mxu0 0.0
    %4946 = vmatpush.msra.mxu0 0.0
    %4947 = vmatpush.msra.mxu0 0.0
    %4948 = vmatpush.msra.mxu0 0.0
    %4949 = vmatpush.msra.mxu0 0.0
    %4950 = vmatpush.msra.mxu0 0.0
    %4951 = vmatpush.msra.mxu0 0.0
    %4952 = vmatpush.msra.mxu0 0.0
    %4953 = vmatpush.msra.mxu0 0.0
    %4954 = vmatpush.msra.mxu0 0.0
    %4955 = vmatpush.msra.mxu0 0.0
    %4956 = vmatpush.msra.mxu0 0.0
    %4957 = vmatpush.msra.mxu0 0.0
    %4958 = vmatpush.msra.mxu0 %v4938
    %4959 = vmatmul.f32.gmra.mxu0 %v4941
    %v4960 = vpop.f32.mrf.mxu0
    %v4961 = vadd.f32 0.0, %v4960
    %4962 = vdwg.mxu0
    %4963 = vrot.lane.b32.xlu0 %v4530, 64
    %v4964 = vpop.permute.xlu0 %4963
    %v4967 = vsel %vm4822, %v4905, 0
    %4969 = vmatpush.msra.mxu0 0.0
    %4970 = vmatpush.msra.mxu0 0.0
    %4971 = vmatpush.msra.mxu0 0.0
    %4972 = vmatpush.msra.mxu0 0.0
    %4973 = vmatpush.msra.mxu0 0.0
    %4974 = vmatpush.msra.mxu0 0.0
    %4975 = vmatpush.msra.mxu0 0.0
    %4976 = vmatpush.msra.mxu0 0.0
    %4977 = vmatpush.msra.mxu0 0.0
    %4978 = vmatpush.msra.mxu0 0.0
    %4979 = vmatpush.msra.mxu0 0.0
    %4980 = vmatpush.msra.mxu0 0.0
    %4981 = vmatpush.msra.mxu0 0.0
    %4982 = vmatpush.msra.mxu0 0.0
    %4983 = vmatpush.msra.mxu0 0.0
    %4984 = vmatpush.msra.mxu0 %v4964
    %4985 = vmatmul.f32.gmra.mxu0 %v4967
    %v4986 = vpop.f32.mrf.mxu0
    %v4987 = vadd.f32 0.0, %v4986
    %4988 = vdwg.mxu0
    %4989 = vrot.lane.b32.xlu0 %v4533, 64
    %v4990 = vpop.permute.xlu0 %4989
    %v4993 = vsel %vm4822, %v4906, 0
    %4995 = vmatpush.msra.mxu0 0.0
    %4996 = vmatpush.msra.mxu0 0.0
    %4997 = vmatpush.msra.mxu0 0.0
    %4998 = vmatpush.msra.mxu0 0.0
    %4999 = vmatpush.msra.mxu0 0.0
    %5000 = vmatpush.msra.mxu0 0.0
    %5001 = vmatpush.msra.mxu0 0.0
    %5002 = vmatpush.msra.mxu0 0.0
    %5003 = vmatpush.msra.mxu0 0.0
    %5004 = vmatpush.msra.mxu0 0.0
    %5005 = vmatpush.msra.mxu0 0.0
    %5006 = vmatpush.msra.mxu0 0.0
    %5007 = vmatpush.msra.mxu0 0.0
    %5008 = vmatpush.msra.mxu0 0.0
    %5009 = vmatpush.msra.mxu0 0.0
    %5010 = vmatpush.msra.mxu0 %v4990
    %5011 = vmatmul.f32.gmra.mxu0 %v4993
    %v5012 = vpop.f32.mrf.mxu0
    %v5013 = vadd.f32 0.0, %v5012
    %5014 = vdwg.mxu0
    %5015 = vrot.lane.b32.xlu0 %v4536, 64
    %v5016 = vpop.permute.xlu0 %5015
    %v5019 = vsel %vm4822, %v4907, 0
    %5021 = vmatpush.msra.mxu0 0.0
    %5022 = vmatpush.msra.mxu0 0.0
    %5023 = vmatpush.msra.mxu0 0.0
    %5024 = vmatpush.msra.mxu0 0.0
    %5025 = vmatpush.msra.mxu0 0.0
    %5026 = vmatpush.msra.mxu0 0.0
    %5027 = vmatpush.msra.mxu0 0.0
    %5028 = vmatpush.msra.mxu0 0.0
    %5029 = vmatpush.msra.mxu0 0.0
    %5030 = vmatpush.msra.mxu0 0.0
    %5031 = vmatpush.msra.mxu0 0.0
    %5032 = vmatpush.msra.mxu0 0.0
    %5033 = vmatpush.msra.mxu0 0.0
    %5034 = vmatpush.msra.mxu0 0.0
    %5035 = vmatpush.msra.mxu0 0.0
    %5036 = vmatpush.msra.mxu0 %v5016
    %5037 = vmatmul.f32.gmra.mxu0 %v5019
    %v5038 = vpop.f32.mrf.mxu0
    %v5039 = vadd.f32 0.0, %v5038
    %5040 = vdwg.mxu0
    %5041 = vrot.lane.b32.xlu0 %v4539, 64
    %v5042 = vpop.permute.xlu0 %5041
    %v5045 = vsel %vm4822, %v4908, 0
    %5047 = vmatpush.msra.mxu0 0.0
    %5048 = vmatpush.msra.mxu0 0.0
    %5049 = vmatpush.msra.mxu0 0.0
    %5050 = vmatpush.msra.mxu0 0.0
    %5051 = vmatpush.msra.mxu0 0.0
    %5052 = vmatpush.msra.mxu0 0.0
    %5053 = vmatpush.msra.mxu0 0.0
    %5054 = vmatpush.msra.mxu0 0.0
    %5055 = vmatpush.msra.mxu0 0.0
    %5056 = vmatpush.msra.mxu0 0.0
    %5057 = vmatpush.msra.mxu0 0.0
    %5058 = vmatpush.msra.mxu0 0.0
    %5059 = vmatpush.msra.mxu0 0.0
    %5060 = vmatpush.msra.mxu0 0.0
    %5061 = vmatpush.msra.mxu0 0.0
    %5062 = vmatpush.msra.mxu0 %v5042
    %5063 = vmatmul.f32.gmra.mxu0 %v5045
    %v5064 = vpop.f32.mrf.mxu0
    %v5065 = vadd.f32 0.0, %v5064
    %5066 = vdwg.mxu0
    %5067 = vrot.lane.b32.xlu0 %v4542, 64
    %v5068 = vpop.permute.xlu0 %5067
    %v5071 = vsel %vm4822, %v4909, 0
    %5073 = vmatpush.msra.mxu0 0.0
    %5074 = vmatpush.msra.mxu0 0.0
    %5075 = vmatpush.msra.mxu0 0.0
    %5076 = vmatpush.msra.mxu0 0.0
    %5077 = vmatpush.msra.mxu0 0.0
    %5078 = vmatpush.msra.mxu0 0.0
    %5079 = vmatpush.msra.mxu0 0.0
    %5080 = vmatpush.msra.mxu0 0.0
    %5081 = vmatpush.msra.mxu0 0.0
    %5082 = vmatpush.msra.mxu0 0.0
    %5083 = vmatpush.msra.mxu0 0.0
    %5084 = vmatpush.msra.mxu0 0.0
    %5085 = vmatpush.msra.mxu0 0.0
    %5086 = vmatpush.msra.mxu0 0.0
    %5087 = vmatpush.msra.mxu0 0.0
    %5088 = vmatpush.msra.mxu0 %v5068
    %5089 = vmatmul.f32.gmra.mxu0 %v5071
    %v5090 = vpop.f32.mrf.mxu0
    %v5091 = vadd.f32 0.0, %v5090
    %5092 = vdwg.mxu0
    %5093 = vrot.lane.b32.xlu0 %v4545, 64
    %v5094 = vpop.permute.xlu0 %5093
    %v5097 = vsel %vm4822, %v4910, 0
    %5099 = vmatpush.msra.mxu0 0.0
    %5100 = vmatpush.msra.mxu0 0.0
    %5101 = vmatpush.msra.mxu0 0.0
    %5102 = vmatpush.msra.mxu0 0.0
    %5103 = vmatpush.msra.mxu0 0.0
    %5104 = vmatpush.msra.mxu0 0.0
    %5105 = vmatpush.msra.mxu0 0.0
    %5106 = vmatpush.msra.mxu0 0.0
    %5107 = vmatpush.msra.mxu0 0.0
    %5108 = vmatpush.msra.mxu0 0.0
    %5109 = vmatpush.msra.mxu0 0.0
    %5110 = vmatpush.msra.mxu0 0.0
    %5111 = vmatpush.msra.mxu0 0.0
    %5112 = vmatpush.msra.mxu0 0.0
    %5113 = vmatpush.msra.mxu0 0.0
    %5114 = vmatpush.msra.mxu0 %v5094
    %5115 = vmatmul.f32.gmra.mxu0 %v5097
    %v5116 = vpop.f32.mrf.mxu0
    %v5117 = vadd.f32 0.0, %v5116
    %5118 = vdwg.mxu0
    %v5119 = vld [vmem:[#allocation14] sm:$0xff]
    %v5120 = vld [vmem:[#allocation14 + $0x8] sm:$0xff]
    %v5121 = vld [vmem:[#allocation14 + $0x10] sm:$0xff]
    %v5122 = vld [vmem:[#allocation14 + $0x18] sm:$0xff]
    %v5123 = vld [vmem:[%s15] sm:$0x1]
    %v5125 = vperm.slane %v5123, 0
    %v5128 = vsel %vm238, %v4935, 0
    %v5131 = vsel %vm238, %v4961, 0
    %v5134 = vsel %vm238, %v4987, 0
    %v5137 = vsel %vm238, %v5013, 0
    %v5140 = vsel %vm238, %v5039, 0
    %v5143 = vsel %vm238, %v5065, 0
    %v5146 = vsel %vm238, %v5091, 0
    %v5149 = vsel %vm238, %v5117, 0
    %5151 = vmatpush.msra.mxu0 0.0
    %5152 = vmatpush.msra.mxu0 0.0
    %5153 = vmatpush.msra.mxu0 0.0
    %5154 = vmatpush.msra.mxu0 0.0
    %5155 = vmatpush.msra.mxu0 0.0
    %5156 = vmatpush.msra.mxu0 0.0
    %5157 = vmatpush.msra.mxu0 0.0
    %5158 = vmatpush.msra.mxu0 0.0
    %5159 = vmatpush.msra.mxu0 0.0
    %5160 = vmatpush.msra.mxu0 0.0
    %5161 = vmatpush.msra.mxu0 0.0
    %5162 = vmatpush.msra.mxu0 0.0
    %5163 = vmatpush.msra.mxu0 %v5122
    %5164 = vmatpush.msra.mxu0 %v5121
    %5165 = vmatpush.msra.mxu0 %v5120
    %5166 = vmatpush.msra.mxu0 %v5119
    %5167 = vmatmul.f32.gmra.mxu0 %v5128
    %v5168 = vpop.f32.mrf.mxu0
    %v5169 = vadd.f32 %v5125, %v5168
    %5170 = vmatmul.f32.gmra.mxu0 %v5131
    %v5171 = vpop.f32.mrf.mxu0
    %v5172 = vadd.f32 %v5125, %v5171
    %5173 = vmatmul.f32.gmra.mxu0 %v5134
    %v5174 = vpop.f32.mrf.mxu0
    %v5175 = vadd.f32 %v5125, %v5174
    %5176 = vmatmul.f32.gmra.mxu0 %v5137
    %v5177 = vpop.f32.mrf.mxu0
    %v5178 = vadd.f32 %v5125, %v5177
    %5179 = vmatmul.f32.gmra.mxu0 %v5140
    %v5180 = vpop.f32.mrf.mxu0
    %v5181 = vadd.f32 %v5125, %v5180
    %5182 = vmatmul.f32.gmra.mxu0 %v5143
    %v5183 = vpop.f32.mrf.mxu0
    %v5184 = vadd.f32 %v5125, %v5183
    %5185 = vmatmul.f32.gmra.mxu0 %v5146
    %v5186 = vpop.f32.mrf.mxu0
    %v5187 = vadd.f32 %v5125, %v5186
    %5188 = vmatmul.f32.gmra.mxu0 %v5149
    %v5189 = vpop.f32.mrf.mxu0
    %v5190 = vadd.f32 %v5125, %v5189
    %5191 = vdwg.mxu0
    %5200 = vrot.lane.b32.xlu0 %v5169, 32
    %v5201 = vpop.permute.xlu0 %5200
    %5202 = vrot.lane.b32.xlu0 %v5172, 32
    %v5203 = vpop.permute.xlu0 %5202
    %5204 = vrot.lane.b32.xlu0 %v5175, 32
    %v5205 = vpop.permute.xlu0 %5204
    %5206 = vrot.lane.b32.xlu0 %v5178, 32
    %v5207 = vpop.permute.xlu0 %5206
    %5208 = vrot.lane.b32.xlu0 %v5181, 32
    %v5209 = vpop.permute.xlu0 %5208
    %5210 = vrot.lane.b32.xlu0 %v5184, 32
    %v5211 = vpop.permute.xlu0 %5210
    %5212 = vrot.lane.b32.xlu0 %v5187, 32
    %v5213 = vpop.permute.xlu0 %5212
    %5214 = vrot.lane.b32.xlu0 %v5190, 32
    %v5215 = vpop.permute.xlu0 %5214
    %v5224 = vadd.f32 %v4450, %v5201
    %v5225 = vadd.f32 %v4451, %v5203
    %v5226 = vadd.f32 %v4452, %v5205
    %v5227 = vadd.f32 %v4453, %v5207
    %v5228 = vadd.f32 %v4454, %v5209
    %v5229 = vadd.f32 %v4455, %v5211
    %v5230 = vadd.f32 %v4456, %v5213
    %v5231 = vadd.f32 %v4457, %v5215
    %v5232 = vld [vmem:[#allocation16] sm:$0xff]
    %v5233 = vld [vmem:[#allocation16 + $0x8] sm:$0xff]
    %v5234 = vld [vmem:[#allocation16 + $0x10] sm:$0xff]
    %v5235 = vld [vmem:[#allocation16 + $0x18] sm:$0xff]
    %v5236 = vld [vmem:[%s17] sm:$0x1]
    %v5238 = vperm.slane %v5236, 0
    %5248 = vrot.lane.b32.xlu0 %v5224, 96
    %v5249 = vpop.permute.xlu0 %5248
    %5250 = vrot.lane.b32.xlu0 %v5225, 96
    %v5251 = vpop.permute.xlu0 %5250
    %5252 = vrot.lane.b32.xlu0 %v5226, 96
    %v5253 = vpop.permute.xlu0 %5252
    %5254 = vrot.lane.b32.xlu0 %v5227, 96
    %v5255 = vpop.permute.xlu0 %5254
    %5256 = vrot.lane.b32.xlu0 %v5228, 96
    %v5257 = vpop.permute.xlu0 %5256
    %5258 = vrot.lane.b32.xlu0 %v5229, 96
    %v5259 = vpop.permute.xlu0 %5258
    %5260 = vrot.lane.b32.xlu0 %v5230, 96
    %v5261 = vpop.permute.xlu0 %5260
    %5262 = vrot.lane.b32.xlu0 %v5231, 96
    %v5263 = vpop.permute.xlu0 %5262
    %v5264 = vsel %vm238, %v5249, 0
    %v5266 = vsel %vm238, %v5251, 0
    %v5268 = vsel %vm238, %v5253, 0
    %v5270 = vsel %vm238, %v5255, 0
    %v5272 = vsel %vm238, %v5257, 0
    %v5274 = vsel %vm238, %v5259, 0
    %v5276 = vsel %vm238, %v5261, 0
    %v5278 = vsel %vm238, %v5263, 0
    %5280 = vmatpush.msra.mxu0 0.0
    %5281 = vmatpush.msra.mxu0 0.0
    %5282 = vmatpush.msra.mxu0 0.0
    %5283 = vmatpush.msra.mxu0 0.0
    %5284 = vmatpush.msra.mxu0 0.0
    %5285 = vmatpush.msra.mxu0 0.0
    %5286 = vmatpush.msra.mxu0 0.0
    %5287 = vmatpush.msra.mxu0 0.0
    %5288 = vmatpush.msra.mxu0 0.0
    %5289 = vmatpush.msra.mxu0 0.0
    %5290 = vmatpush.msra.mxu0 0.0
    %5291 = vmatpush.msra.mxu0 0.0
    %5292 = vmatpush.msra.mxu0 %v5235
    %5293 = vmatpush.msra.mxu0 %v5234
    %5294 = vmatpush.msra.mxu0 %v5233
    %5295 = vmatpush.msra.mxu0 %v5232
    %5296 = vmatmul.f32.gmra.mxu0 %v5264
    %v5297 = vpop.f32.mrf.mxu0
    %v5298 = vadd.f32 %v5238, %v5297
    %5299 = vmatmul.f32.gmra.mxu0 %v5266
    %v5300 = vpop.f32.mrf.mxu0
    %v5301 = vadd.f32 %v5238, %v5300
    %5302 = vmatmul.f32.gmra.mxu0 %v5268
    %v5303 = vpop.f32.mrf.mxu0
    %v5304 = vadd.f32 %v5238, %v5303
    %5305 = vmatmul.f32.gmra.mxu0 %v5270
    %v5306 = vpop.f32.mrf.mxu0
    %v5307 = vadd.f32 %v5238, %v5306
    %5308 = vmatmul.f32.gmra.mxu0 %v5272
    %v5309 = vpop.f32.mrf.mxu0
    %v5310 = vadd.f32 %v5238, %v5309
    %5311 = vmatmul.f32.gmra.mxu0 %v5274
    %v5312 = vpop.f32.mrf.mxu0
    %v5313 = vadd.f32 %v5238, %v5312
    %5314 = vmatmul.f32.gmra.mxu0 %v5276
    %v5315 = vpop.f32.mrf.mxu0
    %v5316 = vadd.f32 %v5238, %v5315
    %5317 = vmatmul.f32.gmra.mxu0 %v5278
    %v5318 = vpop.f32.mrf.mxu0
    %v5319 = vadd.f32 %v5238, %v5318
    %5320 = vdwg.mxu0
    %v5321 = vmax.f32 %v5298, 0.0
    %v5322 = vmax.f32 %v5301, 0.0
    %v5323 = vmax.f32 %v5304, 0.0
    %v5324 = vmax.f32 %v5307, 0.0
    %v5325 = vmax.f32 %v5310, 0.0
    %v5326 = vmax.f32 %v5313, 0.0
    %v5327 = vmax.f32 %v5316, 0.0
    %v5328 = vmax.f32 %v5319, 0.0
    %v5329 = vld [vmem:[#allocation17] sm:$0xff]
    %v5330 = vld [vmem:[#allocation17 + $0x8] sm:$0xff]
    %v5331 = vld [vmem:[#allocation17 + $0x10] sm:$0xff]
    %v5332 = vld [vmem:[#allocation17 + $0x18] sm:$0xff]
    %v5333 = vld [vmem:[%s19] sm:$0x1]
    %v5335 = vperm.slane %v5333, 0
    %v5338 = vsel %vm238, %v5321, 0
    %v5341 = vsel %vm238, %v5322, 0
    %v5344 = vsel %vm238, %v5323, 0
    %v5347 = vsel %vm238, %v5324, 0
    %v5350 = vsel %vm238, %v5325, 0
    %v5353 = vsel %vm238, %v5326, 0
    %v5356 = vsel %vm238, %v5327, 0
    %v5359 = vsel %vm238, %v5328, 0
    %5361 = vmatpush.msra.mxu0 0.0
    %5362 = vmatpush.msra.mxu0 0.0
    %5363 = vmatpush.msra.mxu0 0.0
    %5364 = vmatpush.msra.mxu0 0.0
    %5365 = vmatpush.msra.mxu0 0.0
    %5366 = vmatpush.msra.mxu0 0.0
    %5367 = vmatpush.msra.mxu0 0.0
    %5368 = vmatpush.msra.mxu0 0.0
    %5369 = vmatpush.msra.mxu0 0.0
    %5370 = vmatpush.msra.mxu0 0.0
    %5371 = vmatpush.msra.mxu0 0.0
    %5372 = vmatpush.msra.mxu0 0.0
    %5373 = vmatpush.msra.mxu0 %v5332
    %5374 = vmatpush.msra.mxu0 %v5331
    %5375 = vmatpush.msra.mxu0 %v5330
    %5376 = vmatpush.msra.mxu0 %v5329
    %5377 = vmatmul.f32.gmra.mxu0 %v5338
    %v5378 = vpop.f32.mrf.mxu0
    %v5379 = vadd.f32 %v5335, %v5378
    %5380 = vmatmul.f32.gmra.mxu0 %v5341
    %v5381 = vpop.f32.mrf.mxu0
    %v5382 = vadd.f32 %v5335, %v5381
    %5383 = vmatmul.f32.gmra.mxu0 %v5344
    %v5384 = vpop.f32.mrf.mxu0
    %v5385 = vadd.f32 %v5335, %v5384
    %5386 = vmatmul.f32.gmra.mxu0 %v5347
    %v5387 = vpop.f32.mrf.mxu0
    %v5388 = vadd.f32 %v5335, %v5387
    %5389 = vmatmul.f32.gmra.mxu0 %v5350
    %v5390 = vpop.f32.mrf.mxu0
    %v5391 = vadd.f32 %v5335, %v5390
    %5392 = vmatmul.f32.gmra.mxu0 %v5353
    %v5393 = vpop.f32.mrf.mxu0
    %v5394 = vadd.f32 %v5335, %v5393
    %5395 = vmatmul.f32.gmra.mxu0 %v5356
    %v5396 = vpop.f32.mrf.mxu0
    %v5397 = vadd.f32 %v5335, %v5396
    %5398 = vmatmul.f32.gmra.mxu0 %v5359
    %v5399 = vpop.f32.mrf.mxu0
    %v5400 = vadd.f32 %v5335, %v5399
    %5401 = vdwg.mxu0
    %vm5402 = vcmp.lt.s32.totalorder %v4772, 8
    %v5403 = vxor.u32 %v5379, 2147483648
    %v5404 = vxor.u32 %v5382, 2147483648
    %v5405 = vxor.u32 %v5385, 2147483648
    %v5406 = vxor.u32 %v5388, 2147483648
    %v5407 = vxor.u32 %v5391, 2147483648
    %v5408 = vxor.u32 %v5394, 2147483648
    %v5409 = vxor.u32 %v5397, 2147483648
    %v5410 = vxor.u32 %v5400, 2147483648
    %v5411 = vmul.f32 %v5403, 1.442695
    %v5412 = vpow.pop %v5411
    %v5413 = vmul.f32 %v5404, 1.442695
    %v5414 = vpow.pop %v5413
    %v5415 = vmul.f32 %v5405, 1.442695
    %v5416 = vpow.pop %v5415
    %v5417 = vmul.f32 %v5406, 1.442695
    %v5418 = vpow.pop %v5417
    %v5419 = vmul.f32 %v5407, 1.442695
    %v5420 = vpow.pop %v5419
    %v5421 = vmul.f32 %v5408, 1.442695
    %v5422 = vpow.pop %v5421
    %v5423 = vmul.f32 %v5409, 1.442695
    %v5424 = vpow.pop %v5423
    %v5425 = vmul.f32 %v5410, 1.442695
    %v5426 = vpow.pop %v5425
    %v5427 = vadd.f32 %v5412, 1.0
    %v5428 = vadd.f32 %v5414, 1.0
    %v5429 = vadd.f32 %v5416, 1.0
    %v5430 = vadd.f32 %v5418, 1.0
    %v5431 = vadd.f32 %v5420, 1.0
    %v5432 = vadd.f32 %v5422, 1.0
    %v5433 = vadd.f32 %v5424, 1.0
    %v5434 = vadd.f32 %v5426, 1.0
    %v5435 = vrcp.pop %v5427
    %v5436 = vmul.f32 %v5427, %v5435
    %v5437 = vsub.f32 1.0, %v5436
    %v5438 = vmul.f32 %v5435, %v5437
    %v5439 = vadd.f32 %v5435, %v5438
    %vm5440 = vweird.f32 %v5427
    %vm5441 = vweird.f32 %v5435
    %vm5442 = vmor %vm5440, %vm5441
    %v5443 = vsel %vm5442, %v5435, %v5439
    %v5444 = vand.u32 2147483647, %v5427
    %vm5445 = vcmp.eq.f32.partialorder %v5444, 8.507059e+37
    %v5446 = vand.u32 %v5427, 2147483648
    %v5447 = vor.u32 1.1754944e-38, %v5446
    %v5448 = vsel %vm5445, %v5447, %v5443
    %v5449 = vmul.f32 1.0, %v5448
    %v5450 = vrcp.pop %v5428
    %v5451 = vmul.f32 %v5428, %v5450
    %v5452 = vsub.f32 1.0, %v5451
    %v5453 = vmul.f32 %v5450, %v5452
    %v5454 = vadd.f32 %v5450, %v5453
    %vm5455 = vweird.f32 %v5428
    %vm5456 = vweird.f32 %v5450
    %vm5457 = vmor %vm5455, %vm5456
    %v5458 = vsel %vm5457, %v5450, %v5454
    %v5459 = vand.u32 2147483647, %v5428
    %vm5460 = vcmp.eq.f32.partialorder %v5459, 8.507059e+37
    %v5461 = vand.u32 %v5428, 2147483648
    %v5462 = vor.u32 1.1754944e-38, %v5461
    %v5463 = vsel %vm5460, %v5462, %v5458
    %v5464 = vmul.f32 1.0, %v5463
    %v5465 = vrcp.pop %v5429
    %v5466 = vmul.f32 %v5429, %v5465
    %v5467 = vsub.f32 1.0, %v5466
    %v5468 = vmul.f32 %v5465, %v5467
    %v5469 = vadd.f32 %v5465, %v5468
    %vm5470 = vweird.f32 %v5429
    %vm5471 = vweird.f32 %v5465
    %vm5472 = vmor %vm5470, %vm5471
    %v5473 = vsel %vm5472, %v5465, %v5469
    %v5474 = vand.u32 2147483647, %v5429
    %vm5475 = vcmp.eq.f32.partialorder %v5474, 8.507059e+37
    %v5476 = vand.u32 %v5429, 2147483648
    %v5477 = vor.u32 1.1754944e-38, %v5476
    %v5478 = vsel %vm5475, %v5477, %v5473
    %v5479 = vmul.f32 1.0, %v5478
    %v5480 = vrcp.pop %v5430
    %v5481 = vmul.f32 %v5430, %v5480
    %v5482 = vsub.f32 1.0, %v5481
    %v5483 = vmul.f32 %v5480, %v5482
    %v5484 = vadd.f32 %v5480, %v5483
    %vm5485 = vweird.f32 %v5430
    %vm5486 = vweird.f32 %v5480
    %vm5487 = vmor %vm5485, %vm5486
    %v5488 = vsel %vm5487, %v5480, %v5484
    %v5489 = vand.u32 2147483647, %v5430
    %vm5490 = vcmp.eq.f32.partialorder %v5489, 8.507059e+37
    %v5491 = vand.u32 %v5430, 2147483648
    %v5492 = vor.u32 1.1754944e-38, %v5491
    %v5493 = vsel %vm5490, %v5492, %v5488
    %v5494 = vmul.f32 1.0, %v5493
    %v5495 = vrcp.pop %v5431
    %v5496 = vmul.f32 %v5431, %v5495
    %v5497 = vsub.f32 1.0, %v5496
    %v5498 = vmul.f32 %v5495, %v5497
    %v5499 = vadd.f32 %v5495, %v5498
    %vm5500 = vweird.f32 %v5431
    %vm5501 = vweird.f32 %v5495
    %vm5502 = vmor %vm5500, %vm5501
    %v5503 = vsel %vm5502, %v5495, %v5499
    %v5504 = vand.u32 2147483647, %v5431
    %vm5505 = vcmp.eq.f32.partialorder %v5504, 8.507059e+37
    %v5506 = vand.u32 %v5431, 2147483648
    %v5507 = vor.u32 1.1754944e-38, %v5506
    %v5508 = vsel %vm5505, %v5507, %v5503
    %v5509 = vmul.f32 1.0, %v5508
    %v5510 = vrcp.pop %v5432
    %v5511 = vmul.f32 %v5432, %v5510
    %v5512 = vsub.f32 1.0, %v5511
    %v5513 = vmul.f32 %v5510, %v5512
    %v5514 = vadd.f32 %v5510, %v5513
    %vm5515 = vweird.f32 %v5432
    %vm5516 = vweird.f32 %v5510
    %vm5517 = vmor %vm5515, %vm5516
    %v5518 = vsel %vm5517, %v5510, %v5514
    %v5519 = vand.u32 2147483647, %v5432
    %vm5520 = vcmp.eq.f32.partialorder %v5519, 8.507059e+37
    %v5521 = vand.u32 %v5432, 2147483648
    %v5522 = vor.u32 1.1754944e-38, %v5521
    %v5523 = vsel %vm5520, %v5522, %v5518
    %v5524 = vmul.f32 1.0, %v5523
    %v5525 = vrcp.pop %v5433
    %v5526 = vmul.f32 %v5433, %v5525
    %v5527 = vsub.f32 1.0, %v5526
    %v5528 = vmul.f32 %v5525, %v5527
    %v5529 = vadd.f32 %v5525, %v5528
    %vm5530 = vweird.f32 %v5433
    %vm5531 = vweird.f32 %v5525
    %vm5532 = vmor %vm5530, %vm5531
    %v5533 = vsel %vm5532, %v5525, %v5529
    %v5534 = vand.u32 2147483647, %v5433
    %vm5535 = vcmp.eq.f32.partialorder %v5534, 8.507059e+37
    %v5536 = vand.u32 %v5433, 2147483648
    %v5537 = vor.u32 1.1754944e-38, %v5536
    %v5538 = vsel %vm5535, %v5537, %v5533
    %v5539 = vmul.f32 1.0, %v5538
    %v5540 = vrcp.pop %v5434
    %v5541 = vmul.f32 %v5434, %v5540
    %v5542 = vsub.f32 1.0, %v5541
    %v5543 = vmul.f32 %v5540, %v5542
    %v5544 = vadd.f32 %v5540, %v5543
    %vm5545 = vweird.f32 %v5434
    %vm5546 = vweird.f32 %v5540
    %vm5547 = vmor %vm5545, %vm5546
    %v5548 = vsel %vm5547, %v5540, %v5544
    %v5549 = vand.u32 2147483647, %v5434
    %vm5550 = vcmp.eq.f32.partialorder %v5549, 8.507059e+37
    %v5551 = vand.u32 %v5434, 2147483648
    %v5552 = vor.u32 1.1754944e-38, %v5551
    %v5553 = vsel %vm5550, %v5552, %v5548
    %v5554 = vmul.f32 1.0, %v5553
    %vm5555 = vcmp.lt.s32.totalorder %v4772, 10
    %v5556 = vtanh.pop %v5379
    %v5557 = vtanh.pop %v5382
    %v5558 = vtanh.pop %v5385
    %v5559 = vtanh.pop %v5388
    %v5560 = vtanh.pop %v5391
    %v5561 = vtanh.pop %v5394
    %v5562 = vtanh.pop %v5397
    %v5563 = vtanh.pop %v5400
    %v5564 = vsel %vm5555, %v5556, 0.0
    %v5565 = vsel %vm5555, %v5557, 0.0
    %v5566 = vsel %vm5555, %v5558, 0.0
    %v5567 = vsel %vm5555, %v5559, 0.0
    %v5568 = vsel %vm5555, %v5560, 0.0
    %v5569 = vsel %vm5555, %v5561, 0.0
    %v5570 = vsel %vm5555, %v5562, 0.0
    %v5571 = vsel %vm5555, %v5563, 0.0
    %v5572 = vsel %vm5402, %v5449, %v5564
    %v5573 = vsel %vm5402, %v5464, %v5565
    %v5574 = vsel %vm5402, %v5479, %v5566
    %v5575 = vsel %vm5402, %v5494, %v5567
    %v5576 = vsel %vm5402, %v5509, %v5568
    %v5577 = vsel %vm5402, %v5524, %v5569
    %v5578 = vsel %vm5402, %v5539, %v5570
    %v5579 = vsel %vm5402, %v5554, %v5571
    %5580 = vst [vmem:[#allocation19] sm:$0xff] %v5572
    %5581 = vst [vmem:[#allocation19 + $0x8] sm:$0xff] %v5573
    %5582 = vst [vmem:[#allocation19 + $0x10] sm:$0xff] %v5574
    %5583 = vst [vmem:[#allocation19 + $0x18] sm:$0xff] %v5575
    %5584 = vst [vmem:[#allocation19 + $0x20] sm:$0xff] %v5576
    %5585 = vst [vmem:[#allocation19 + $0x28] sm:$0xff] %v5577
    %5586 = vst [vmem:[#allocation19 + $0x30] sm:$0xff] %v5578
    %5587 = vst [vmem:[#allocation19 + $0x38] sm:$0xff] %v5579
    // Predicated region
    $region122: #{tpu_custom_call.1} parent=1 // pred_check
      _
    $region123: #{tpu_custom_call.1} parent=1 // pred_check_branch
      %5589 = sbr.rel (0) target = $region125
    $region124: #{tpu_custom_call.1} parent=1 // pred_region
      %5591 = vsyncadd [#allocation4], 0
      %s5592 = sshll.u32 [#allocation19], 4
      %s5593 = int_to_ptr.vmem [resolvable:$true] %s5592
      %s5594 = sshll.u32 %s20, 4
      %s5595 = int_to_ptr.hbm [resolvable:$true] %s5594
      %5600 = dma.vmem_to_hbm [thread:$0]  %s5593, 1024, %s5595, [#allocation4], 128, 128, 8
    $region125: #{tpu_custom_call.1} parent=1 // pred_fallthru
      _
    // Predicated region
    $region126: #{tpu_custom_call.1} parent=1 // pred_check
      _
    $region127: #{tpu_custom_call.1} parent=1 // pred_check_branch
      %5602 = sbr.rel (0) target = $region129
    $region128: #{tpu_custom_call.1} parent=1 // pred_region
      %5604 = dma.done [#allocation4], 1024
    $region129: #{tpu_custom_call.1} parent=1 // pred_fallthru
      _
    %5605 = vsyncpa [#allocation3], 1
    %5606 = vsyncpa [#allocation6], 1
    %5607 = vsyncpa [#allocation9], 1
    %5608 = vsyncpa [#allocation12], 1
    %5609 = vsyncpa [#allocation15], 1
    %5610 = vsyncpa [#allocation18], 1
    %5611 = vsyncpa [#allocation4], 1

</llo_original>
